<compile_context>
chip_gen: v7x
topology: tpu7x:2x2x1
jax: 0.10.0
libtpu: 0.0.40
codegen_flags: <defaults>
</compile_context>

<pallas_src>
import functools

import jax
import jax.numpy as jnp
from jax.experimental import pallas as pl
from jax.experimental.pallas import tpu as pltpu

EPS = 1e-12
# Keeps rsqrt finite if a norm underflows; matches torch's v/(||v||+1e-12)
# to well below float32 precision for any non-degenerate input.
_NORM_GUARD = 1e-30


# -----------------------------------------------------------------------------
# Fused kernel: power iteration + 1/sigma + 3x3 conv (in-kernel im2col) + bias
# -----------------------------------------------------------------------------
def _fused_spectral_conv_kernel(x_ref, w_ref, b_ref, u_ref,
                                y_ref, u_out_ref, v_out_ref,
                                *, n_batch, in_ch, out_ch, height, width,
                                ksize, lane_pad, power_iterations):
    f32 = jnp.float32
    hw = height * width
    khw = ksize * ksize
    half = ksize // 2

    # ---- power iteration: VPU broadcast-multiplies + XLU reductions ----------
    w = w_ref[...].astype(f32)                 # [OC, K]  (= w_bar.view(OC, -1))
    u_col = u_ref[...].astype(f32)             # [OC, 1]
    v_row = None
    wv_col = None
    for _ in range(power_iterations):
        # v = l2normalize(W^T u)
        v_row = jnp.sum(w * u_col, axis=0, keepdims=True)                # [1, K]
        v_row = v_row * jax.lax.rsqrt(
            jnp.sum(v_row * v_row, axis=1, keepdims=True) + _NORM_GUARD)
        # u = l2normalize(W v)
        wv_col = jnp.sum(w * v_row, axis=1, keepdims=True)               # [OC, 1]
        u_col = wv_col * jax.lax.rsqrt(
            jnp.sum(wv_col * wv_col, axis=0, keepdims=True) + _NORM_GUARD)
    # sigma = u . (W v)   (W v is unchanged since the u update)
    sigma = jnp.sum(u_col * wv_col, axis=0, keepdims=True)               # [1, 1]
    inv_sigma = pl.reciprocal(sigma, approx=False)                       # 1/sigma

    u_out_ref[...] = u_col
    v_out_ref[...] = v_row

    # ---- fused conv: in-kernel im2col over the flattened spatial axis --------
    # Row over/under-runs of any tap land in the zero padding of the flattened
    # input; only column wrap-around needs explicit masking.
    lane = jax.lax.broadcasted_iota(jnp.int32, (1, 1, hw), 2)            # [1,1,HW]
    if (width & (width - 1)) == 0:
        col = lane & (width - 1)               # power-of-two fast path (no div)
    else:
        col = lane % width
    col_mask = {}
    for off in range(1, half + 1):
        col_mask[off] = (col < width - off).astype(f32)    # tap col offset +off
        col_mask[-off] = (col >= off).astype(f32)          # tap col offset -off

    bias = b_ref[...].astype(f32).reshape(1, out_ch, 1)                  # [1,OC,1]

    # Accumulate all batch images at once: each tap's shifted slice is loaded
    # and masked exactly once and shared across the batch.
    acc = jnp.zeros((n_batch, out_ch, hw), f32)
    for t in range(khw):
        a = t // ksize - half                   # row offset  in [-half, half]
        b = t % ksize - half                    # col offset  in [-half, half]
        start = lane_pad + a * width + b
        shard = x_ref[:, :, start:start + hw].astype(f32)                # [N,C,HW]
        if b != 0:
            shard = shard * col_mask[b]
        for c in range(in_ch):
            # VPU outer-product accumulate: [1,OC,1] * [N,1,HW] -> [N,OC,HW]
            k = c * khw + t                     # PyTorch (c, kh, kw) flatten order
            wk = w[:, k:k + 1].reshape(1, out_ch, 1)
            acc = acc + wk * shard[:, c:c + 1, :]

    # Single lane-dense store; 1/sigma folded in as one scalar multiply on the
    # accumulator (the normalized weight is never materialized).
    y_ref[...] = (acc * inv_sigma.reshape(1, 1, 1) + bias).astype(y_ref.dtype)


# -----------------------------------------------------------------------------
# SpectralNorm(Conv2d) forward
# -----------------------------------------------------------------------------
def spectral_norm_conv_forward(x, w_bar, bias, u, power_iterations=1):
    """x: [N,C,H,W], w_bar: [OC,C,KH,KW], bias: [OC], u: [OC].

    Returns (y [N,OC,H,W], u_new [OC], v_new [C*KH*KW]).
    """
    assert power_iterations >= 1
    n, c, h, w = x.shape
    oc, c2, kh, kw = w_bar.shape
    assert c2 == c and kh == kw and kh % 2 == 1, \
        "assumes odd square kernel, stride 1, 'same' pad"
    k = c * kh * kw
    hw = h * w
    lane_pad = (kh // 2) * w + (kw // 2)       # max |flat shift| of any tap

    # Flatten spatial into the lane axis and zero-pad it so every tap's shifted
    # slice stays in-bounds (row over/under-runs read zeros = conv zero-pad).
    x_flat = jnp.pad(x.reshape(n, c, hw), ((0, 0), (0, 0), (lane_pad, lane_pad)))
    w_flat = w_bar.reshape(oc, k)

    kernel = functools.partial(
        _fused_spectral_conv_kernel,
        n_batch=n, in_ch=c, out_ch=oc, height=h, width=w,
        ksize=kh, lane_pad=lane_pad, power_iterations=power_iterations)

    y_flat, u_new, v_new = pl.pallas_call(
        kernel,
        out_shape=(jax.ShapeDtypeStruct((n, oc, hw), x.dtype),
                   jax.ShapeDtypeStruct((oc, 1), jnp.float32),
                   jax.ShapeDtypeStruct((1, k), jnp.float32)),
        grid=(1,),
        in_specs=[pl.BlockSpec((n, c, hw + 2 * lane_pad), lambda i: (0, 0, 0)),
                  pl.BlockSpec((oc, k), lambda i: (0, 0)),
                  pl.BlockSpec((oc, 1), lambda i: (0, 0)),
                  pl.BlockSpec((oc, 1), lambda i: (0, 0))],
        out_specs=(pl.BlockSpec((n, oc, hw), lambda i: (0, 0, 0)),
                   pl.BlockSpec((oc, 1), lambda i: (0, 0)),
                   pl.BlockSpec((1, k), lambda i: (0, 0))),
        compiler_params=pltpu.CompilerParams(
            dimension_semantics=("arbitrary",)),
    )(x_flat, w_flat, bias.reshape(oc, 1), u.reshape(oc, 1))

    y = y_flat.reshape(n, oc, h, w)             # [N, OC, HW] -> NCHW (free reshape)
    return y, u_new.reshape(oc), v_new.reshape(k)


# -----------------------------------------------------------------------------
# Pure-JAX reference (sanity check only)
# -----------------------------------------------------------------------------
def _reference_forward(x, w_bar, bias, u, power_iterations=1):
    oc = w_bar.shape[0]
    w_flat = w_bar.reshape(oc, -1)
    v = None
    for _ in range(power_iterations):
        v = w_flat.T @ u
        v = v / (jnp.linalg.norm(v) + EPS)
        wv = w_flat @ v
        u = wv / (jnp.linalg.norm(wv) + EPS)
    sigma = u @ (w_flat @ v)
    w_n = w_bar / sigma
    y = jax.lax.conv_general_dilated(
        x, w_n, window_strides=(1, 1), padding=((1, 1), (1, 1)),
        dimension_numbers=('NCHW', 'OIHW', 'NCHW'),
        precision=jax.lax.Precision.HIGHEST)
    return y + bias.reshape(1, oc, 1, 1), u, v


if __name__ == "__main__":
    key = jax.random.PRNGKey(0)
    k_x, k_w, k_b, k_u = jax.random.split(key, 4)

    # Wrapped module: nn.Conv2d(in_channels=4, out_channels=8, kernel=3, pad=1)
    N, C, H, W = 2, 4, 16, 16
    OC, KH, KW = 8, 3, 3

    x = jax.random.normal(k_x, (N, C, H, W), dtype=jnp.float32)
    w_bar = jax.random.normal(k_w, (OC, C, KH, KW), dtype=jnp.float32) * 0.1
    bias = jax.random.normal(k_b, (OC,), dtype=jnp.float32) * 0.01
    # u parameter: normal(0,1) then l2-normalized (as in _make_params).
    u0 = jax.random.normal(k_u, (OC,), dtype=jnp.float32)
    u0 = u0 / (jnp.linalg.norm(u0) + EPS)
    # NOTE: the stored v parameter is overwritten before first use in the
    # PyTorch forward, so it is not an input here.

    fwd = jax.jit(spectral_norm_conv_forward,
                  static_argnames=("power_iterations",))
    y, u_new, v_new = fwd(x, w_bar, bias, u0)
    jax.block_until_ready((y, u_new, v_new))

    y_ref, u_ref, v_ref = _reference_forward(x, w_bar, bias, u0)
    assert y.shape == (N, OC, H, W)
    assert bool(jnp.allclose(y, y_ref, rtol=1e-3, atol=1e-3))
    assert bool(jnp.allclose(u_new, u_ref, rtol=1e-3, atol=1e-3))
    assert bool(jnp.allclose(v_new, v_ref, rtol=1e-3, atol=1e-3))

    print("KERNEL_OK")
</pallas_src>

<mosaic_0001>
module attributes {stable_mosaic.version = 11 : i64} {
  func.func @_fused_spectral_conv_kernel(%arg0: i32, %arg1: memref<2x4x290xf32, #tpu.memory_space<vmem>>, %arg2: memref<8x36xf32, #tpu.memory_space<vmem>>, %arg3: memref<8x1xf32, #tpu.memory_space<vmem>>, %arg4: memref<8x1xf32, #tpu.memory_space<vmem>>, %arg5: memref<2x8x256xf32, #tpu.memory_space<vmem>>, %arg6: memref<8x1xf32, #tpu.memory_space<vmem>>, %arg7: memref<1x36xf32, #tpu.memory_space<vmem>>) attributes {dimension_semantics = [#tpu.dimension_semantics<arbitrary>], iteration_bounds = array<i64: 1>, scalar_prefetch = 0 : i64, scratch_operands = 0 : i64, tpu.core_type = #tpu.core_type<tc>, window_params = [{pipeline_mode = #tpu.pipeline_mode<synchronous>, transform_indices = @transform_0, window_bounds = array<i64: 2, 4, 290>}, {pipeline_mode = #tpu.pipeline_mode<synchronous>, transform_indices = @transform_1, window_bounds = array<i64: 8, 36>}, {pipeline_mode = #tpu.pipeline_mode<synchronous>, transform_indices = @transform_2, window_bounds = array<i64: 8, 1>}, {pipeline_mode = #tpu.pipeline_mode<synchronous>, transform_indices = @transform_3, window_bounds = array<i64: 8, 1>}, {pipeline_mode = #tpu.pipeline_mode<synchronous>, transform_indices = @transform_4, window_bounds = array<i64: 2, 8, 256>}, {pipeline_mode = #tpu.pipeline_mode<synchronous>, transform_indices = @transform_5, window_bounds = array<i64: 8, 1>}, {pipeline_mode = #tpu.pipeline_mode<synchronous>, transform_indices = @transform_6, window_bounds = array<i64: 1, 36>}]} {
    %c0 = arith.constant 0 : index
    %c0_0 = arith.constant 0 : index
    %0 = vector.load %arg2[%c0, %c0_0] : memref<8x36xf32, #tpu.memory_space<vmem>>, vector<8x36xf32>
    %c0_1 = arith.constant 0 : index
    %c0_2 = arith.constant 0 : index
    %1 = vector.load %arg4[%c0_1, %c0_2] : memref<8x1xf32, #tpu.memory_space<vmem>>, vector<8x1xf32>
    %2 = vector.broadcast %1 : vector<8x1xf32> to vector<8x36xf32>
    %3 = arith.mulf %0, %2 : vector<8x36xf32>
    %cst = arith.constant dense<0.000000e+00> : vector<36xf32>
    %4 = vector.multi_reduction <add>, %3, %cst [0] : vector<8x36xf32> to vector<36xf32>
    %5 = vector.shape_cast %4 : vector<36xf32> to vector<1x36xf32>
    %6 = arith.mulf %5, %5 : vector<1x36xf32>
    %cst_3 = arith.constant dense<0.000000e+00> : vector<1xf32>
    %7 = vector.multi_reduction <add>, %6, %cst_3 [1] : vector<1x36xf32> to vector<1xf32>
    %8 = vector.shape_cast %7 : vector<1xf32> to vector<1x1xf32>
    %cst_4 = arith.constant 1.000000e-30 : f32
    %9 = vector.broadcast %cst_4 : f32 to vector<1x1xf32>
    %10 = arith.addf %8, %9 : vector<1x1xf32>
    %11 = math.rsqrt %10 : vector<1x1xf32>
    %12 = vector.broadcast %11 : vector<1x1xf32> to vector<1x36xf32>
    %13 = arith.mulf %5, %12 : vector<1x36xf32>
    %14 = vector.broadcast %13 : vector<1x36xf32> to vector<8x36xf32>
    %15 = arith.mulf %0, %14 : vector<8x36xf32>
    %cst_5 = arith.constant dense<0.000000e+00> : vector<8xf32>
    %16 = vector.multi_reduction <add>, %15, %cst_5 [1] : vector<8x36xf32> to vector<8xf32>
    %17 = vector.shape_cast %16 : vector<8xf32> to vector<8x1xf32>
    %18 = arith.mulf %17, %17 : vector<8x1xf32>
    %cst_6 = arith.constant dense<0.000000e+00> : vector<1xf32>
    %19 = vector.multi_reduction <add>, %18, %cst_6 [0] : vector<8x1xf32> to vector<1xf32>
    %20 = vector.shape_cast %19 : vector<1xf32> to vector<1x1xf32>
    %cst_7 = arith.constant 1.000000e-30 : f32
    %21 = vector.broadcast %cst_7 : f32 to vector<1x1xf32>
    %22 = arith.addf %20, %21 : vector<1x1xf32>
    %23 = math.rsqrt %22 : vector<1x1xf32>
    %24 = vector.broadcast %23 : vector<1x1xf32> to vector<8x1xf32>
    %25 = arith.mulf %17, %24 : vector<8x1xf32>
    %26 = arith.mulf %25, %17 : vector<8x1xf32>
    %cst_8 = arith.constant dense<0.000000e+00> : vector<1xf32>
    %27 = vector.multi_reduction <add>, %26, %cst_8 [0] : vector<8x1xf32> to vector<1xf32>
    %28 = vector.shape_cast %27 : vector<1xf32> to vector<1x1xf32>
    %29 = tpu.reciprocal %28 : vector<1x1xf32> -> vector<1x1xf32>
    %c0_9 = arith.constant 0 : index
    %c0_10 = arith.constant 0 : index
    %30 = vector.load %arg6[%c0_9, %c0_10] : memref<8x1xf32, #tpu.memory_space<vmem>>, vector<8x1xf32>
    tpu.vector_store %arg6[%c0_9, %c0_10], %25 {strides = array<i32>} : memref<8x1xf32, #tpu.memory_space<vmem>>, vector<8x1xf32>,
    %c0_11 = arith.constant 0 : index
    %c0_12 = arith.constant 0 : index
    %31 = vector.load %arg7[%c0_11, %c0_12] : memref<1x36xf32, #tpu.memory_space<vmem>>, vector<1x36xf32>
    tpu.vector_store %arg7[%c0_11, %c0_12], %13 {strides = array<i32>} : memref<1x36xf32, #tpu.memory_space<vmem>>, vector<1x36xf32>,
    %32 = tpu.iota {dimensions = array<i32: 2>} : vector<1x1x256xi32>
    %c15_i32 = arith.constant 15 : i32
    %33 = vector.broadcast %c15_i32 : i32 to vector<1x1x256xi32>
    %34 = arith.andi %32, %33 : vector<1x1x256xi32>
    %c15_i32_13 = arith.constant 15 : i32
    %35 = vector.broadcast %c15_i32_13 : i32 to vector<1x1x256xi32>
    %36 = arith.cmpi slt, %34, %35 : vector<1x1x256xi32>
    %37 = arith.extui %36 : vector<1x1x256xi1> to vector<1x1x256xi32>
    %38 = arith.sitofp %37 : vector<1x1x256xi32> to vector<1x1x256xf32>
    %c1_i32 = arith.constant 1 : i32
    %39 = vector.broadcast %c1_i32 : i32 to vector<1x1x256xi32>
    %40 = arith.cmpi sge, %34, %39 : vector<1x1x256xi32>
    %41 = arith.extui %40 : vector<1x1x256xi1> to vector<1x1x256xi32>
    %42 = arith.sitofp %41 : vector<1x1x256xi32> to vector<1x1x256xf32>
    %c0_14 = arith.constant 0 : index
    %c0_15 = arith.constant 0 : index
    %43 = vector.load %arg3[%c0_14, %c0_15] : memref<8x1xf32, #tpu.memory_space<vmem>>, vector<8x1xf32>
    %44 = vector.shape_cast %43 : vector<8x1xf32> to vector<1x8x1xf32>
    %cst_16 = arith.constant 0.000000e+00 : f32
    %45 = vector.broadcast %cst_16 : f32 to vector<2x8x256xf32>
    %c0_17 = arith.constant 0 : index
    %c0_18 = arith.constant 0 : index
    %c0_19 = arith.constant 0 : index
    %46 = vector.load %arg1[%c0_17, %c0_18, %c0_19] : memref<2x4x290xf32, #tpu.memory_space<vmem>>, vector<2x4x256xf32>
    %47 = vector.broadcast %42 : vector<1x1x256xf32> to vector<2x4x256xf32>
    %48 = arith.mulf %46, %47 : vector<2x4x256xf32>
    %49 = vector.extract_strided_slice %0 {offsets = [0, 0], sizes = [8, 1], strides = [1, 1]} : vector<8x36xf32> to vector<8x1xf32>
    %50 = vector.shape_cast %49 : vector<8x1xf32> to vector<1x8x1xf32>
    %51 = vector.extract_strided_slice %48 {offsets = [0, 0, 0], sizes = [2, 1, 256], strides = [1, 1, 1]} : vector<2x4x256xf32> to vector<2x1x256xf32>
    %52 = vector.broadcast %50 : vector<1x8x1xf32> to vector<2x8x256xf32>
    %53 = vector.broadcast %51 : vector<2x1x256xf32> to vector<2x8x256xf32>
    %54 = arith.mulf %52, %53 : vector<2x8x256xf32>
    %55 = arith.addf %45, %54 : vector<2x8x256xf32>
    %56 = vector.extract_strided_slice %0 {offsets = [0, 9], sizes = [8, 1], strides = [1, 1]} : vector<8x36xf32> to vector<8x1xf32>
    %57 = vector.shape_cast %56 : vector<8x1xf32> to vector<1x8x1xf32>
    %58 = vector.extract_strided_slice %48 {offsets = [0, 1, 0], sizes = [2, 1, 256], strides = [1, 1, 1]} : vector<2x4x256xf32> to vector<2x1x256xf32>
    %59 = vector.broadcast %57 : vector<1x8x1xf32> to vector<2x8x256xf32>
    %60 = vector.broadcast %58 : vector<2x1x256xf32> to vector<2x8x256xf32>
    %61 = arith.mulf %59, %60 : vector<2x8x256xf32>
    %62 = arith.addf %55, %61 : vector<2x8x256xf32>
    %63 = vector.extract_strided_slice %0 {offsets = [0, 18], sizes = [8, 1], strides = [1, 1]} : vector<8x36xf32> to vector<8x1xf32>
    %64 = vector.shape_cast %63 : vector<8x1xf32> to vector<1x8x1xf32>
    %65 = vector.extract_strided_slice %48 {offsets = [0, 2, 0], sizes = [2, 1, 256], strides = [1, 1, 1]} : vector<2x4x256xf32> to vector<2x1x256xf32>
    %66 = vector.broadcast %64 : vector<1x8x1xf32> to vector<2x8x256xf32>
    %67 = vector.broadcast %65 : vector<2x1x256xf32> to vector<2x8x256xf32>
    %68 = arith.mulf %66, %67 : vector<2x8x256xf32>
    %69 = arith.addf %62, %68 : vector<2x8x256xf32>
    %70 = vector.extract_strided_slice %0 {offsets = [0, 27], sizes = [8, 1], strides = [1, 1]} : vector<8x36xf32> to vector<8x1xf32>
    %71 = vector.shape_cast %70 : vector<8x1xf32> to vector<1x8x1xf32>
    %72 = vector.extract_strided_slice %48 {offsets = [0, 3, 0], sizes = [2, 1, 256], strides = [1, 1, 1]} : vector<2x4x256xf32> to vector<2x1x256xf32>
    %73 = vector.broadcast %71 : vector<1x8x1xf32> to vector<2x8x256xf32>
    %74 = vector.broadcast %72 : vector<2x1x256xf32> to vector<2x8x256xf32>
    %75 = arith.mulf %73, %74 : vector<2x8x256xf32>
    %76 = arith.addf %69, %75 : vector<2x8x256xf32>
    %c0_20 = arith.constant 0 : index
    %c0_21 = arith.constant 0 : index
    %c1 = arith.constant 1 : index
    %77 = vector.load %arg1[%c0_20, %c0_21, %c1] : memref<2x4x290xf32, #tpu.memory_space<vmem>>, vector<2x4x256xf32>
    %78 = vector.extract_strided_slice %0 {offsets = [0, 1], sizes = [8, 1], strides = [1, 1]} : vector<8x36xf32> to vector<8x1xf32>
    %79 = vector.shape_cast %78 : vector<8x1xf32> to vector<1x8x1xf32>
    %80 = vector.extract_strided_slice %77 {offsets = [0, 0, 0], sizes = [2, 1, 256], strides = [1, 1, 1]} : vector<2x4x256xf32> to vector<2x1x256xf32>
    %81 = vector.broadcast %79 : vector<1x8x1xf32> to vector<2x8x256xf32>
    %82 = vector.broadcast %80 : vector<2x1x256xf32> to vector<2x8x256xf32>
    %83 = arith.mulf %81, %82 : vector<2x8x256xf32>
    %84 = arith.addf %76, %83 : vector<2x8x256xf32>
    %85 = vector.extract_strided_slice %0 {offsets = [0, 10], sizes = [8, 1], strides = [1, 1]} : vector<8x36xf32> to vector<8x1xf32>
    %86 = vector.shape_cast %85 : vector<8x1xf32> to vector<1x8x1xf32>
    %87 = vector.extract_strided_slice %77 {offsets = [0, 1, 0], sizes = [2, 1, 256], strides = [1, 1, 1]} : vector<2x4x256xf32> to vector<2x1x256xf32>
    %88 = vector.broadcast %86 : vector<1x8x1xf32> to vector<2x8x256xf32>
    %89 = vector.broadcast %87 : vector<2x1x256xf32> to vector<2x8x256xf32>
    %90 = arith.mulf %88, %89 : vector<2x8x256xf32>
    %91 = arith.addf %84, %90 : vector<2x8x256xf32>
    %92 = vector.extract_strided_slice %0 {offsets = [0, 19], sizes = [8, 1], strides = [1, 1]} : vector<8x36xf32> to vector<8x1xf32>
    %93 = vector.shape_cast %92 : vector<8x1xf32> to vector<1x8x1xf32>
    %94 = vector.extract_strided_slice %77 {offsets = [0, 2, 0], sizes = [2, 1, 256], strides = [1, 1, 1]} : vector<2x4x256xf32> to vector<2x1x256xf32>
    %95 = vector.broadcast %93 : vector<1x8x1xf32> to vector<2x8x256xf32>
    %96 = vector.broadcast %94 : vector<2x1x256xf32> to vector<2x8x256xf32>
    %97 = arith.mulf %95, %96 : vector<2x8x256xf32>
    %98 = arith.addf %91, %97 : vector<2x8x256xf32>
    %99 = vector.extract_strided_slice %0 {offsets = [0, 28], sizes = [8, 1], strides = [1, 1]} : vector<8x36xf32> to vector<8x1xf32>
    %100 = vector.shape_cast %99 : vector<8x1xf32> to vector<1x8x1xf32>
    %101 = vector.extract_strided_slice %77 {offsets = [0, 3, 0], sizes = [2, 1, 256], strides = [1, 1, 1]} : vector<2x4x256xf32> to vector<2x1x256xf32>
    %102 = vector.broadcast %100 : vector<1x8x1xf32> to vector<2x8x256xf32>
    %103 = vector.broadcast %101 : vector<2x1x256xf32> to vector<2x8x256xf32>
    %104 = arith.mulf %102, %103 : vector<2x8x256xf32>
    %105 = arith.addf %98, %104 : vector<2x8x256xf32>
    %c0_22 = arith.constant 0 : index
    %c0_23 = arith.constant 0 : index
    %c2 = arith.constant 2 : index
    %106 = vector.load %arg1[%c0_22, %c0_23, %c2] : memref<2x4x290xf32, #tpu.memory_space<vmem>>, vector<2x4x256xf32>
    %107 = vector.broadcast %38 : vector<1x1x256xf32> to vector<2x4x256xf32>
    %108 = arith.mulf %106, %107 : vector<2x4x256xf32>
    %109 = vector.extract_strided_slice %0 {offsets = [0, 2], sizes = [8, 1], strides = [1, 1]} : vector<8x36xf32> to vector<8x1xf32>
    %110 = vector.shape_cast %109 : vector<8x1xf32> to vector<1x8x1xf32>
    %111 = vector.extract_strided_slice %108 {offsets = [0, 0, 0], sizes = [2, 1, 256], strides = [1, 1, 1]} : vector<2x4x256xf32> to vector<2x1x256xf32>
    %112 = vector.broadcast %110 : vector<1x8x1xf32> to vector<2x8x256xf32>
    %113 = vector.broadcast %111 : vector<2x1x256xf32> to vector<2x8x256xf32>
    %114 = arith.mulf %112, %113 : vector<2x8x256xf32>
    %115 = arith.addf %105, %114 : vector<2x8x256xf32>
    %116 = vector.extract_strided_slice %0 {offsets = [0, 11], sizes = [8, 1], strides = [1, 1]} : vector<8x36xf32> to vector<8x1xf32>
    %117 = vector.shape_cast %116 : vector<8x1xf32> to vector<1x8x1xf32>
    %118 = vector.extract_strided_slice %108 {offsets = [0, 1, 0], sizes = [2, 1, 256], strides = [1, 1, 1]} : vector<2x4x256xf32> to vector<2x1x256xf32>
    %119 = vector.broadcast %117 : vector<1x8x1xf32> to vector<2x8x256xf32>
    %120 = vector.broadcast %118 : vector<2x1x256xf32> to vector<2x8x256xf32>
    %121 = arith.mulf %119, %120 : vector<2x8x256xf32>
    %122 = arith.addf %115, %121 : vector<2x8x256xf32>
    %123 = vector.extract_strided_slice %0 {offsets = [0, 20], sizes = [8, 1], strides = [1, 1]} : vector<8x36xf32> to vector<8x1xf32>
    %124 = vector.shape_cast %123 : vector<8x1xf32> to vector<1x8x1xf32>
    %125 = vector.extract_strided_slice %108 {offsets = [0, 2, 0], sizes = [2, 1, 256], strides = [1, 1, 1]} : vector<2x4x256xf32> to vector<2x1x256xf32>
    %126 = vector.broadcast %124 : vector<1x8x1xf32> to vector<2x8x256xf32>
    %127 = vector.broadcast %125 : vector<2x1x256xf32> to vector<2x8x256xf32>
    %128 = arith.mulf %126, %127 : vector<2x8x256xf32>
    %129 = arith.addf %122, %128 : vector<2x8x256xf32>
    %130 = vector.extract_strided_slice %0 {offsets = [0, 29], sizes = [8, 1], strides = [1, 1]} : vector<8x36xf32> to vector<8x1xf32>
    %131 = vector.shape_cast %130 : vector<8x1xf32> to vector<1x8x1xf32>
    %132 = vector.extract_strided_slice %108 {offsets = [0, 3, 0], sizes = [2, 1, 256], strides = [1, 1, 1]} : vector<2x4x256xf32> to vector<2x1x256xf32>
    %133 = vector.broadcast %131 : vector<1x8x1xf32> to vector<2x8x256xf32>
    %134 = vector.broadcast %132 : vector<2x1x256xf32> to vector<2x8x256xf32>
    %135 = arith.mulf %133, %134 : vector<2x8x256xf32>
    %136 = arith.addf %129, %135 : vector<2x8x256xf32>
    %c0_24 = arith.constant 0 : index
    %c0_25 = arith.constant 0 : index
    %c16 = arith.constant 16 : index
    %137 = vector.load %arg1[%c0_24, %c0_25, %c16] : memref<2x4x290xf32, #tpu.memory_space<vmem>>, vector<2x4x256xf32>
    %138 = vector.broadcast %42 : vector<1x1x256xf32> to vector<2x4x256xf32>
    %139 = arith.mulf %137, %138 : vector<2x4x256xf32>
    %140 = vector.extract_strided_slice %0 {offsets = [0, 3], sizes = [8, 1], strides = [1, 1]} : vector<8x36xf32> to vector<8x1xf32>
    %141 = vector.shape_cast %140 : vector<8x1xf32> to vector<1x8x1xf32>
    %142 = vector.extract_strided_slice %139 {offsets = [0, 0, 0], sizes = [2, 1, 256], strides = [1, 1, 1]} : vector<2x4x256xf32> to vector<2x1x256xf32>
    %143 = vector.broadcast %141 : vector<1x8x1xf32> to vector<2x8x256xf32>
    %144 = vector.broadcast %142 : vector<2x1x256xf32> to vector<2x8x256xf32>
    %145 = arith.mulf %143, %144 : vector<2x8x256xf32>
    %146 = arith.addf %136, %145 : vector<2x8x256xf32>
    %147 = vector.extract_strided_slice %0 {offsets = [0, 12], sizes = [8, 1], strides = [1, 1]} : vector<8x36xf32> to vector<8x1xf32>
    %148 = vector.shape_cast %147 : vector<8x1xf32> to vector<1x8x1xf32>
    %149 = vector.extract_strided_slice %139 {offsets = [0, 1, 0], sizes = [2, 1, 256], strides = [1, 1, 1]} : vector<2x4x256xf32> to vector<2x1x256xf32>
    %150 = vector.broadcast %148 : vector<1x8x1xf32> to vector<2x8x256xf32>
    %151 = vector.broadcast %149 : vector<2x1x256xf32> to vector<2x8x256xf32>
    %152 = arith.mulf %150, %151 : vector<2x8x256xf32>
    %153 = arith.addf %146, %152 : vector<2x8x256xf32>
    %154 = vector.extract_strided_slice %0 {offsets = [0, 21], sizes = [8, 1], strides = [1, 1]} : vector<8x36xf32> to vector<8x1xf32>
    %155 = vector.shape_cast %154 : vector<8x1xf32> to vector<1x8x1xf32>
    %156 = vector.extract_strided_slice %139 {offsets = [0, 2, 0], sizes = [2, 1, 256], strides = [1, 1, 1]} : vector<2x4x256xf32> to vector<2x1x256xf32>
    %157 = vector.broadcast %155 : vector<1x8x1xf32> to vector<2x8x256xf32>
    %158 = vector.broadcast %156 : vector<2x1x256xf32> to vector<2x8x256xf32>
    %159 = arith.mulf %157, %158 : vector<2x8x256xf32>
    %160 = arith.addf %153, %159 : vector<2x8x256xf32>
    %161 = vector.extract_strided_slice %0 {offsets = [0, 30], sizes = [8, 1], strides = [1, 1]} : vector<8x36xf32> to vector<8x1xf32>
    %162 = vector.shape_cast %161 : vector<8x1xf32> to vector<1x8x1xf32>
    %163 = vector.extract_strided_slice %139 {offsets = [0, 3, 0], sizes = [2, 1, 256], strides = [1, 1, 1]} : vector<2x4x256xf32> to vector<2x1x256xf32>
    %164 = vector.broadcast %162 : vector<1x8x1xf32> to vector<2x8x256xf32>
    %165 = vector.broadcast %163 : vector<2x1x256xf32> to vector<2x8x256xf32>
    %166 = arith.mulf %164, %165 : vector<2x8x256xf32>
    %167 = arith.addf %160, %166 : vector<2x8x256xf32>
    %c0_26 = arith.constant 0 : index
    %c0_27 = arith.constant 0 : index
    %c17 = arith.constant 17 : index
    %168 = vector.load %arg1[%c0_26, %c0_27, %c17] : memref<2x4x290xf32, #tpu.memory_space<vmem>>, vector<2x4x256xf32>
    %169 = vector.extract_strided_slice %0 {offsets = [0, 4], sizes = [8, 1], strides = [1, 1]} : vector<8x36xf32> to vector<8x1xf32>
    %170 = vector.shape_cast %169 : vector<8x1xf32> to vector<1x8x1xf32>
    %171 = vector.extract_strided_slice %168 {offsets = [0, 0, 0], sizes = [2, 1, 256], strides = [1, 1, 1]} : vector<2x4x256xf32> to vector<2x1x256xf32>
    %172 = vector.broadcast %170 : vector<1x8x1xf32> to vector<2x8x256xf32>
    %173 = vector.broadcast %171 : vector<2x1x256xf32> to vector<2x8x256xf32>
    %174 = arith.mulf %172, %173 : vector<2x8x256xf32>
    %175 = arith.addf %167, %174 : vector<2x8x256xf32>
    %176 = vector.extract_strided_slice %0 {offsets = [0, 13], sizes = [8, 1], strides = [1, 1]} : vector<8x36xf32> to vector<8x1xf32>
    %177 = vector.shape_cast %176 : vector<8x1xf32> to vector<1x8x1xf32>
    %178 = vector.extract_strided_slice %168 {offsets = [0, 1, 0], sizes = [2, 1, 256], strides = [1, 1, 1]} : vector<2x4x256xf32> to vector<2x1x256xf32>
    %179 = vector.broadcast %177 : vector<1x8x1xf32> to vector<2x8x256xf32>
    %180 = vector.broadcast %178 : vector<2x1x256xf32> to vector<2x8x256xf32>
    %181 = arith.mulf %179, %180 : vector<2x8x256xf32>
    %182 = arith.addf %175, %181 : vector<2x8x256xf32>
    %183 = vector.extract_strided_slice %0 {offsets = [0, 22], sizes = [8, 1], strides = [1, 1]} : vector<8x36xf32> to vector<8x1xf32>
    %184 = vector.shape_cast %183 : vector<8x1xf32> to vector<1x8x1xf32>
    %185 = vector.extract_strided_slice %168 {offsets = [0, 2, 0], sizes = [2, 1, 256], strides = [1, 1, 1]} : vector<2x4x256xf32> to vector<2x1x256xf32>
    %186 = vector.broadcast %184 : vector<1x8x1xf32> to vector<2x8x256xf32>
    %187 = vector.broadcast %185 : vector<2x1x256xf32> to vector<2x8x256xf32>
    %188 = arith.mulf %186, %187 : vector<2x8x256xf32>
    %189 = arith.addf %182, %188 : vector<2x8x256xf32>
    %190 = vector.extract_strided_slice %0 {offsets = [0, 31], sizes = [8, 1], strides = [1, 1]} : vector<8x36xf32> to vector<8x1xf32>
    %191 = vector.shape_cast %190 : vector<8x1xf32> to vector<1x8x1xf32>
    %192 = vector.extract_strided_slice %168 {offsets = [0, 3, 0], sizes = [2, 1, 256], strides = [1, 1, 1]} : vector<2x4x256xf32> to vector<2x1x256xf32>
    %193 = vector.broadcast %191 : vector<1x8x1xf32> to vector<2x8x256xf32>
    %194 = vector.broadcast %192 : vector<2x1x256xf32> to vector<2x8x256xf32>
    %195 = arith.mulf %193, %194 : vector<2x8x256xf32>
    %196 = arith.addf %189, %195 : vector<2x8x256xf32>
    %c0_28 = arith.constant 0 : index
    %c0_29 = arith.constant 0 : index
    %c18 = arith.constant 18 : index
    %197 = vector.load %arg1[%c0_28, %c0_29, %c18] : memref<2x4x290xf32, #tpu.memory_space<vmem>>, vector<2x4x256xf32>
    %198 = vector.broadcast %38 : vector<1x1x256xf32> to vector<2x4x256xf32>
    %199 = arith.mulf %197, %198 : vector<2x4x256xf32>
    %200 = vector.extract_strided_slice %0 {offsets = [0, 5], sizes = [8, 1], strides = [1, 1]} : vector<8x36xf32> to vector<8x1xf32>
    %201 = vector.shape_cast %200 : vector<8x1xf32> to vector<1x8x1xf32>
    %202 = vector.extract_strided_slice %199 {offsets = [0, 0, 0], sizes = [2, 1, 256], strides = [1, 1, 1]} : vector<2x4x256xf32> to vector<2x1x256xf32>
    %203 = vector.broadcast %201 : vector<1x8x1xf32> to vector<2x8x256xf32>
    %204 = vector.broadcast %202 : vector<2x1x256xf32> to vector<2x8x256xf32>
    %205 = arith.mulf %203, %204 : vector<2x8x256xf32>
    %206 = arith.addf %196, %205 : vector<2x8x256xf32>
    %207 = vector.extract_strided_slice %0 {offsets = [0, 14], sizes = [8, 1], strides = [1, 1]} : vector<8x36xf32> to vector<8x1xf32>
    %208 = vector.shape_cast %207 : vector<8x1xf32> to vector<1x8x1xf32>
    %209 = vector.extract_strided_slice %199 {offsets = [0, 1, 0], sizes = [2, 1, 256], strides = [1, 1, 1]} : vector<2x4x256xf32> to vector<2x1x256xf32>
    %210 = vector.broadcast %208 : vector<1x8x1xf32> to vector<2x8x256xf32>
    %211 = vector.broadcast %209 : vector<2x1x256xf32> to vector<2x8x256xf32>
    %212 = arith.mulf %210, %211 : vector<2x8x256xf32>
    %213 = arith.addf %206, %212 : vector<2x8x256xf32>
    %214 = vector.extract_strided_slice %0 {offsets = [0, 23], sizes = [8, 1], strides = [1, 1]} : vector<8x36xf32> to vector<8x1xf32>
    %215 = vector.shape_cast %214 : vector<8x1xf32> to vector<1x8x1xf32>
    %216 = vector.extract_strided_slice %199 {offsets = [0, 2, 0], sizes = [2, 1, 256], strides = [1, 1, 1]} : vector<2x4x256xf32> to vector<2x1x256xf32>
    %217 = vector.broadcast %215 : vector<1x8x1xf32> to vector<2x8x256xf32>
    %218 = vector.broadcast %216 : vector<2x1x256xf32> to vector<2x8x256xf32>
    %219 = arith.mulf %217, %218 : vector<2x8x256xf32>
    %220 = arith.addf %213, %219 : vector<2x8x256xf32>
    %221 = vector.extract_strided_slice %0 {offsets = [0, 32], sizes = [8, 1], strides = [1, 1]} : vector<8x36xf32> to vector<8x1xf32>
    %222 = vector.shape_cast %221 : vector<8x1xf32> to vector<1x8x1xf32>
    %223 = vector.extract_strided_slice %199 {offsets = [0, 3, 0], sizes = [2, 1, 256], strides = [1, 1, 1]} : vector<2x4x256xf32> to vector<2x1x256xf32>
    %224 = vector.broadcast %222 : vector<1x8x1xf32> to vector<2x8x256xf32>
    %225 = vector.broadcast %223 : vector<2x1x256xf32> to vector<2x8x256xf32>
    %226 = arith.mulf %224, %225 : vector<2x8x256xf32>
    %227 = arith.addf %220, %226 : vector<2x8x256xf32>
    %c0_30 = arith.constant 0 : index
    %c0_31 = arith.constant 0 : index
    %c32 = arith.constant 32 : index
    %228 = vector.load %arg1[%c0_30, %c0_31, %c32] : memref<2x4x290xf32, #tpu.memory_space<vmem>>, vector<2x4x256xf32>
    %229 = vector.broadcast %42 : vector<1x1x256xf32> to vector<2x4x256xf32>
    %230 = arith.mulf %228, %229 : vector<2x4x256xf32>
    %231 = vector.extract_strided_slice %0 {offsets = [0, 6], sizes = [8, 1], strides = [1, 1]} : vector<8x36xf32> to vector<8x1xf32>
    %232 = vector.shape_cast %231 : vector<8x1xf32> to vector<1x8x1xf32>
    %233 = vector.extract_strided_slice %230 {offsets = [0, 0, 0], sizes = [2, 1, 256], strides = [1, 1, 1]} : vector<2x4x256xf32> to vector<2x1x256xf32>
    %234 = vector.broadcast %232 : vector<1x8x1xf32> to vector<2x8x256xf32>
    %235 = vector.broadcast %233 : vector<2x1x256xf32> to vector<2x8x256xf32>
    %236 = arith.mulf %234, %235 : vector<2x8x256xf32>
    %237 = arith.addf %227, %236 : vector<2x8x256xf32>
    %238 = vector.extract_strided_slice %0 {offsets = [0, 15], sizes = [8, 1], strides = [1, 1]} : vector<8x36xf32> to vector<8x1xf32>
    %239 = vector.shape_cast %238 : vector<8x1xf32> to vector<1x8x1xf32>
    %240 = vector.extract_strided_slice %230 {offsets = [0, 1, 0], sizes = [2, 1, 256], strides = [1, 1, 1]} : vector<2x4x256xf32> to vector<2x1x256xf32>
    %241 = vector.broadcast %239 : vector<1x8x1xf32> to vector<2x8x256xf32>
    %242 = vector.broadcast %240 : vector<2x1x256xf32> to vector<2x8x256xf32>
    %243 = arith.mulf %241, %242 : vector<2x8x256xf32>
    %244 = arith.addf %237, %243 : vector<2x8x256xf32>
    %245 = vector.extract_strided_slice %0 {offsets = [0, 24], sizes = [8, 1], strides = [1, 1]} : vector<8x36xf32> to vector<8x1xf32>
    %246 = vector.shape_cast %245 : vector<8x1xf32> to vector<1x8x1xf32>
    %247 = vector.extract_strided_slice %230 {offsets = [0, 2, 0], sizes = [2, 1, 256], strides = [1, 1, 1]} : vector<2x4x256xf32> to vector<2x1x256xf32>
    %248 = vector.broadcast %246 : vector<1x8x1xf32> to vector<2x8x256xf32>
    %249 = vector.broadcast %247 : vector<2x1x256xf32> to vector<2x8x256xf32>
    %250 = arith.mulf %248, %249 : vector<2x8x256xf32>
    %251 = arith.addf %244, %250 : vector<2x8x256xf32>
    %252 = vector.extract_strided_slice %0 {offsets = [0, 33], sizes = [8, 1], strides = [1, 1]} : vector<8x36xf32> to vector<8x1xf32>
    %253 = vector.shape_cast %252 : vector<8x1xf32> to vector<1x8x1xf32>
    %254 = vector.extract_strided_slice %230 {offsets = [0, 3, 0], sizes = [2, 1, 256], strides = [1, 1, 1]} : vector<2x4x256xf32> to vector<2x1x256xf32>
    %255 = vector.broadcast %253 : vector<1x8x1xf32> to vector<2x8x256xf32>
    %256 = vector.broadcast %254 : vector<2x1x256xf32> to vector<2x8x256xf32>
    %257 = arith.mulf %255, %256 : vector<2x8x256xf32>
    %258 = arith.addf %251, %257 : vector<2x8x256xf32>
    %c0_32 = arith.constant 0 : index
    %c0_33 = arith.constant 0 : index
    %c33 = arith.constant 33 : index
    %259 = vector.load %arg1[%c0_32, %c0_33, %c33] : memref<2x4x290xf32, #tpu.memory_space<vmem>>, vector<2x4x256xf32>
    %260 = vector.extract_strided_slice %0 {offsets = [0, 7], sizes = [8, 1], strides = [1, 1]} : vector<8x36xf32> to vector<8x1xf32>
    %261 = vector.shape_cast %260 : vector<8x1xf32> to vector<1x8x1xf32>
    %262 = vector.extract_strided_slice %259 {offsets = [0, 0, 0], sizes = [2, 1, 256], strides = [1, 1, 1]} : vector<2x4x256xf32> to vector<2x1x256xf32>
    %263 = vector.broadcast %261 : vector<1x8x1xf32> to vector<2x8x256xf32>
    %264 = vector.broadcast %262 : vector<2x1x256xf32> to vector<2x8x256xf32>
    %265 = arith.mulf %263, %264 : vector<2x8x256xf32>
    %266 = arith.addf %258, %265 : vector<2x8x256xf32>
    %267 = vector.extract_strided_slice %0 {offsets = [0, 16], sizes = [8, 1], strides = [1, 1]} : vector<8x36xf32> to vector<8x1xf32>
    %268 = vector.shape_cast %267 : vector<8x1xf32> to vector<1x8x1xf32>
    %269 = vector.extract_strided_slice %259 {offsets = [0, 1, 0], sizes = [2, 1, 256], strides = [1, 1, 1]} : vector<2x4x256xf32> to vector<2x1x256xf32>
    %270 = vector.broadcast %268 : vector<1x8x1xf32> to vector<2x8x256xf32>
    %271 = vector.broadcast %269 : vector<2x1x256xf32> to vector<2x8x256xf32>
    %272 = arith.mulf %270, %271 : vector<2x8x256xf32>
    %273 = arith.addf %266, %272 : vector<2x8x256xf32>
    %274 = vector.extract_strided_slice %0 {offsets = [0, 25], sizes = [8, 1], strides = [1, 1]} : vector<8x36xf32> to vector<8x1xf32>
    %275 = vector.shape_cast %274 : vector<8x1xf32> to vector<1x8x1xf32>
    %276 = vector.extract_strided_slice %259 {offsets = [0, 2, 0], sizes = [2, 1, 256], strides = [1, 1, 1]} : vector<2x4x256xf32> to vector<2x1x256xf32>
    %277 = vector.broadcast %275 : vector<1x8x1xf32> to vector<2x8x256xf32>
    %278 = vector.broadcast %276 : vector<2x1x256xf32> to vector<2x8x256xf32>
    %279 = arith.mulf %277, %278 : vector<2x8x256xf32>
    %280 = arith.addf %273, %279 : vector<2x8x256xf32>
    %281 = vector.extract_strided_slice %0 {offsets = [0, 34], sizes = [8, 1], strides = [1, 1]} : vector<8x36xf32> to vector<8x1xf32>
    %282 = vector.shape_cast %281 : vector<8x1xf32> to vector<1x8x1xf32>
    %283 = vector.extract_strided_slice %259 {offsets = [0, 3, 0], sizes = [2, 1, 256], strides = [1, 1, 1]} : vector<2x4x256xf32> to vector<2x1x256xf32>
    %284 = vector.broadcast %282 : vector<1x8x1xf32> to vector<2x8x256xf32>
    %285 = vector.broadcast %283 : vector<2x1x256xf32> to vector<2x8x256xf32>
    %286 = arith.mulf %284, %285 : vector<2x8x256xf32>
    %287 = arith.addf %280, %286 : vector<2x8x256xf32>
    %c0_34 = arith.constant 0 : index
    %c0_35 = arith.constant 0 : index
    %c34 = arith.constant 34 : index
    %288 = vector.load %arg1[%c0_34, %c0_35, %c34] : memref<2x4x290xf32, #tpu.memory_space<vmem>>, vector<2x4x256xf32>
    %289 = vector.broadcast %38 : vector<1x1x256xf32> to vector<2x4x256xf32>
    %290 = arith.mulf %288, %289 : vector<2x4x256xf32>
    %291 = vector.extract_strided_slice %0 {offsets = [0, 8], sizes = [8, 1], strides = [1, 1]} : vector<8x36xf32> to vector<8x1xf32>
    %292 = vector.shape_cast %291 : vector<8x1xf32> to vector<1x8x1xf32>
    %293 = vector.extract_strided_slice %290 {offsets = [0, 0, 0], sizes = [2, 1, 256], strides = [1, 1, 1]} : vector<2x4x256xf32> to vector<2x1x256xf32>
    %294 = vector.broadcast %292 : vector<1x8x1xf32> to vector<2x8x256xf32>
    %295 = vector.broadcast %293 : vector<2x1x256xf32> to vector<2x8x256xf32>
    %296 = arith.mulf %294, %295 : vector<2x8x256xf32>
    %297 = arith.addf %287, %296 : vector<2x8x256xf32>
    %298 = vector.extract_strided_slice %0 {offsets = [0, 17], sizes = [8, 1], strides = [1, 1]} : vector<8x36xf32> to vector<8x1xf32>
    %299 = vector.shape_cast %298 : vector<8x1xf32> to vector<1x8x1xf32>
    %300 = vector.extract_strided_slice %290 {offsets = [0, 1, 0], sizes = [2, 1, 256], strides = [1, 1, 1]} : vector<2x4x256xf32> to vector<2x1x256xf32>
    %301 = vector.broadcast %299 : vector<1x8x1xf32> to vector<2x8x256xf32>
    %302 = vector.broadcast %300 : vector<2x1x256xf32> to vector<2x8x256xf32>
    %303 = arith.mulf %301, %302 : vector<2x8x256xf32>
    %304 = arith.addf %297, %303 : vector<2x8x256xf32>
    %305 = vector.extract_strided_slice %0 {offsets = [0, 26], sizes = [8, 1], strides = [1, 1]} : vector<8x36xf32> to vector<8x1xf32>
    %306 = vector.shape_cast %305 : vector<8x1xf32> to vector<1x8x1xf32>
    %307 = vector.extract_strided_slice %290 {offsets = [0, 2, 0], sizes = [2, 1, 256], strides = [1, 1, 1]} : vector<2x4x256xf32> to vector<2x1x256xf32>
    %308 = vector.broadcast %306 : vector<1x8x1xf32> to vector<2x8x256xf32>
    %309 = vector.broadcast %307 : vector<2x1x256xf32> to vector<2x8x256xf32>
    %310 = arith.mulf %308, %309 : vector<2x8x256xf32>
    %311 = arith.addf %304, %310 : vector<2x8x256xf32>
    %312 = vector.extract_strided_slice %0 {offsets = [0, 35], sizes = [8, 1], strides = [1, 1]} : vector<8x36xf32> to vector<8x1xf32>
    %313 = vector.shape_cast %312 : vector<8x1xf32> to vector<1x8x1xf32>
    %314 = vector.extract_strided_slice %290 {offsets = [0, 3, 0], sizes = [2, 1, 256], strides = [1, 1, 1]} : vector<2x4x256xf32> to vector<2x1x256xf32>
    %315 = vector.broadcast %313 : vector<1x8x1xf32> to vector<2x8x256xf32>
    %316 = vector.broadcast %314 : vector<2x1x256xf32> to vector<2x8x256xf32>
    %317 = arith.mulf %315, %316 : vector<2x8x256xf32>
    %318 = arith.addf %311, %317 : vector<2x8x256xf32>
    %319 = vector.shape_cast %29 : vector<1x1xf32> to vector<1x1x1xf32>
    %320 = vector.broadcast %319 : vector<1x1x1xf32> to vector<2x8x256xf32>
    %321 = arith.mulf %318, %320 : vector<2x8x256xf32>
    %322 = vector.broadcast %44 : vector<1x8x1xf32> to vector<2x8x256xf32>
    %323 = arith.addf %321, %322 : vector<2x8x256xf32>
    %c0_36 = arith.constant 0 : index
    %c0_37 = arith.constant 0 : index
    %c0_38 = arith.constant 0 : index
    %324 = vector.load %arg5[%c0_36, %c0_37, %c0_38] : memref<2x8x256xf32, #tpu.memory_space<vmem>>, vector<2x8x256xf32>
    tpu.vector_store %arg5[%c0_36, %c0_37, %c0_38], %323 {strides = array<i32>} : memref<2x8x256xf32, #tpu.memory_space<vmem>>, vector<2x8x256xf32>,
    return
  }
  func.func @transform_0(%arg0: i32) -> (i32, i32, i32) {
    %c0_i32 = arith.constant 0 : i32
    %c0_i32_0 = arith.constant 0 : i32
    %c0_i32_1 = arith.constant 0 : i32
    %c0_i32_2 = arith.constant 0 : i32
    return %c0_i32, %c0_i32_0, %c0_i32_1 : i32, i32, i32
  }
  func.func @transform_1(%arg0: i32) -> (i32, i32) {
    %c0_i32 = arith.constant 0 : i32
    %c0_i32_0 = arith.constant 0 : i32
    %c0_i32_1 = arith.constant 0 : i32
    return %c0_i32, %c0_i32_0 : i32, i32
  }
  func.func @transform_2(%arg0: i32) -> (i32, i32) {
    %c0_i32 = arith.constant 0 : i32
    %c0_i32_0 = arith.constant 0 : i32
    %c0_i32_1 = arith.constant 0 : i32
    return %c0_i32, %c0_i32_0 : i32, i32
  }
  func.func @transform_3(%arg0: i32) -> (i32, i32) {
    %c0_i32 = arith.constant 0 : i32
    %c0_i32_0 = arith.constant 0 : i32
    %c0_i32_1 = arith.constant 0 : i32
    return %c0_i32, %c0_i32_0 : i32, i32
  }
  func.func @transform_4(%arg0: i32) -> (i32, i32, i32) {
    %c0_i32 = arith.constant 0 : i32
    %c0_i32_0 = arith.constant 0 : i32
    %c0_i32_1 = arith.constant 0 : i32
    %c0_i32_2 = arith.constant 0 : i32
    return %c0_i32, %c0_i32_0, %c0_i32_1 : i32, i32, i32
  }
  func.func @transform_5(%arg0: i32) -> (i32, i32) {
    %c0_i32 = arith.constant 0 : i32
    %c0_i32_0 = arith.constant 0 : i32
    %c0_i32_1 = arith.constant 0 : i32
    return %c0_i32, %c0_i32_0 : i32, i32
  }
  func.func @transform_6(%arg0: i32) -> (i32, i32) {
    %c0_i32 = arith.constant 0 : i32
    %c0_i32_0 = arith.constant 0 : i32
    %c0_i32_1 = arith.constant 0 : i32
    return %c0_i32, %c0_i32_0 : i32, i32
  }
}

</mosaic_0001>

<llo_original>
// kernel: spectral_norm_conv_forward.1
$region0: #{spectral_norm_conv_forward.1}
  #allocation0 [shape = 'u32[]', space=smem, size = 0x4, offset = 0x4, fixed_abs, tag = 'smem constant byte address 0x4 - core index']
  #allocation1 [shape = 'u32[144,128]{1,0:T(1,128)}', space=vmem, size = 0x12000, scoped, tag = 'internal scratch']
  %s0 = inlined_call_operand.vmem [shape: f32[2,4,290], index: 0, kind: input, shape index: {}]
  %s1 = inlined_call_operand.vmem [shape: f32[8,36], index: 1, kind: input, shape index: {}]
  %s2 = inlined_call_operand.vmem [shape: f32[8,1], index: 2, kind: input, shape index: {}]
  %s3 = inlined_call_operand.vmem [shape: f32[8,1], index: 3, kind: input, shape index: {}]
  %s4 = inlined_call_operand.vmem [shape: f32[2,8,256], index: 4, kind: output, shape index: {0}]
  %s5 = inlined_call_operand.vmem [shape: f32[8,1], index: 5, kind: output, shape index: {1}]
  %s6 = inlined_call_operand.hbm [shape: f32[1,36], index: 6, kind: output, shape index: {2}]
  %7 = xla_tuple %s4, %s5, %s6
  %s8 = sld [smem:[#allocation0]]
  $region42: #{spectral_norm_conv_forward.1} parent=0
    _
  %s10 = ssub.s32 1, %s8
  %s11 = scalar_select 0, %s10, %s8
  $region1: #{spectral_norm_conv_forward.1} parent=0
    #allocation2 [shape = 'u8[512]{0}', space=vmem, size = 0x400, scoped, tag = 'output window, operand 2, single buffered']
    #allocation3 [shape = 's32[1]{0}', space=sflag, size = 0x4, scoped, tag = 'scoped memory for spectral_norm_conv_forward.1']
    %12 = vsyncpa [#allocation3], 0
    // Predicated region
    $region2: #{spectral_norm_conv_forward.1} parent=1 // pred_check
      _
    $region3: #{spectral_norm_conv_forward.1} parent=1 // pred_check_branch
      %14 = sbr.rel (0) target = $region5
    $region4: #{spectral_norm_conv_forward.1} parent=1 // pred_region
      _
    $region5: #{spectral_norm_conv_forward.1} parent=1 // pred_fallthru
      _
    // Predicated region
    $region6: #{spectral_norm_conv_forward.1} parent=1 // pred_check
      _
    $region7: #{spectral_norm_conv_forward.1} parent=1 // pred_check_branch
      %16 = sbr.rel (0) target = $region9
    $region8: #{spectral_norm_conv_forward.1} parent=1 // pred_region
      _
    $region9: #{spectral_norm_conv_forward.1} parent=1 // pred_fallthru
      _
    // Predicated region
    $region10: #{spectral_norm_conv_forward.1} parent=1 // pred_check
      _
    $region11: #{spectral_norm_conv_forward.1} parent=1 // pred_check_branch
      %18 = sbr.rel (0) target = $region13
    $region12: #{spectral_norm_conv_forward.1} parent=1 // pred_region
      _
    $region13: #{spectral_norm_conv_forward.1} parent=1 // pred_fallthru
      _
    // Predicated region
    $region14: #{spectral_norm_conv_forward.1} parent=1 // pred_check
      _
    $region15: #{spectral_norm_conv_forward.1} parent=1 // pred_check_branch
      %20 = sbr.rel (0) target = $region17
    $region16: #{spectral_norm_conv_forward.1} parent=1 // pred_region
      _
    $region17: #{spectral_norm_conv_forward.1} parent=1 // pred_fallthru
      _
    %v21 = vld [vmem:[%s1] sm:$0xff]
    %v22 = vld [vmem:[%s3] sm:$0xff]
    %24 = vset.pattern.permute.xlu0 0
    %25 = vperm.xlu0 %24, %v22
    %v26 = vpop.permute.xlu0 %25
    %v28 = vmul.f32 %v21, %v26
    %vm29 = vcmask 293888
    %v30 = vsel %vm29, %v28, 0.0
    %v31 = vrot.slane %v30, 4
    %v32 = vadd.f32 %v30, %v31
    %v33 = vrot.slane %v32, 2
    %v34 = vadd.f32 %v32, %v33
    %v35 = vrot.slane %v34, 1
    %v36 = vadd.f32 %v34, %v35
    %v37 = vmul.f32 %v36, %v36
    %v38 = vsel %vm29, %v37, 0.0
    %39 = vadd.xlane.f32.xlu0 %v38
    %v40 = vpop.xlane.xlu0 %39
    %v41 = vadd.f32 %v40, 1e-30
    %v42 = vrsqrt.pop %v41
    %v43 = vmul.f32 %v36, %v42
    %v44 = vmul.f32 %v21, %v43
    %v45 = vsel %vm29, %v44, 0.0
    %46 = vadd.xlane.f32.xlu0 %v45
    %v47 = vpop.xlane.xlu0 %46
    %v48 = vmul.f32 %v47, %v47
    %v49 = vrot.slane %v48, 4
    %v50 = vadd.f32 %v48, %v49
    %v51 = vrot.slane %v50, 2
    %v52 = vadd.f32 %v50, %v51
    %v53 = vrot.slane %v52, 1
    %v54 = vadd.f32 %v52, %v53
    %v55 = vadd.f32 %v54, 1e-30
    %v56 = vrsqrt.pop %v55
    %v57 = vmul.f32 %v47, %v56
    %v58 = vmul.f32 %v57, %v47
    %v59 = vrot.slane %v58, 4
    %v60 = vadd.f32 %v58, %v59
    %v61 = vrot.slane %v60, 2
    %v62 = vadd.f32 %v60, %v61
    %v63 = vrot.slane %v62, 1
    %v64 = vadd.f32 %v62, %v63
    %v65 = vrcp.pop %v64
    %vm66 = vcmask 7168
    %67 = vst.msk [vmem:[%s5] sm:$0xff] %vm66, %v57
    %vm68 = vcmask 286720
    %69 = vst.msk [vmem:[#allocation2] sm:$0x1] %vm68, %v43
    %v70 = vlaneseq
    %v71 = vand.u32 %v70, 127
    %v72 = vadd.s32 %v71, 128
    %v73 = vand.u32 %v71, 15
    %v74 = vand.u32 %v72, 15
    %vm75 = vcmp.lt.s32.totalorder %v73, 15
    %vm76 = vcmp.lt.s32.totalorder %v74, 15
    %v77 = vsel %vm75, 1, 0
    %v78 = vsel %vm76, 1, 0
    %v79 = vcvt.s32.f32 %v77
    %v80 = vcvt.s32.f32 %v78
    %vm81 = vcmp.ge.s32.totalorder %v73, 1
    %vm82 = vcmp.ge.s32.totalorder %v74, 1
    %v83 = vsel %vm81, 1, 0
    %v84 = vsel %vm82, 1, 0
    %v85 = vcvt.s32.f32 %v83
    %v86 = vcvt.s32.f32 %v84
    %v87 = vld [vmem:[%s2] sm:$0xff]
    %v88 = vld [vmem:[%s0] sm:$0xff]
    %v89 = vld [vmem:[%s0 + $0xc] sm:$0xff]
    %v92 = vcombine.low %v85, %v86
    %v94 = vmul.f32 %v88, %v92
    %v95 = vmul.f32 %v89, %v92
    %97 = vset.pattern.permute.xlu0 0
    %98 = vperm.xlu0 %97, %v21
    %v99 = vpop.permute.xlu0 %98
    %v103 = vlaneseq
    %v104 = vshrl.u32 %v103, 7
    %v105 = vsub.s32 0, %v104
    %v106 = vrot.slane %v94, %v105
    %v107 = vlaneseq
    %v108 = vshrl.u32 %v107, 7
    %v109 = vsub.s32 4, %v108
    %v110 = vrot.slane %v94, %v109
    %v111 = vlaneseq
    %v112 = vshrl.u32 %v111, 7
    %v113 = vsub.s32 0, %v112
    %v114 = vrot.slane %v95, %v113
    %v115 = vlaneseq
    %v116 = vshrl.u32 %v115, 7
    %v117 = vsub.s32 4, %v116
    %v118 = vrot.slane %v95, %v117
    %v123 = vlaneseq
    %v124 = vshrl.u32 %v123, 7
    %v125 = vsub.s32 0, %v124
    %v126 = vrot.slane %v106, %v125
    %v127 = vlaneseq
    %v128 = vshrl.u32 %v127, 7
    %v129 = vsub.s32 0, %v128
    %v130 = vrot.slane %v110, %v129
    %v131 = vlaneseq
    %v132 = vshrl.u32 %v131, 7
    %v133 = vsub.s32 0, %v132
    %v134 = vrot.slane %v114, %v133
    %v135 = vlaneseq
    %v136 = vshrl.u32 %v135, 7
    %v137 = vsub.s32 0, %v136
    %v138 = vrot.slane %v118, %v137
    %v139 = vmul.f32 %v99, %v126
    %v140 = vmul.f32 %v99, %v130
    %v141 = vmul.f32 %v99, %v134
    %v142 = vmul.f32 %v99, %v138
    %v143 = vadd.f32 %v139, 0.0
    %v144 = vadd.f32 %v140, 0.0
    %v145 = vadd.f32 %v141, 0.0
    %v146 = vadd.f32 %v142, 0.0
    %147 = vset.pattern.permute.xlu0 9
    %148 = vperm.xlu0 %147, %v21
    %v149 = vpop.permute.xlu0 %148
    %v151 = vlaneseq
    %v152 = vshrl.u32 %v151, 7
    %v153 = vsub.s32 1, %v152
    %v154 = vrot.slane %v94, %v153
    %v155 = vlaneseq
    %v156 = vshrl.u32 %v155, 7
    %v157 = vsub.s32 5, %v156
    %v158 = vrot.slane %v94, %v157
    %v159 = vlaneseq
    %v160 = vshrl.u32 %v159, 7
    %v161 = vsub.s32 1, %v160
    %v162 = vrot.slane %v95, %v161
    %v163 = vlaneseq
    %v164 = vshrl.u32 %v163, 7
    %v165 = vsub.s32 5, %v164
    %v166 = vrot.slane %v95, %v165
    %v171 = vlaneseq
    %v172 = vshrl.u32 %v171, 7
    %v173 = vsub.s32 1, %v172
    %v174 = vrot.slane %v154, %v173
    %v175 = vlaneseq
    %v176 = vshrl.u32 %v175, 7
    %v177 = vsub.s32 1, %v176
    %v178 = vrot.slane %v158, %v177
    %v179 = vlaneseq
    %v180 = vshrl.u32 %v179, 7
    %v181 = vsub.s32 1, %v180
    %v182 = vrot.slane %v162, %v181
    %v183 = vlaneseq
    %v184 = vshrl.u32 %v183, 7
    %v185 = vsub.s32 1, %v184
    %v186 = vrot.slane %v166, %v185
    %v187 = vmul.f32 %v149, %v174
    %v188 = vmul.f32 %v149, %v178
    %v189 = vmul.f32 %v149, %v182
    %v190 = vmul.f32 %v149, %v186
    %v191 = vadd.f32 %v143, %v187
    %v192 = vadd.f32 %v144, %v188
    %v193 = vadd.f32 %v145, %v189
    %v194 = vadd.f32 %v146, %v190
    %195 = vset.pattern.permute.xlu0 18
    %196 = vperm.xlu0 %195, %v21
    %v197 = vpop.permute.xlu0 %196
    %v199 = vlaneseq
    %v200 = vshrl.u32 %v199, 7
    %v201 = vsub.s32 2, %v200
    %v202 = vrot.slane %v94, %v201
    %v203 = vlaneseq
    %v204 = vshrl.u32 %v203, 7
    %v205 = vsub.s32 6, %v204
    %v206 = vrot.slane %v94, %v205
    %v207 = vlaneseq
    %v208 = vshrl.u32 %v207, 7
    %v209 = vsub.s32 2, %v208
    %v210 = vrot.slane %v95, %v209
    %v211 = vlaneseq
    %v212 = vshrl.u32 %v211, 7
    %v213 = vsub.s32 6, %v212
    %v214 = vrot.slane %v95, %v213
    %v219 = vlaneseq
    %v220 = vshrl.u32 %v219, 7
    %v221 = vsub.s32 2, %v220
    %v222 = vrot.slane %v202, %v221
    %v223 = vlaneseq
    %v224 = vshrl.u32 %v223, 7
    %v225 = vsub.s32 2, %v224
    %v226 = vrot.slane %v206, %v225
    %v227 = vlaneseq
    %v228 = vshrl.u32 %v227, 7
    %v229 = vsub.s32 2, %v228
    %v230 = vrot.slane %v210, %v229
    %v231 = vlaneseq
    %v232 = vshrl.u32 %v231, 7
    %v233 = vsub.s32 2, %v232
    %v234 = vrot.slane %v214, %v233
    %v235 = vmul.f32 %v197, %v222
    %v236 = vmul.f32 %v197, %v226
    %v237 = vmul.f32 %v197, %v230
    %v238 = vmul.f32 %v197, %v234
    %v239 = vadd.f32 %v191, %v235
    %v240 = vadd.f32 %v192, %v236
    %v241 = vadd.f32 %v193, %v237
    %v242 = vadd.f32 %v194, %v238
    %243 = vset.pattern.permute.xlu0 27
    %244 = vperm.xlu0 %243, %v21
    %v245 = vpop.permute.xlu0 %244
    %v247 = vlaneseq
    %v248 = vshrl.u32 %v247, 7
    %v249 = vsub.s32 3, %v248
    %v250 = vrot.slane %v94, %v249
    %v251 = vlaneseq
    %v252 = vshrl.u32 %v251, 7
    %v253 = vsub.s32 7, %v252
    %v254 = vrot.slane %v94, %v253
    %v255 = vlaneseq
    %v256 = vshrl.u32 %v255, 7
    %v257 = vsub.s32 3, %v256
    %v258 = vrot.slane %v95, %v257
    %v259 = vlaneseq
    %v260 = vshrl.u32 %v259, 7
    %v261 = vsub.s32 7, %v260
    %v262 = vrot.slane %v95, %v261
    %v267 = vlaneseq
    %v268 = vshrl.u32 %v267, 7
    %v269 = vsub.s32 3, %v268
    %v270 = vrot.slane %v250, %v269
    %v271 = vlaneseq
    %v272 = vshrl.u32 %v271, 7
    %v273 = vsub.s32 3, %v272
    %v274 = vrot.slane %v254, %v273
    %v275 = vlaneseq
    %v276 = vshrl.u32 %v275, 7
    %v277 = vsub.s32 3, %v276
    %v278 = vrot.slane %v258, %v277
    %v279 = vlaneseq
    %v280 = vshrl.u32 %v279, 7
    %v281 = vsub.s32 3, %v280
    %v282 = vrot.slane %v262, %v281
    %v283 = vmul.f32 %v245, %v270
    %v284 = vmul.f32 %v245, %v274
    %v285 = vmul.f32 %v245, %v278
    %v286 = vmul.f32 %v245, %v282
    %v287 = vadd.f32 %v239, %v283
    %v288 = vadd.f32 %v240, %v284
    %v289 = vadd.f32 %v241, %v285
    %v290 = vadd.f32 %v242, %v286
    %v291 = vld [vmem:[%s0] sm:$0xff]
    %v292 = vld [vmem:[%s0 + $0x8] sm:$0xf]
    %v293 = vld [vmem:[%s0 + $0xc] sm:$0xff]
    %v294 = vld [vmem:[%s0 + $0x14] sm:$0xf]
    %295 = vset.pattern.permute.xlu0 1
    %296 = vperm.xlu0 %295, %v21
    %v297 = vpop.permute.xlu0 %296
    %v303 = vlaneseq
    %v304 = vshrl.u32 %v303, 7
    %v305 = vsub.s32 0, %v304
    %v306 = vrot.slane %v291, %v305
    %v307 = vlaneseq
    %v308 = vshrl.u32 %v307, 7
    %v309 = vsub.s32 4, %v308
    %v310 = vrot.slane %v291, %v309
    %v311 = vlaneseq
    %v312 = vshrl.u32 %v311, 7
    %v313 = vsub.s32 0, %v312
    %v314 = vrot.slane %v292, %v313
    %v315 = vlaneseq
    %v316 = vshrl.u32 %v315, 7
    %v317 = vsub.s32 0, %v316
    %v318 = vrot.slane %v293, %v317
    %v319 = vlaneseq
    %v320 = vshrl.u32 %v319, 7
    %v321 = vsub.s32 4, %v320
    %v322 = vrot.slane %v293, %v321
    %v323 = vlaneseq
    %v324 = vshrl.u32 %v323, 7
    %v325 = vsub.s32 0, %v324
    %v326 = vrot.slane %v294, %v325
    %v333 = vlaneseq
    %v334 = vshrl.u32 %v333, 7
    %v335 = vsub.s32 0, %v334
    %v336 = vrot.slane %v306, %v335
    %v337 = vlaneseq
    %v338 = vshrl.u32 %v337, 7
    %v339 = vsub.s32 0, %v338
    %v340 = vrot.slane %v310, %v339
    %v341 = vlaneseq
    %v342 = vshrl.u32 %v341, 7
    %v343 = vsub.s32 0, %v342
    %v344 = vrot.slane %v314, %v343
    %v345 = vlaneseq
    %v346 = vshrl.u32 %v345, 7
    %v347 = vsub.s32 0, %v346
    %v348 = vrot.slane %v318, %v347
    %v349 = vlaneseq
    %v350 = vshrl.u32 %v349, 7
    %v351 = vsub.s32 0, %v350
    %v352 = vrot.slane %v322, %v351
    %v353 = vlaneseq
    %v354 = vshrl.u32 %v353, 7
    %v355 = vsub.s32 0, %v354
    %v356 = vrot.slane %v326, %v355
    %v357 = vmul.f32 %v297, %v336
    %v358 = vmul.f32 %v297, %v340
    %v359 = vmul.f32 %v297, %v344
    %v360 = vmul.f32 %v297, %v348
    %v361 = vmul.f32 %v297, %v352
    %v362 = vmul.f32 %v297, %v356
    %369 = vrot.lane.b32.xlu0 %v357, 127
    %v370 = vpop.permute.xlu0 %369
    %371 = vrot.lane.b32.xlu0 %v358, 127
    %v372 = vpop.permute.xlu0 %371
    %373 = vrot.lane.b32.xlu0 %v359, 127
    %v374 = vpop.permute.xlu0 %373
    %375 = vrot.lane.b32.xlu0 %v360, 127
    %v376 = vpop.permute.xlu0 %375
    %377 = vrot.lane.b32.xlu0 %v361, 127
    %v378 = vpop.permute.xlu0 %377
    %379 = vrot.lane.b32.xlu0 %v362, 127
    %v380 = vpop.permute.xlu0 %379
    %vm381 = vcmask 1039360
    %v382 = vsel %vm381, %v370, %v372
    %v383 = vsel %vm381, %v372, %v374
    %v384 = vsel %vm381, %v376, %v378
    %v385 = vsel %vm381, %v378, %v380
    %v390 = vadd.f32 %v287, %v382
    %v391 = vadd.f32 %v288, %v383
    %v392 = vadd.f32 %v289, %v384
    %v393 = vadd.f32 %v290, %v385
    %394 = vset.pattern.permute.xlu0 10
    %395 = vperm.xlu0 %394, %v21
    %v396 = vpop.permute.xlu0 %395
    %v398 = vlaneseq
    %v399 = vshrl.u32 %v398, 7
    %v400 = vsub.s32 1, %v399
    %v401 = vrot.slane %v291, %v400
    %v402 = vlaneseq
    %v403 = vshrl.u32 %v402, 7
    %v404 = vsub.s32 5, %v403
    %v405 = vrot.slane %v291, %v404
    %v406 = vlaneseq
    %v407 = vshrl.u32 %v406, 7
    %v408 = vsub.s32 1, %v407
    %v409 = vrot.slane %v292, %v408
    %v410 = vlaneseq
    %v411 = vshrl.u32 %v410, 7
    %v412 = vsub.s32 1, %v411
    %v413 = vrot.slane %v293, %v412
    %v414 = vlaneseq
    %v415 = vshrl.u32 %v414, 7
    %v416 = vsub.s32 5, %v415
    %v417 = vrot.slane %v293, %v416
    %v418 = vlaneseq
    %v419 = vshrl.u32 %v418, 7
    %v420 = vsub.s32 1, %v419
    %v421 = vrot.slane %v294, %v420
    %v428 = vlaneseq
    %v429 = vshrl.u32 %v428, 7
    %v430 = vsub.s32 1, %v429
    %v431 = vrot.slane %v401, %v430
    %v432 = vlaneseq
    %v433 = vshrl.u32 %v432, 7
    %v434 = vsub.s32 1, %v433
    %v435 = vrot.slane %v405, %v434
    %v436 = vlaneseq
    %v437 = vshrl.u32 %v436, 7
    %v438 = vsub.s32 1, %v437
    %v439 = vrot.slane %v409, %v438
    %v440 = vlaneseq
    %v441 = vshrl.u32 %v440, 7
    %v442 = vsub.s32 1, %v441
    %v443 = vrot.slane %v413, %v442
    %v444 = vlaneseq
    %v445 = vshrl.u32 %v444, 7
    %v446 = vsub.s32 1, %v445
    %v447 = vrot.slane %v417, %v446
    %v448 = vlaneseq
    %v449 = vshrl.u32 %v448, 7
    %v450 = vsub.s32 1, %v449
    %v451 = vrot.slane %v421, %v450
    %v452 = vmul.f32 %v396, %v431
    %v453 = vmul.f32 %v396, %v435
    %v454 = vmul.f32 %v396, %v439
    %v455 = vmul.f32 %v396, %v443
    %v456 = vmul.f32 %v396, %v447
    %v457 = vmul.f32 %v396, %v451
    %464 = vrot.lane.b32.xlu0 %v452, 127
    %v465 = vpop.permute.xlu0 %464
    %466 = vrot.lane.b32.xlu0 %v453, 127
    %v467 = vpop.permute.xlu0 %466
    %468 = vrot.lane.b32.xlu0 %v454, 127
    %v469 = vpop.permute.xlu0 %468
    %470 = vrot.lane.b32.xlu0 %v455, 127
    %v471 = vpop.permute.xlu0 %470
    %472 = vrot.lane.b32.xlu0 %v456, 127
    %v473 = vpop.permute.xlu0 %472
    %474 = vrot.lane.b32.xlu0 %v457, 127
    %v475 = vpop.permute.xlu0 %474
    %v476 = vsel %vm381, %v465, %v467
    %v477 = vsel %vm381, %v467, %v469
    %v478 = vsel %vm381, %v471, %v473
    %v479 = vsel %vm381, %v473, %v475
    %v484 = vadd.f32 %v390, %v476
    %v485 = vadd.f32 %v391, %v477
    %v486 = vadd.f32 %v392, %v478
    %v487 = vadd.f32 %v393, %v479
    %488 = vset.pattern.permute.xlu0 19
    %489 = vperm.xlu0 %488, %v21
    %v490 = vpop.permute.xlu0 %489
    %v492 = vlaneseq
    %v493 = vshrl.u32 %v492, 7
    %v494 = vsub.s32 2, %v493
    %v495 = vrot.slane %v291, %v494
    %v496 = vlaneseq
    %v497 = vshrl.u32 %v496, 7
    %v498 = vsub.s32 6, %v497
    %v499 = vrot.slane %v291, %v498
    %v500 = vlaneseq
    %v501 = vshrl.u32 %v500, 7
    %v502 = vsub.s32 2, %v501
    %v503 = vrot.slane %v292, %v502
    %v504 = vlaneseq
    %v505 = vshrl.u32 %v504, 7
    %v506 = vsub.s32 2, %v505
    %v507 = vrot.slane %v293, %v506
    %v508 = vlaneseq
    %v509 = vshrl.u32 %v508, 7
    %v510 = vsub.s32 6, %v509
    %v511 = vrot.slane %v293, %v510
    %v512 = vlaneseq
    %v513 = vshrl.u32 %v512, 7
    %v514 = vsub.s32 2, %v513
    %v515 = vrot.slane %v294, %v514
    %v522 = vlaneseq
    %v523 = vshrl.u32 %v522, 7
    %v524 = vsub.s32 2, %v523
    %v525 = vrot.slane %v495, %v524
    %v526 = vlaneseq
    %v527 = vshrl.u32 %v526, 7
    %v528 = vsub.s32 2, %v527
    %v529 = vrot.slane %v499, %v528
    %v530 = vlaneseq
    %v531 = vshrl.u32 %v530, 7
    %v532 = vsub.s32 2, %v531
    %v533 = vrot.slane %v503, %v532
    %v534 = vlaneseq
    %v535 = vshrl.u32 %v534, 7
    %v536 = vsub.s32 2, %v535
    %v537 = vrot.slane %v507, %v536
    %v538 = vlaneseq
    %v539 = vshrl.u32 %v538, 7
    %v540 = vsub.s32 2, %v539
    %v541 = vrot.slane %v511, %v540
    %v542 = vlaneseq
    %v543 = vshrl.u32 %v542, 7
    %v544 = vsub.s32 2, %v543
    %v545 = vrot.slane %v515, %v544
    %v546 = vmul.f32 %v490, %v525
    %v547 = vmul.f32 %v490, %v529
    %v548 = vmul.f32 %v490, %v533
    %v549 = vmul.f32 %v490, %v537
    %v550 = vmul.f32 %v490, %v541
    %v551 = vmul.f32 %v490, %v545
    %558 = vrot.lane.b32.xlu0 %v546, 127
    %v559 = vpop.permute.xlu0 %558
    %560 = vrot.lane.b32.xlu0 %v547, 127
    %v561 = vpop.permute.xlu0 %560
    %562 = vrot.lane.b32.xlu0 %v548, 127
    %v563 = vpop.permute.xlu0 %562
    %564 = vrot.lane.b32.xlu0 %v549, 127
    %v565 = vpop.permute.xlu0 %564
    %566 = vrot.lane.b32.xlu0 %v550, 127
    %v567 = vpop.permute.xlu0 %566
    %568 = vrot.lane.b32.xlu0 %v551, 127
    %v569 = vpop.permute.xlu0 %568
    %v570 = vsel %vm381, %v559, %v561
    %v571 = vsel %vm381, %v561, %v563
    %v572 = vsel %vm381, %v565, %v567
    %v573 = vsel %vm381, %v567, %v569
    %v578 = vadd.f32 %v484, %v570
    %v579 = vadd.f32 %v485, %v571
    %v580 = vadd.f32 %v486, %v572
    %v581 = vadd.f32 %v487, %v573
    %582 = vset.pattern.permute.xlu0 28
    %583 = vperm.xlu0 %582, %v21
    %v584 = vpop.permute.xlu0 %583
    %v586 = vlaneseq
    %v587 = vshrl.u32 %v586, 7
    %v588 = vsub.s32 3, %v587
    %v589 = vrot.slane %v291, %v588
    %v590 = vlaneseq
    %v591 = vshrl.u32 %v590, 7
    %v592 = vsub.s32 7, %v591
    %v593 = vrot.slane %v291, %v592
    %v594 = vlaneseq
    %v595 = vshrl.u32 %v594, 7
    %v596 = vsub.s32 3, %v595
    %v597 = vrot.slane %v292, %v596
    %v598 = vlaneseq
    %v599 = vshrl.u32 %v598, 7
    %v600 = vsub.s32 3, %v599
    %v601 = vrot.slane %v293, %v600
    %v602 = vlaneseq
    %v603 = vshrl.u32 %v602, 7
    %v604 = vsub.s32 7, %v603
    %v605 = vrot.slane %v293, %v604
    %v606 = vlaneseq
    %v607 = vshrl.u32 %v606, 7
    %v608 = vsub.s32 3, %v607
    %v609 = vrot.slane %v294, %v608
    %v616 = vlaneseq
    %v617 = vshrl.u32 %v616, 7
    %v618 = vsub.s32 3, %v617
    %v619 = vrot.slane %v589, %v618
    %v620 = vlaneseq
    %v621 = vshrl.u32 %v620, 7
    %v622 = vsub.s32 3, %v621
    %v623 = vrot.slane %v593, %v622
    %v624 = vlaneseq
    %v625 = vshrl.u32 %v624, 7
    %v626 = vsub.s32 3, %v625
    %v627 = vrot.slane %v597, %v626
    %v628 = vlaneseq
    %v629 = vshrl.u32 %v628, 7
    %v630 = vsub.s32 3, %v629
    %v631 = vrot.slane %v601, %v630
    %v632 = vlaneseq
    %v633 = vshrl.u32 %v632, 7
    %v634 = vsub.s32 3, %v633
    %v635 = vrot.slane %v605, %v634
    %v636 = vlaneseq
    %v637 = vshrl.u32 %v636, 7
    %v638 = vsub.s32 3, %v637
    %v639 = vrot.slane %v609, %v638
    %v640 = vmul.f32 %v584, %v619
    %v641 = vmul.f32 %v584, %v623
    %v642 = vmul.f32 %v584, %v627
    %v643 = vmul.f32 %v584, %v631
    %v644 = vmul.f32 %v584, %v635
    %v645 = vmul.f32 %v584, %v639
    %652 = vrot.lane.b32.xlu0 %v640, 127
    %v653 = vpop.permute.xlu0 %652
    %654 = vrot.lane.b32.xlu0 %v641, 127
    %v655 = vpop.permute.xlu0 %654
    %656 = vrot.lane.b32.xlu0 %v642, 127
    %v657 = vpop.permute.xlu0 %656
    %658 = vrot.lane.b32.xlu0 %v643, 127
    %v659 = vpop.permute.xlu0 %658
    %660 = vrot.lane.b32.xlu0 %v644, 127
    %v661 = vpop.permute.xlu0 %660
    %662 = vrot.lane.b32.xlu0 %v645, 127
    %v663 = vpop.permute.xlu0 %662
    %v664 = vsel %vm381, %v653, %v655
    %v665 = vsel %vm381, %v655, %v657
    %v666 = vsel %vm381, %v659, %v661
    %v667 = vsel %vm381, %v661, %v663
    %v672 = vadd.f32 %v578, %v664
    %v673 = vadd.f32 %v579, %v665
    %v674 = vadd.f32 %v580, %v666
    %v675 = vadd.f32 %v581, %v667
    %v678 = vcombine.low %v79, %v80
    %679 = vrot.lane.b32.xlu0 %v678, 2
    %v680 = vpop.permute.xlu0 %679
    %v681 = vrot.slane %v680, 4
    %vm682 = vcmask 15360
    %v683 = vsel %vm682, %v681, %v680
    %v686 = vmul.f32 %v291, %v683
    %v687 = vmul.f32 %v292, %v681
    %v688 = vmul.f32 %v293, %v683
    %v689 = vmul.f32 %v294, %v681
    %690 = vset.pattern.permute.xlu0 2
    %691 = vperm.xlu0 %690, %v21
    %v692 = vpop.permute.xlu0 %691
    %v698 = vlaneseq
    %v699 = vshrl.u32 %v698, 7
    %v700 = vsub.s32 0, %v699
    %v701 = vrot.slane %v686, %v700
    %v702 = vlaneseq
    %v703 = vshrl.u32 %v702, 7
    %v704 = vsub.s32 4, %v703
    %v705 = vrot.slane %v686, %v704
    %v706 = vlaneseq
    %v707 = vshrl.u32 %v706, 7
    %v708 = vsub.s32 0, %v707
    %v709 = vrot.slane %v687, %v708
    %v710 = vlaneseq
    %v711 = vshrl.u32 %v710, 7
    %v712 = vsub.s32 0, %v711
    %v713 = vrot.slane %v688, %v712
    %v714 = vlaneseq
    %v715 = vshrl.u32 %v714, 7
    %v716 = vsub.s32 4, %v715
    %v717 = vrot.slane %v688, %v716
    %v718 = vlaneseq
    %v719 = vshrl.u32 %v718, 7
    %v720 = vsub.s32 0, %v719
    %v721 = vrot.slane %v689, %v720
    %v728 = vlaneseq
    %v729 = vshrl.u32 %v728, 7
    %v730 = vsub.s32 0, %v729
    %v731 = vrot.slane %v701, %v730
    %v732 = vlaneseq
    %v733 = vshrl.u32 %v732, 7
    %v734 = vsub.s32 0, %v733
    %v735 = vrot.slane %v705, %v734
    %v736 = vlaneseq
    %v737 = vshrl.u32 %v736, 7
    %v738 = vsub.s32 0, %v737
    %v739 = vrot.slane %v709, %v738
    %v740 = vlaneseq
    %v741 = vshrl.u32 %v740, 7
    %v742 = vsub.s32 0, %v741
    %v743 = vrot.slane %v713, %v742
    %v744 = vlaneseq
    %v745 = vshrl.u32 %v744, 7
    %v746 = vsub.s32 0, %v745
    %v747 = vrot.slane %v717, %v746
    %v748 = vlaneseq
    %v749 = vshrl.u32 %v748, 7
    %v750 = vsub.s32 0, %v749
    %v751 = vrot.slane %v721, %v750
    %v752 = vmul.f32 %v692, %v731
    %v753 = vmul.f32 %v692, %v735
    %v754 = vmul.f32 %v692, %v739
    %v755 = vmul.f32 %v692, %v743
    %v756 = vmul.f32 %v692, %v747
    %v757 = vmul.f32 %v692, %v751
    %764 = vrot.lane.b32.xlu0 %v752, 126
    %v765 = vpop.permute.xlu0 %764
    %766 = vrot.lane.b32.xlu0 %v753, 126
    %v767 = vpop.permute.xlu0 %766
    %768 = vrot.lane.b32.xlu0 %v754, 126
    %v769 = vpop.permute.xlu0 %768
    %770 = vrot.lane.b32.xlu0 %v755, 126
    %v771 = vpop.permute.xlu0 %770
    %772 = vrot.lane.b32.xlu0 %v756, 126
    %v773 = vpop.permute.xlu0 %772
    %774 = vrot.lane.b32.xlu0 %v757, 126
    %v775 = vpop.permute.xlu0 %774
    %vm776 = vcmask 1031168
    %v777 = vsel %vm776, %v765, %v767
    %v778 = vsel %vm776, %v767, %v769
    %v779 = vsel %vm776, %v771, %v773
    %v780 = vsel %vm776, %v773, %v775
    %v785 = vadd.f32 %v672, %v777
    %v786 = vadd.f32 %v673, %v778
    %v787 = vadd.f32 %v674, %v779
    %v788 = vadd.f32 %v675, %v780
    %789 = vset.pattern.permute.xlu0 11
    %790 = vperm.xlu0 %789, %v21
    %v791 = vpop.permute.xlu0 %790
    %v793 = vlaneseq
    %v794 = vshrl.u32 %v793, 7
    %v795 = vsub.s32 1, %v794
    %v796 = vrot.slane %v686, %v795
    %v797 = vlaneseq
    %v798 = vshrl.u32 %v797, 7
    %v799 = vsub.s32 5, %v798
    %v800 = vrot.slane %v686, %v799
    %v801 = vlaneseq
    %v802 = vshrl.u32 %v801, 7
    %v803 = vsub.s32 1, %v802
    %v804 = vrot.slane %v687, %v803
    %v805 = vlaneseq
    %v806 = vshrl.u32 %v805, 7
    %v807 = vsub.s32 1, %v806
    %v808 = vrot.slane %v688, %v807
    %v809 = vlaneseq
    %v810 = vshrl.u32 %v809, 7
    %v811 = vsub.s32 5, %v810
    %v812 = vrot.slane %v688, %v811
    %v813 = vlaneseq
    %v814 = vshrl.u32 %v813, 7
    %v815 = vsub.s32 1, %v814
    %v816 = vrot.slane %v689, %v815
    %v823 = vlaneseq
    %v824 = vshrl.u32 %v823, 7
    %v825 = vsub.s32 1, %v824
    %v826 = vrot.slane %v796, %v825
    %v827 = vlaneseq
    %v828 = vshrl.u32 %v827, 7
    %v829 = vsub.s32 1, %v828
    %v830 = vrot.slane %v800, %v829
    %v831 = vlaneseq
    %v832 = vshrl.u32 %v831, 7
    %v833 = vsub.s32 1, %v832
    %v834 = vrot.slane %v804, %v833
    %v835 = vlaneseq
    %v836 = vshrl.u32 %v835, 7
    %v837 = vsub.s32 1, %v836
    %v838 = vrot.slane %v808, %v837
    %v839 = vlaneseq
    %v840 = vshrl.u32 %v839, 7
    %v841 = vsub.s32 1, %v840
    %v842 = vrot.slane %v812, %v841
    %v843 = vlaneseq
    %v844 = vshrl.u32 %v843, 7
    %v845 = vsub.s32 1, %v844
    %v846 = vrot.slane %v816, %v845
    %v847 = vmul.f32 %v791, %v826
    %v848 = vmul.f32 %v791, %v830
    %v849 = vmul.f32 %v791, %v834
    %v850 = vmul.f32 %v791, %v838
    %v851 = vmul.f32 %v791, %v842
    %v852 = vmul.f32 %v791, %v846
    %859 = vrot.lane.b32.xlu0 %v847, 126
    %v860 = vpop.permute.xlu0 %859
    %861 = vrot.lane.b32.xlu0 %v848, 126
    %v862 = vpop.permute.xlu0 %861
    %863 = vrot.lane.b32.xlu0 %v849, 126
    %v864 = vpop.permute.xlu0 %863
    %865 = vrot.lane.b32.xlu0 %v850, 126
    %v866 = vpop.permute.xlu0 %865
    %867 = vrot.lane.b32.xlu0 %v851, 126
    %v868 = vpop.permute.xlu0 %867
    %869 = vrot.lane.b32.xlu0 %v852, 126
    %v870 = vpop.permute.xlu0 %869
    %v871 = vsel %vm776, %v860, %v862
    %v872 = vsel %vm776, %v862, %v864
    %v873 = vsel %vm776, %v866, %v868
    %v874 = vsel %vm776, %v868, %v870
    %v879 = vadd.f32 %v785, %v871
    %v880 = vadd.f32 %v786, %v872
    %v881 = vadd.f32 %v787, %v873
    %v882 = vadd.f32 %v788, %v874
    %883 = vset.pattern.permute.xlu0 20
    %884 = vperm.xlu0 %883, %v21
    %v885 = vpop.permute.xlu0 %884
    %v887 = vlaneseq
    %v888 = vshrl.u32 %v887, 7
    %v889 = vsub.s32 2, %v888
    %v890 = vrot.slane %v686, %v889
    %v891 = vlaneseq
    %v892 = vshrl.u32 %v891, 7
    %v893 = vsub.s32 6, %v892
    %v894 = vrot.slane %v686, %v893
    %v895 = vlaneseq
    %v896 = vshrl.u32 %v895, 7
    %v897 = vsub.s32 2, %v896
    %v898 = vrot.slane %v687, %v897
    %v899 = vlaneseq
    %v900 = vshrl.u32 %v899, 7
    %v901 = vsub.s32 2, %v900
    %v902 = vrot.slane %v688, %v901
    %v903 = vlaneseq
    %v904 = vshrl.u32 %v903, 7
    %v905 = vsub.s32 6, %v904
    %v906 = vrot.slane %v688, %v905
    %v907 = vlaneseq
    %v908 = vshrl.u32 %v907, 7
    %v909 = vsub.s32 2, %v908
    %v910 = vrot.slane %v689, %v909
    %v917 = vlaneseq
    %v918 = vshrl.u32 %v917, 7
    %v919 = vsub.s32 2, %v918
    %v920 = vrot.slane %v890, %v919
    %v921 = vlaneseq
    %v922 = vshrl.u32 %v921, 7
    %v923 = vsub.s32 2, %v922
    %v924 = vrot.slane %v894, %v923
    %v925 = vlaneseq
    %v926 = vshrl.u32 %v925, 7
    %v927 = vsub.s32 2, %v926
    %v928 = vrot.slane %v898, %v927
    %v929 = vlaneseq
    %v930 = vshrl.u32 %v929, 7
    %v931 = vsub.s32 2, %v930
    %v932 = vrot.slane %v902, %v931
    %v933 = vlaneseq
    %v934 = vshrl.u32 %v933, 7
    %v935 = vsub.s32 2, %v934
    %v936 = vrot.slane %v906, %v935
    %v937 = vlaneseq
    %v938 = vshrl.u32 %v937, 7
    %v939 = vsub.s32 2, %v938
    %v940 = vrot.slane %v910, %v939
    %v941 = vmul.f32 %v885, %v920
    %v942 = vmul.f32 %v885, %v924
    %v943 = vmul.f32 %v885, %v928
    %v944 = vmul.f32 %v885, %v932
    %v945 = vmul.f32 %v885, %v936
    %v946 = vmul.f32 %v885, %v940
    %953 = vrot.lane.b32.xlu0 %v941, 126
    %v954 = vpop.permute.xlu0 %953
    %955 = vrot.lane.b32.xlu0 %v942, 126
    %v956 = vpop.permute.xlu0 %955
    %957 = vrot.lane.b32.xlu0 %v943, 126
    %v958 = vpop.permute.xlu0 %957
    %959 = vrot.lane.b32.xlu0 %v944, 126
    %v960 = vpop.permute.xlu0 %959
    %961 = vrot.lane.b32.xlu0 %v945, 126
    %v962 = vpop.permute.xlu0 %961
    %963 = vrot.lane.b32.xlu0 %v946, 126
    %v964 = vpop.permute.xlu0 %963
    %v965 = vsel %vm776, %v954, %v956
    %v966 = vsel %vm776, %v956, %v958
    %v967 = vsel %vm776, %v960, %v962
    %v968 = vsel %vm776, %v962, %v964
    %v973 = vadd.f32 %v879, %v965
    %v974 = vadd.f32 %v880, %v966
    %v975 = vadd.f32 %v881, %v967
    %v976 = vadd.f32 %v882, %v968
    %977 = vset.pattern.permute.xlu0 29
    %978 = vperm.xlu0 %977, %v21
    %v979 = vpop.permute.xlu0 %978
    %v981 = vlaneseq
    %v982 = vshrl.u32 %v981, 7
    %v983 = vsub.s32 3, %v982
    %v984 = vrot.slane %v686, %v983
    %v985 = vlaneseq
    %v986 = vshrl.u32 %v985, 7
    %v987 = vsub.s32 7, %v986
    %v988 = vrot.slane %v686, %v987
    %v989 = vlaneseq
    %v990 = vshrl.u32 %v989, 7
    %v991 = vsub.s32 3, %v990
    %v992 = vrot.slane %v687, %v991
    %v993 = vlaneseq
    %v994 = vshrl.u32 %v993, 7
    %v995 = vsub.s32 3, %v994
    %v996 = vrot.slane %v688, %v995
    %v997 = vlaneseq
    %v998 = vshrl.u32 %v997, 7
    %v999 = vsub.s32 7, %v998
    %v1000 = vrot.slane %v688, %v999
    %v1001 = vlaneseq
    %v1002 = vshrl.u32 %v1001, 7
    %v1003 = vsub.s32 3, %v1002
    %v1004 = vrot.slane %v689, %v1003
    %v1011 = vlaneseq
    %v1012 = vshrl.u32 %v1011, 7
    %v1013 = vsub.s32 3, %v1012
    %v1014 = vrot.slane %v984, %v1013
    %v1015 = vlaneseq
    %v1016 = vshrl.u32 %v1015, 7
    %v1017 = vsub.s32 3, %v1016
    %v1018 = vrot.slane %v988, %v1017
    %v1019 = vlaneseq
    %v1020 = vshrl.u32 %v1019, 7
    %v1021 = vsub.s32 3, %v1020
    %v1022 = vrot.slane %v992, %v1021
    %v1023 = vlaneseq
    %v1024 = vshrl.u32 %v1023, 7
    %v1025 = vsub.s32 3, %v1024
    %v1026 = vrot.slane %v996, %v1025
    %v1027 = vlaneseq
    %v1028 = vshrl.u32 %v1027, 7
    %v1029 = vsub.s32 3, %v1028
    %v1030 = vrot.slane %v1000, %v1029
    %v1031 = vlaneseq
    %v1032 = vshrl.u32 %v1031, 7
    %v1033 = vsub.s32 3, %v1032
    %v1034 = vrot.slane %v1004, %v1033
    %v1035 = vmul.f32 %v979, %v1014
    %v1036 = vmul.f32 %v979, %v1018
    %v1037 = vmul.f32 %v979, %v1022
    %v1038 = vmul.f32 %v979, %v1026
    %v1039 = vmul.f32 %v979, %v1030
    %v1040 = vmul.f32 %v979, %v1034
    %1047 = vrot.lane.b32.xlu0 %v1035, 126
    %v1048 = vpop.permute.xlu0 %1047
    %1049 = vrot.lane.b32.xlu0 %v1036, 126
    %v1050 = vpop.permute.xlu0 %1049
    %1051 = vrot.lane.b32.xlu0 %v1037, 126
    %v1052 = vpop.permute.xlu0 %1051
    %1053 = vrot.lane.b32.xlu0 %v1038, 126
    %v1054 = vpop.permute.xlu0 %1053
    %1055 = vrot.lane.b32.xlu0 %v1039, 126
    %v1056 = vpop.permute.xlu0 %1055
    %1057 = vrot.lane.b32.xlu0 %v1040, 126
    %v1058 = vpop.permute.xlu0 %1057
    %v1059 = vsel %vm776, %v1048, %v1050
    %v1060 = vsel %vm776, %v1050, %v1052
    %v1061 = vsel %vm776, %v1054, %v1056
    %v1062 = vsel %vm776, %v1056, %v1058
    %v1067 = vadd.f32 %v973, %v1059
    %v1068 = vadd.f32 %v974, %v1060
    %v1069 = vadd.f32 %v975, %v1061
    %v1070 = vadd.f32 %v976, %v1062
    %v1071 = vld [vmem:[%s0] sm:$0xff]
    %v1072 = vld [vmem:[%s0 + $0x8] sm:$0xf]
    %v1073 = vld [vmem:[%s0 + $0xc] sm:$0xff]
    %v1074 = vld [vmem:[%s0 + $0x14] sm:$0xf]
    %1075 = vrot.lane.b32.xlu0 %v92, 16
    %v1076 = vpop.permute.xlu0 %1075
    %v1077 = vrot.slane %v1076, 4
    %vm1078 = vcmask 130048
    %v1079 = vsel %vm1078, %v1077, %v1076
    %v1082 = vmul.f32 %v1071, %v1079
    %v1083 = vmul.f32 %v1072, %v1077
    %v1084 = vmul.f32 %v1073, %v1079
    %v1085 = vmul.f32 %v1074, %v1077
    %1086 = vset.pattern.permute.xlu0 3
    %1087 = vperm.xlu0 %1086, %v21
    %v1088 = vpop.permute.xlu0 %1087
    %v1094 = vlaneseq
    %v1095 = vshrl.u32 %v1094, 7
    %v1096 = vsub.s32 0, %v1095
    %v1097 = vrot.slane %v1082, %v1096
    %v1098 = vlaneseq
    %v1099 = vshrl.u32 %v1098, 7
    %v1100 = vsub.s32 4, %v1099
    %v1101 = vrot.slane %v1082, %v1100
    %v1102 = vlaneseq
    %v1103 = vshrl.u32 %v1102, 7
    %v1104 = vsub.s32 0, %v1103
    %v1105 = vrot.slane %v1083, %v1104
    %v1106 = vlaneseq
    %v1107 = vshrl.u32 %v1106, 7
    %v1108 = vsub.s32 0, %v1107
    %v1109 = vrot.slane %v1084, %v1108
    %v1110 = vlaneseq
    %v1111 = vshrl.u32 %v1110, 7
    %v1112 = vsub.s32 4, %v1111
    %v1113 = vrot.slane %v1084, %v1112
    %v1114 = vlaneseq
    %v1115 = vshrl.u32 %v1114, 7
    %v1116 = vsub.s32 0, %v1115
    %v1117 = vrot.slane %v1085, %v1116
    %v1124 = vlaneseq
    %v1125 = vshrl.u32 %v1124, 7
    %v1126 = vsub.s32 0, %v1125
    %v1127 = vrot.slane %v1097, %v1126
    %v1128 = vlaneseq
    %v1129 = vshrl.u32 %v1128, 7
    %v1130 = vsub.s32 0, %v1129
    %v1131 = vrot.slane %v1101, %v1130
    %v1132 = vlaneseq
    %v1133 = vshrl.u32 %v1132, 7
    %v1134 = vsub.s32 0, %v1133
    %v1135 = vrot.slane %v1105, %v1134
    %v1136 = vlaneseq
    %v1137 = vshrl.u32 %v1136, 7
    %v1138 = vsub.s32 0, %v1137
    %v1139 = vrot.slane %v1109, %v1138
    %v1140 = vlaneseq
    %v1141 = vshrl.u32 %v1140, 7
    %v1142 = vsub.s32 0, %v1141
    %v1143 = vrot.slane %v1113, %v1142
    %v1144 = vlaneseq
    %v1145 = vshrl.u32 %v1144, 7
    %v1146 = vsub.s32 0, %v1145
    %v1147 = vrot.slane %v1117, %v1146
    %v1148 = vmul.f32 %v1088, %v1127
    %v1149 = vmul.f32 %v1088, %v1131
    %v1150 = vmul.f32 %v1088, %v1135
    %v1151 = vmul.f32 %v1088, %v1139
    %v1152 = vmul.f32 %v1088, %v1143
    %v1153 = vmul.f32 %v1088, %v1147
    %1160 = vrot.lane.b32.xlu0 %v1148, 112
    %v1161 = vpop.permute.xlu0 %1160
    %1162 = vrot.lane.b32.xlu0 %v1149, 112
    %v1163 = vpop.permute.xlu0 %1162
    %1164 = vrot.lane.b32.xlu0 %v1150, 112
    %v1165 = vpop.permute.xlu0 %1164
    %1166 = vrot.lane.b32.xlu0 %v1151, 112
    %v1167 = vpop.permute.xlu0 %1166
    %1168 = vrot.lane.b32.xlu0 %v1152, 112
    %v1169 = vpop.permute.xlu0 %1168
    %1170 = vrot.lane.b32.xlu0 %v1153, 112
    %v1171 = vpop.permute.xlu0 %1170
    %vm1172 = vcmask 916480
    %v1173 = vsel %vm1172, %v1161, %v1163
    %v1174 = vsel %vm1172, %v1163, %v1165
    %v1175 = vsel %vm1172, %v1167, %v1169
    %v1176 = vsel %vm1172, %v1169, %v1171
    %v1181 = vadd.f32 %v1067, %v1173
    %v1182 = vadd.f32 %v1068, %v1174
    %v1183 = vadd.f32 %v1069, %v1175
    %v1184 = vadd.f32 %v1070, %v1176
    %1185 = vset.pattern.permute.xlu0 12
    %1186 = vperm.xlu0 %1185, %v21
    %v1187 = vpop.permute.xlu0 %1186
    %v1189 = vlaneseq
    %v1190 = vshrl.u32 %v1189, 7
    %v1191 = vsub.s32 1, %v1190
    %v1192 = vrot.slane %v1082, %v1191
    %v1193 = vlaneseq
    %v1194 = vshrl.u32 %v1193, 7
    %v1195 = vsub.s32 5, %v1194
    %v1196 = vrot.slane %v1082, %v1195
    %v1197 = vlaneseq
    %v1198 = vshrl.u32 %v1197, 7
    %v1199 = vsub.s32 1, %v1198
    %v1200 = vrot.slane %v1083, %v1199
    %v1201 = vlaneseq
    %v1202 = vshrl.u32 %v1201, 7
    %v1203 = vsub.s32 1, %v1202
    %v1204 = vrot.slane %v1084, %v1203
    %v1205 = vlaneseq
    %v1206 = vshrl.u32 %v1205, 7
    %v1207 = vsub.s32 5, %v1206
    %v1208 = vrot.slane %v1084, %v1207
    %v1209 = vlaneseq
    %v1210 = vshrl.u32 %v1209, 7
    %v1211 = vsub.s32 1, %v1210
    %v1212 = vrot.slane %v1085, %v1211
    %v1219 = vlaneseq
    %v1220 = vshrl.u32 %v1219, 7
    %v1221 = vsub.s32 1, %v1220
    %v1222 = vrot.slane %v1192, %v1221
    %v1223 = vlaneseq
    %v1224 = vshrl.u32 %v1223, 7
    %v1225 = vsub.s32 1, %v1224
    %v1226 = vrot.slane %v1196, %v1225
    %v1227 = vlaneseq
    %v1228 = vshrl.u32 %v1227, 7
    %v1229 = vsub.s32 1, %v1228
    %v1230 = vrot.slane %v1200, %v1229
    %v1231 = vlaneseq
    %v1232 = vshrl.u32 %v1231, 7
    %v1233 = vsub.s32 1, %v1232
    %v1234 = vrot.slane %v1204, %v1233
    %v1235 = vlaneseq
    %v1236 = vshrl.u32 %v1235, 7
    %v1237 = vsub.s32 1, %v1236
    %v1238 = vrot.slane %v1208, %v1237
    %v1239 = vlaneseq
    %v1240 = vshrl.u32 %v1239, 7
    %v1241 = vsub.s32 1, %v1240
    %v1242 = vrot.slane %v1212, %v1241
    %v1243 = vmul.f32 %v1187, %v1222
    %v1244 = vmul.f32 %v1187, %v1226
    %v1245 = vmul.f32 %v1187, %v1230
    %v1246 = vmul.f32 %v1187, %v1234
    %v1247 = vmul.f32 %v1187, %v1238
    %v1248 = vmul.f32 %v1187, %v1242
    %1255 = vrot.lane.b32.xlu0 %v1243, 112
    %v1256 = vpop.permute.xlu0 %1255
    %1257 = vrot.lane.b32.xlu0 %v1244, 112
    %v1258 = vpop.permute.xlu0 %1257
    %1259 = vrot.lane.b32.xlu0 %v1245, 112
    %v1260 = vpop.permute.xlu0 %1259
    %1261 = vrot.lane.b32.xlu0 %v1246, 112
    %v1262 = vpop.permute.xlu0 %1261
    %1263 = vrot.lane.b32.xlu0 %v1247, 112
    %v1264 = vpop.permute.xlu0 %1263
    %1265 = vrot.lane.b32.xlu0 %v1248, 112
    %v1266 = vpop.permute.xlu0 %1265
    %v1267 = vsel %vm1172, %v1256, %v1258
    %v1268 = vsel %vm1172, %v1258, %v1260
    %v1269 = vsel %vm1172, %v1262, %v1264
    %v1270 = vsel %vm1172, %v1264, %v1266
    %v1275 = vadd.f32 %v1181, %v1267
    %v1276 = vadd.f32 %v1182, %v1268
    %v1277 = vadd.f32 %v1183, %v1269
    %v1278 = vadd.f32 %v1184, %v1270
    %1279 = vset.pattern.permute.xlu0 21
    %1280 = vperm.xlu0 %1279, %v21
    %v1281 = vpop.permute.xlu0 %1280
    %v1283 = vlaneseq
    %v1284 = vshrl.u32 %v1283, 7
    %v1285 = vsub.s32 2, %v1284
    %v1286 = vrot.slane %v1082, %v1285
    %v1287 = vlaneseq
    %v1288 = vshrl.u32 %v1287, 7
    %v1289 = vsub.s32 6, %v1288
    %v1290 = vrot.slane %v1082, %v1289
    %v1291 = vlaneseq
    %v1292 = vshrl.u32 %v1291, 7
    %v1293 = vsub.s32 2, %v1292
    %v1294 = vrot.slane %v1083, %v1293
    %v1295 = vlaneseq
    %v1296 = vshrl.u32 %v1295, 7
    %v1297 = vsub.s32 2, %v1296
    %v1298 = vrot.slane %v1084, %v1297
    %v1299 = vlaneseq
    %v1300 = vshrl.u32 %v1299, 7
    %v1301 = vsub.s32 6, %v1300
    %v1302 = vrot.slane %v1084, %v1301
    %v1303 = vlaneseq
    %v1304 = vshrl.u32 %v1303, 7
    %v1305 = vsub.s32 2, %v1304
    %v1306 = vrot.slane %v1085, %v1305
    %v1313 = vlaneseq
    %v1314 = vshrl.u32 %v1313, 7
    %v1315 = vsub.s32 2, %v1314
    %v1316 = vrot.slane %v1286, %v1315
    %v1317 = vlaneseq
    %v1318 = vshrl.u32 %v1317, 7
    %v1319 = vsub.s32 2, %v1318
    %v1320 = vrot.slane %v1290, %v1319
    %v1321 = vlaneseq
    %v1322 = vshrl.u32 %v1321, 7
    %v1323 = vsub.s32 2, %v1322
    %v1324 = vrot.slane %v1294, %v1323
    %v1325 = vlaneseq
    %v1326 = vshrl.u32 %v1325, 7
    %v1327 = vsub.s32 2, %v1326
    %v1328 = vrot.slane %v1298, %v1327
    %v1329 = vlaneseq
    %v1330 = vshrl.u32 %v1329, 7
    %v1331 = vsub.s32 2, %v1330
    %v1332 = vrot.slane %v1302, %v1331
    %v1333 = vlaneseq
    %v1334 = vshrl.u32 %v1333, 7
    %v1335 = vsub.s32 2, %v1334
    %v1336 = vrot.slane %v1306, %v1335
    %v1337 = vmul.f32 %v1281, %v1316
    %v1338 = vmul.f32 %v1281, %v1320
    %v1339 = vmul.f32 %v1281, %v1324
    %v1340 = vmul.f32 %v1281, %v1328
    %v1341 = vmul.f32 %v1281, %v1332
    %v1342 = vmul.f32 %v1281, %v1336
    %1349 = vrot.lane.b32.xlu0 %v1337, 112
    %v1350 = vpop.permute.xlu0 %1349
    %1351 = vrot.lane.b32.xlu0 %v1338, 112
    %v1352 = vpop.permute.xlu0 %1351
    %1353 = vrot.lane.b32.xlu0 %v1339, 112
    %v1354 = vpop.permute.xlu0 %1353
    %1355 = vrot.lane.b32.xlu0 %v1340, 112
    %v1356 = vpop.permute.xlu0 %1355
    %1357 = vrot.lane.b32.xlu0 %v1341, 112
    %v1358 = vpop.permute.xlu0 %1357
    %1359 = vrot.lane.b32.xlu0 %v1342, 112
    %v1360 = vpop.permute.xlu0 %1359
    %v1361 = vsel %vm1172, %v1350, %v1352
    %v1362 = vsel %vm1172, %v1352, %v1354
    %v1363 = vsel %vm1172, %v1356, %v1358
    %v1364 = vsel %vm1172, %v1358, %v1360
    %v1369 = vadd.f32 %v1275, %v1361
    %v1370 = vadd.f32 %v1276, %v1362
    %v1371 = vadd.f32 %v1277, %v1363
    %v1372 = vadd.f32 %v1278, %v1364
    %1373 = vset.pattern.permute.xlu0 30
    %1374 = vperm.xlu0 %1373, %v21
    %v1375 = vpop.permute.xlu0 %1374
    %v1377 = vlaneseq
    %v1378 = vshrl.u32 %v1377, 7
    %v1379 = vsub.s32 3, %v1378
    %v1380 = vrot.slane %v1082, %v1379
    %v1381 = vlaneseq
    %v1382 = vshrl.u32 %v1381, 7
    %v1383 = vsub.s32 7, %v1382
    %v1384 = vrot.slane %v1082, %v1383
    %v1385 = vlaneseq
    %v1386 = vshrl.u32 %v1385, 7
    %v1387 = vsub.s32 3, %v1386
    %v1388 = vrot.slane %v1083, %v1387
    %v1389 = vlaneseq
    %v1390 = vshrl.u32 %v1389, 7
    %v1391 = vsub.s32 3, %v1390
    %v1392 = vrot.slane %v1084, %v1391
    %v1393 = vlaneseq
    %v1394 = vshrl.u32 %v1393, 7
    %v1395 = vsub.s32 7, %v1394
    %v1396 = vrot.slane %v1084, %v1395
    %v1397 = vlaneseq
    %v1398 = vshrl.u32 %v1397, 7
    %v1399 = vsub.s32 3, %v1398
    %v1400 = vrot.slane %v1085, %v1399
    %v1407 = vlaneseq
    %v1408 = vshrl.u32 %v1407, 7
    %v1409 = vsub.s32 3, %v1408
    %v1410 = vrot.slane %v1380, %v1409
    %v1411 = vlaneseq
    %v1412 = vshrl.u32 %v1411, 7
    %v1413 = vsub.s32 3, %v1412
    %v1414 = vrot.slane %v1384, %v1413
    %v1415 = vlaneseq
    %v1416 = vshrl.u32 %v1415, 7
    %v1417 = vsub.s32 3, %v1416
    %v1418 = vrot.slane %v1388, %v1417
    %v1419 = vlaneseq
    %v1420 = vshrl.u32 %v1419, 7
    %v1421 = vsub.s32 3, %v1420
    %v1422 = vrot.slane %v1392, %v1421
    %v1423 = vlaneseq
    %v1424 = vshrl.u32 %v1423, 7
    %v1425 = vsub.s32 3, %v1424
    %v1426 = vrot.slane %v1396, %v1425
    %v1427 = vlaneseq
    %v1428 = vshrl.u32 %v1427, 7
    %v1429 = vsub.s32 3, %v1428
    %v1430 = vrot.slane %v1400, %v1429
    %v1431 = vmul.f32 %v1375, %v1410
    %v1432 = vmul.f32 %v1375, %v1414
    %v1433 = vmul.f32 %v1375, %v1418
    %v1434 = vmul.f32 %v1375, %v1422
    %v1435 = vmul.f32 %v1375, %v1426
    %v1436 = vmul.f32 %v1375, %v1430
    %1443 = vrot.lane.b32.xlu0 %v1431, 112
    %v1444 = vpop.permute.xlu0 %1443
    %1445 = vrot.lane.b32.xlu0 %v1432, 112
    %v1446 = vpop.permute.xlu0 %1445
    %1447 = vrot.lane.b32.xlu0 %v1433, 112
    %v1448 = vpop.permute.xlu0 %1447
    %1449 = vrot.lane.b32.xlu0 %v1434, 112
    %v1450 = vpop.permute.xlu0 %1449
    %1451 = vrot.lane.b32.xlu0 %v1435, 112
    %v1452 = vpop.permute.xlu0 %1451
    %1453 = vrot.lane.b32.xlu0 %v1436, 112
    %v1454 = vpop.permute.xlu0 %1453
    %v1455 = vsel %vm1172, %v1444, %v1446
    %v1456 = vsel %vm1172, %v1446, %v1448
    %v1457 = vsel %vm1172, %v1450, %v1452
    %v1458 = vsel %vm1172, %v1452, %v1454
    %v1463 = vadd.f32 %v1369, %v1455
    %v1464 = vadd.f32 %v1370, %v1456
    %v1465 = vadd.f32 %v1371, %v1457
    %v1466 = vadd.f32 %v1372, %v1458
    %v1467 = vld [vmem:[%s0] sm:$0xff]
    %v1468 = vld [vmem:[%s0 + $0x8] sm:$0xf]
    %v1469 = vld [vmem:[%s0 + $0xc] sm:$0xff]
    %v1470 = vld [vmem:[%s0 + $0x14] sm:$0xf]
    %1471 = vset.pattern.permute.xlu0 4
    %1472 = vperm.xlu0 %1471, %v21
    %v1473 = vpop.permute.xlu0 %1472
    %v1479 = vlaneseq
    %v1480 = vshrl.u32 %v1479, 7
    %v1481 = vsub.s32 0, %v1480
    %v1482 = vrot.slane %v1467, %v1481
    %v1483 = vlaneseq
    %v1484 = vshrl.u32 %v1483, 7
    %v1485 = vsub.s32 4, %v1484
    %v1486 = vrot.slane %v1467, %v1485
    %v1487 = vlaneseq
    %v1488 = vshrl.u32 %v1487, 7
    %v1489 = vsub.s32 0, %v1488
    %v1490 = vrot.slane %v1468, %v1489
    %v1491 = vlaneseq
    %v1492 = vshrl.u32 %v1491, 7
    %v1493 = vsub.s32 0, %v1492
    %v1494 = vrot.slane %v1469, %v1493
    %v1495 = vlaneseq
    %v1496 = vshrl.u32 %v1495, 7
    %v1497 = vsub.s32 4, %v1496
    %v1498 = vrot.slane %v1469, %v1497
    %v1499 = vlaneseq
    %v1500 = vshrl.u32 %v1499, 7
    %v1501 = vsub.s32 0, %v1500
    %v1502 = vrot.slane %v1470, %v1501
    %v1509 = vlaneseq
    %v1510 = vshrl.u32 %v1509, 7
    %v1511 = vsub.s32 0, %v1510
    %v1512 = vrot.slane %v1482, %v1511
    %v1513 = vlaneseq
    %v1514 = vshrl.u32 %v1513, 7
    %v1515 = vsub.s32 0, %v1514
    %v1516 = vrot.slane %v1486, %v1515
    %v1517 = vlaneseq
    %v1518 = vshrl.u32 %v1517, 7
    %v1519 = vsub.s32 0, %v1518
    %v1520 = vrot.slane %v1490, %v1519
    %v1521 = vlaneseq
    %v1522 = vshrl.u32 %v1521, 7
    %v1523 = vsub.s32 0, %v1522
    %v1524 = vrot.slane %v1494, %v1523
    %v1525 = vlaneseq
    %v1526 = vshrl.u32 %v1525, 7
    %v1527 = vsub.s32 0, %v1526
    %v1528 = vrot.slane %v1498, %v1527
    %v1529 = vlaneseq
    %v1530 = vshrl.u32 %v1529, 7
    %v1531 = vsub.s32 0, %v1530
    %v1532 = vrot.slane %v1502, %v1531
    %v1533 = vmul.f32 %v1473, %v1512
    %v1534 = vmul.f32 %v1473, %v1516
    %v1535 = vmul.f32 %v1473, %v1520
    %v1536 = vmul.f32 %v1473, %v1524
    %v1537 = vmul.f32 %v1473, %v1528
    %v1538 = vmul.f32 %v1473, %v1532
    %1545 = vrot.lane.b32.xlu0 %v1533, 111
    %v1546 = vpop.permute.xlu0 %1545
    %1547 = vrot.lane.b32.xlu0 %v1534, 111
    %v1548 = vpop.permute.xlu0 %1547
    %1549 = vrot.lane.b32.xlu0 %v1535, 111
    %v1550 = vpop.permute.xlu0 %1549
    %1551 = vrot.lane.b32.xlu0 %v1536, 111
    %v1552 = vpop.permute.xlu0 %1551
    %1553 = vrot.lane.b32.xlu0 %v1537, 111
    %v1554 = vpop.permute.xlu0 %1553
    %1555 = vrot.lane.b32.xlu0 %v1538, 111
    %v1556 = vpop.permute.xlu0 %1555
    %vm1557 = vcmask 908288
    %v1558 = vsel %vm1557, %v1546, %v1548
    %v1559 = vsel %vm1557, %v1548, %v1550
    %v1560 = vsel %vm1557, %v1552, %v1554
    %v1561 = vsel %vm1557, %v1554, %v1556
    %v1566 = vadd.f32 %v1463, %v1558
    %v1567 = vadd.f32 %v1464, %v1559
    %v1568 = vadd.f32 %v1465, %v1560
    %v1569 = vadd.f32 %v1466, %v1561
    %1570 = vset.pattern.permute.xlu0 13
    %1571 = vperm.xlu0 %1570, %v21
    %v1572 = vpop.permute.xlu0 %1571
    %v1574 = vlaneseq
    %v1575 = vshrl.u32 %v1574, 7
    %v1576 = vsub.s32 1, %v1575
    %v1577 = vrot.slane %v1467, %v1576
    %v1578 = vlaneseq
    %v1579 = vshrl.u32 %v1578, 7
    %v1580 = vsub.s32 5, %v1579
    %v1581 = vrot.slane %v1467, %v1580
    %v1582 = vlaneseq
    %v1583 = vshrl.u32 %v1582, 7
    %v1584 = vsub.s32 1, %v1583
    %v1585 = vrot.slane %v1468, %v1584
    %v1586 = vlaneseq
    %v1587 = vshrl.u32 %v1586, 7
    %v1588 = vsub.s32 1, %v1587
    %v1589 = vrot.slane %v1469, %v1588
    %v1590 = vlaneseq
    %v1591 = vshrl.u32 %v1590, 7
    %v1592 = vsub.s32 5, %v1591
    %v1593 = vrot.slane %v1469, %v1592
    %v1594 = vlaneseq
    %v1595 = vshrl.u32 %v1594, 7
    %v1596 = vsub.s32 1, %v1595
    %v1597 = vrot.slane %v1470, %v1596
    %v1604 = vlaneseq
    %v1605 = vshrl.u32 %v1604, 7
    %v1606 = vsub.s32 1, %v1605
    %v1607 = vrot.slane %v1577, %v1606
    %v1608 = vlaneseq
    %v1609 = vshrl.u32 %v1608, 7
    %v1610 = vsub.s32 1, %v1609
    %v1611 = vrot.slane %v1581, %v1610
    %v1612 = vlaneseq
    %v1613 = vshrl.u32 %v1612, 7
    %v1614 = vsub.s32 1, %v1613
    %v1615 = vrot.slane %v1585, %v1614
    %v1616 = vlaneseq
    %v1617 = vshrl.u32 %v1616, 7
    %v1618 = vsub.s32 1, %v1617
    %v1619 = vrot.slane %v1589, %v1618
    %v1620 = vlaneseq
    %v1621 = vshrl.u32 %v1620, 7
    %v1622 = vsub.s32 1, %v1621
    %v1623 = vrot.slane %v1593, %v1622
    %v1624 = vlaneseq
    %v1625 = vshrl.u32 %v1624, 7
    %v1626 = vsub.s32 1, %v1625
    %v1627 = vrot.slane %v1597, %v1626
    %v1628 = vmul.f32 %v1572, %v1607
    %v1629 = vmul.f32 %v1572, %v1611
    %v1630 = vmul.f32 %v1572, %v1615
    %v1631 = vmul.f32 %v1572, %v1619
    %v1632 = vmul.f32 %v1572, %v1623
    %v1633 = vmul.f32 %v1572, %v1627
    %1640 = vrot.lane.b32.xlu0 %v1628, 111
    %v1641 = vpop.permute.xlu0 %1640
    %1642 = vrot.lane.b32.xlu0 %v1629, 111
    %v1643 = vpop.permute.xlu0 %1642
    %1644 = vrot.lane.b32.xlu0 %v1630, 111
    %v1645 = vpop.permute.xlu0 %1644
    %1646 = vrot.lane.b32.xlu0 %v1631, 111
    %v1647 = vpop.permute.xlu0 %1646
    %1648 = vrot.lane.b32.xlu0 %v1632, 111
    %v1649 = vpop.permute.xlu0 %1648
    %1650 = vrot.lane.b32.xlu0 %v1633, 111
    %v1651 = vpop.permute.xlu0 %1650
    %v1652 = vsel %vm1557, %v1641, %v1643
    %v1653 = vsel %vm1557, %v1643, %v1645
    %v1654 = vsel %vm1557, %v1647, %v1649
    %v1655 = vsel %vm1557, %v1649, %v1651
    %v1660 = vadd.f32 %v1566, %v1652
    %v1661 = vadd.f32 %v1567, %v1653
    %v1662 = vadd.f32 %v1568, %v1654
    %v1663 = vadd.f32 %v1569, %v1655
    %1664 = vset.pattern.permute.xlu0 22
    %1665 = vperm.xlu0 %1664, %v21
    %v1666 = vpop.permute.xlu0 %1665
    %v1668 = vlaneseq
    %v1669 = vshrl.u32 %v1668, 7
    %v1670 = vsub.s32 2, %v1669
    %v1671 = vrot.slane %v1467, %v1670
    %v1672 = vlaneseq
    %v1673 = vshrl.u32 %v1672, 7
    %v1674 = vsub.s32 6, %v1673
    %v1675 = vrot.slane %v1467, %v1674
    %v1676 = vlaneseq
    %v1677 = vshrl.u32 %v1676, 7
    %v1678 = vsub.s32 2, %v1677
    %v1679 = vrot.slane %v1468, %v1678
    %v1680 = vlaneseq
    %v1681 = vshrl.u32 %v1680, 7
    %v1682 = vsub.s32 2, %v1681
    %v1683 = vrot.slane %v1469, %v1682
    %v1684 = vlaneseq
    %v1685 = vshrl.u32 %v1684, 7
    %v1686 = vsub.s32 6, %v1685
    %v1687 = vrot.slane %v1469, %v1686
    %v1688 = vlaneseq
    %v1689 = vshrl.u32 %v1688, 7
    %v1690 = vsub.s32 2, %v1689
    %v1691 = vrot.slane %v1470, %v1690
    %v1698 = vlaneseq
    %v1699 = vshrl.u32 %v1698, 7
    %v1700 = vsub.s32 2, %v1699
    %v1701 = vrot.slane %v1671, %v1700
    %v1702 = vlaneseq
    %v1703 = vshrl.u32 %v1702, 7
    %v1704 = vsub.s32 2, %v1703
    %v1705 = vrot.slane %v1675, %v1704
    %v1706 = vlaneseq
    %v1707 = vshrl.u32 %v1706, 7
    %v1708 = vsub.s32 2, %v1707
    %v1709 = vrot.slane %v1679, %v1708
    %v1710 = vlaneseq
    %v1711 = vshrl.u32 %v1710, 7
    %v1712 = vsub.s32 2, %v1711
    %v1713 = vrot.slane %v1683, %v1712
    %v1714 = vlaneseq
    %v1715 = vshrl.u32 %v1714, 7
    %v1716 = vsub.s32 2, %v1715
    %v1717 = vrot.slane %v1687, %v1716
    %v1718 = vlaneseq
    %v1719 = vshrl.u32 %v1718, 7
    %v1720 = vsub.s32 2, %v1719
    %v1721 = vrot.slane %v1691, %v1720
    %v1722 = vmul.f32 %v1666, %v1701
    %v1723 = vmul.f32 %v1666, %v1705
    %v1724 = vmul.f32 %v1666, %v1709
    %v1725 = vmul.f32 %v1666, %v1713
    %v1726 = vmul.f32 %v1666, %v1717
    %v1727 = vmul.f32 %v1666, %v1721
    %1734 = vrot.lane.b32.xlu0 %v1722, 111
    %v1735 = vpop.permute.xlu0 %1734
    %1736 = vrot.lane.b32.xlu0 %v1723, 111
    %v1737 = vpop.permute.xlu0 %1736
    %1738 = vrot.lane.b32.xlu0 %v1724, 111
    %v1739 = vpop.permute.xlu0 %1738
    %1740 = vrot.lane.b32.xlu0 %v1725, 111
    %v1741 = vpop.permute.xlu0 %1740
    %1742 = vrot.lane.b32.xlu0 %v1726, 111
    %v1743 = vpop.permute.xlu0 %1742
    %1744 = vrot.lane.b32.xlu0 %v1727, 111
    %v1745 = vpop.permute.xlu0 %1744
    %v1746 = vsel %vm1557, %v1735, %v1737
    %v1747 = vsel %vm1557, %v1737, %v1739
    %v1748 = vsel %vm1557, %v1741, %v1743
    %v1749 = vsel %vm1557, %v1743, %v1745
    %v1754 = vadd.f32 %v1660, %v1746
    %v1755 = vadd.f32 %v1661, %v1747
    %v1756 = vadd.f32 %v1662, %v1748
    %v1757 = vadd.f32 %v1663, %v1749
    %1758 = vset.pattern.permute.xlu0 31
    %1759 = vperm.xlu0 %1758, %v21
    %v1760 = vpop.permute.xlu0 %1759
    %v1762 = vlaneseq
    %v1763 = vshrl.u32 %v1762, 7
    %v1764 = vsub.s32 3, %v1763
    %v1765 = vrot.slane %v1467, %v1764
    %v1766 = vlaneseq
    %v1767 = vshrl.u32 %v1766, 7
    %v1768 = vsub.s32 7, %v1767
    %v1769 = vrot.slane %v1467, %v1768
    %v1770 = vlaneseq
    %v1771 = vshrl.u32 %v1770, 7
    %v1772 = vsub.s32 3, %v1771
    %v1773 = vrot.slane %v1468, %v1772
    %v1774 = vlaneseq
    %v1775 = vshrl.u32 %v1774, 7
    %v1776 = vsub.s32 3, %v1775
    %v1777 = vrot.slane %v1469, %v1776
    %v1778 = vlaneseq
    %v1779 = vshrl.u32 %v1778, 7
    %v1780 = vsub.s32 7, %v1779
    %v1781 = vrot.slane %v1469, %v1780
    %v1782 = vlaneseq
    %v1783 = vshrl.u32 %v1782, 7
    %v1784 = vsub.s32 3, %v1783
    %v1785 = vrot.slane %v1470, %v1784
    %v1792 = vlaneseq
    %v1793 = vshrl.u32 %v1792, 7
    %v1794 = vsub.s32 3, %v1793
    %v1795 = vrot.slane %v1765, %v1794
    %v1796 = vlaneseq
    %v1797 = vshrl.u32 %v1796, 7
    %v1798 = vsub.s32 3, %v1797
    %v1799 = vrot.slane %v1769, %v1798
    %v1800 = vlaneseq
    %v1801 = vshrl.u32 %v1800, 7
    %v1802 = vsub.s32 3, %v1801
    %v1803 = vrot.slane %v1773, %v1802
    %v1804 = vlaneseq
    %v1805 = vshrl.u32 %v1804, 7
    %v1806 = vsub.s32 3, %v1805
    %v1807 = vrot.slane %v1777, %v1806
    %v1808 = vlaneseq
    %v1809 = vshrl.u32 %v1808, 7
    %v1810 = vsub.s32 3, %v1809
    %v1811 = vrot.slane %v1781, %v1810
    %v1812 = vlaneseq
    %v1813 = vshrl.u32 %v1812, 7
    %v1814 = vsub.s32 3, %v1813
    %v1815 = vrot.slane %v1785, %v1814
    %v1816 = vmul.f32 %v1760, %v1795
    %v1817 = vmul.f32 %v1760, %v1799
    %v1818 = vmul.f32 %v1760, %v1803
    %v1819 = vmul.f32 %v1760, %v1807
    %v1820 = vmul.f32 %v1760, %v1811
    %v1821 = vmul.f32 %v1760, %v1815
    %1828 = vrot.lane.b32.xlu0 %v1816, 111
    %v1829 = vpop.permute.xlu0 %1828
    %1830 = vrot.lane.b32.xlu0 %v1817, 111
    %v1831 = vpop.permute.xlu0 %1830
    %1832 = vrot.lane.b32.xlu0 %v1818, 111
    %v1833 = vpop.permute.xlu0 %1832
    %1834 = vrot.lane.b32.xlu0 %v1819, 111
    %v1835 = vpop.permute.xlu0 %1834
    %1836 = vrot.lane.b32.xlu0 %v1820, 111
    %v1837 = vpop.permute.xlu0 %1836
    %1838 = vrot.lane.b32.xlu0 %v1821, 111
    %v1839 = vpop.permute.xlu0 %1838
    %v1840 = vsel %vm1557, %v1829, %v1831
    %v1841 = vsel %vm1557, %v1831, %v1833
    %v1842 = vsel %vm1557, %v1835, %v1837
    %v1843 = vsel %vm1557, %v1837, %v1839
    %v1848 = vadd.f32 %v1754, %v1840
    %v1849 = vadd.f32 %v1755, %v1841
    %v1850 = vadd.f32 %v1756, %v1842
    %v1851 = vadd.f32 %v1757, %v1843
    %1852 = vrot.lane.b32.xlu0 %v678, 18
    %v1853 = vpop.permute.xlu0 %1852
    %v1854 = vrot.slane %v1853, 4
    %vm1855 = vcmask 146432
    %v1856 = vsel %vm1855, %v1854, %v1853
    %v1859 = vmul.f32 %v1467, %v1856
    %v1860 = vmul.f32 %v1468, %v1854
    %v1861 = vmul.f32 %v1469, %v1856
    %v1862 = vmul.f32 %v1470, %v1854
    %1863 = vset.pattern.permute.xlu0 5
    %1864 = vperm.xlu0 %1863, %v21
    %v1865 = vpop.permute.xlu0 %1864
    %v1871 = vlaneseq
    %v1872 = vshrl.u32 %v1871, 7
    %v1873 = vsub.s32 0, %v1872
    %v1874 = vrot.slane %v1859, %v1873
    %v1875 = vlaneseq
    %v1876 = vshrl.u32 %v1875, 7
    %v1877 = vsub.s32 4, %v1876
    %v1878 = vrot.slane %v1859, %v1877
    %v1879 = vlaneseq
    %v1880 = vshrl.u32 %v1879, 7
    %v1881 = vsub.s32 0, %v1880
    %v1882 = vrot.slane %v1860, %v1881
    %v1883 = vlaneseq
    %v1884 = vshrl.u32 %v1883, 7
    %v1885 = vsub.s32 0, %v1884
    %v1886 = vrot.slane %v1861, %v1885
    %v1887 = vlaneseq
    %v1888 = vshrl.u32 %v1887, 7
    %v1889 = vsub.s32 4, %v1888
    %v1890 = vrot.slane %v1861, %v1889
    %v1891 = vlaneseq
    %v1892 = vshrl.u32 %v1891, 7
    %v1893 = vsub.s32 0, %v1892
    %v1894 = vrot.slane %v1862, %v1893
    %v1901 = vlaneseq
    %v1902 = vshrl.u32 %v1901, 7
    %v1903 = vsub.s32 0, %v1902
    %v1904 = vrot.slane %v1874, %v1903
    %v1905 = vlaneseq
    %v1906 = vshrl.u32 %v1905, 7
    %v1907 = vsub.s32 0, %v1906
    %v1908 = vrot.slane %v1878, %v1907
    %v1909 = vlaneseq
    %v1910 = vshrl.u32 %v1909, 7
    %v1911 = vsub.s32 0, %v1910
    %v1912 = vrot.slane %v1882, %v1911
    %v1913 = vlaneseq
    %v1914 = vshrl.u32 %v1913, 7
    %v1915 = vsub.s32 0, %v1914
    %v1916 = vrot.slane %v1886, %v1915
    %v1917 = vlaneseq
    %v1918 = vshrl.u32 %v1917, 7
    %v1919 = vsub.s32 0, %v1918
    %v1920 = vrot.slane %v1890, %v1919
    %v1921 = vlaneseq
    %v1922 = vshrl.u32 %v1921, 7
    %v1923 = vsub.s32 0, %v1922
    %v1924 = vrot.slane %v1894, %v1923
    %v1925 = vmul.f32 %v1865, %v1904
    %v1926 = vmul.f32 %v1865, %v1908
    %v1927 = vmul.f32 %v1865, %v1912
    %v1928 = vmul.f32 %v1865, %v1916
    %v1929 = vmul.f32 %v1865, %v1920
    %v1930 = vmul.f32 %v1865, %v1924
    %1937 = vrot.lane.b32.xlu0 %v1925, 110
    %v1938 = vpop.permute.xlu0 %1937
    %1939 = vrot.lane.b32.xlu0 %v1926, 110
    %v1940 = vpop.permute.xlu0 %1939
    %1941 = vrot.lane.b32.xlu0 %v1927, 110
    %v1942 = vpop.permute.xlu0 %1941
    %1943 = vrot.lane.b32.xlu0 %v1928, 110
    %v1944 = vpop.permute.xlu0 %1943
    %1945 = vrot.lane.b32.xlu0 %v1929, 110
    %v1946 = vpop.permute.xlu0 %1945
    %1947 = vrot.lane.b32.xlu0 %v1930, 110
    %v1948 = vpop.permute.xlu0 %1947
    %vm1949 = vcmask 900096
    %v1950 = vsel %vm1949, %v1938, %v1940
    %v1951 = vsel %vm1949, %v1940, %v1942
    %v1952 = vsel %vm1949, %v1944, %v1946
    %v1953 = vsel %vm1949, %v1946, %v1948
    %v1958 = vadd.f32 %v1848, %v1950
    %v1959 = vadd.f32 %v1849, %v1951
    %v1960 = vadd.f32 %v1850, %v1952
    %v1961 = vadd.f32 %v1851, %v1953
    %1962 = vset.pattern.permute.xlu0 14
    %1963 = vperm.xlu0 %1962, %v21
    %v1964 = vpop.permute.xlu0 %1963
    %v1966 = vlaneseq
    %v1967 = vshrl.u32 %v1966, 7
    %v1968 = vsub.s32 1, %v1967
    %v1969 = vrot.slane %v1859, %v1968
    %v1970 = vlaneseq
    %v1971 = vshrl.u32 %v1970, 7
    %v1972 = vsub.s32 5, %v1971
    %v1973 = vrot.slane %v1859, %v1972
    %v1974 = vlaneseq
    %v1975 = vshrl.u32 %v1974, 7
    %v1976 = vsub.s32 1, %v1975
    %v1977 = vrot.slane %v1860, %v1976
    %v1978 = vlaneseq
    %v1979 = vshrl.u32 %v1978, 7
    %v1980 = vsub.s32 1, %v1979
    %v1981 = vrot.slane %v1861, %v1980
    %v1982 = vlaneseq
    %v1983 = vshrl.u32 %v1982, 7
    %v1984 = vsub.s32 5, %v1983
    %v1985 = vrot.slane %v1861, %v1984
    %v1986 = vlaneseq
    %v1987 = vshrl.u32 %v1986, 7
    %v1988 = vsub.s32 1, %v1987
    %v1989 = vrot.slane %v1862, %v1988
    %v1996 = vlaneseq
    %v1997 = vshrl.u32 %v1996, 7
    %v1998 = vsub.s32 1, %v1997
    %v1999 = vrot.slane %v1969, %v1998
    %v2000 = vlaneseq
    %v2001 = vshrl.u32 %v2000, 7
    %v2002 = vsub.s32 1, %v2001
    %v2003 = vrot.slane %v1973, %v2002
    %v2004 = vlaneseq
    %v2005 = vshrl.u32 %v2004, 7
    %v2006 = vsub.s32 1, %v2005
    %v2007 = vrot.slane %v1977, %v2006
    %v2008 = vlaneseq
    %v2009 = vshrl.u32 %v2008, 7
    %v2010 = vsub.s32 1, %v2009
    %v2011 = vrot.slane %v1981, %v2010
    %v2012 = vlaneseq
    %v2013 = vshrl.u32 %v2012, 7
    %v2014 = vsub.s32 1, %v2013
    %v2015 = vrot.slane %v1985, %v2014
    %v2016 = vlaneseq
    %v2017 = vshrl.u32 %v2016, 7
    %v2018 = vsub.s32 1, %v2017
    %v2019 = vrot.slane %v1989, %v2018
    %v2020 = vmul.f32 %v1964, %v1999
    %v2021 = vmul.f32 %v1964, %v2003
    %v2022 = vmul.f32 %v1964, %v2007
    %v2023 = vmul.f32 %v1964, %v2011
    %v2024 = vmul.f32 %v1964, %v2015
    %v2025 = vmul.f32 %v1964, %v2019
    %2032 = vrot.lane.b32.xlu0 %v2020, 110
    %v2033 = vpop.permute.xlu0 %2032
    %2034 = vrot.lane.b32.xlu0 %v2021, 110
    %v2035 = vpop.permute.xlu0 %2034
    %2036 = vrot.lane.b32.xlu0 %v2022, 110
    %v2037 = vpop.permute.xlu0 %2036
    %2038 = vrot.lane.b32.xlu0 %v2023, 110
    %v2039 = vpop.permute.xlu0 %2038
    %2040 = vrot.lane.b32.xlu0 %v2024, 110
    %v2041 = vpop.permute.xlu0 %2040
    %2042 = vrot.lane.b32.xlu0 %v2025, 110
    %v2043 = vpop.permute.xlu0 %2042
    %v2044 = vsel %vm1949, %v2033, %v2035
    %v2045 = vsel %vm1949, %v2035, %v2037
    %v2046 = vsel %vm1949, %v2039, %v2041
    %v2047 = vsel %vm1949, %v2041, %v2043
    %v2052 = vadd.f32 %v1958, %v2044
    %v2053 = vadd.f32 %v1959, %v2045
    %v2054 = vadd.f32 %v1960, %v2046
    %v2055 = vadd.f32 %v1961, %v2047
    %2056 = vset.pattern.permute.xlu0 23
    %2057 = vperm.xlu0 %2056, %v21
    %v2058 = vpop.permute.xlu0 %2057
    %v2060 = vlaneseq
    %v2061 = vshrl.u32 %v2060, 7
    %v2062 = vsub.s32 2, %v2061
    %v2063 = vrot.slane %v1859, %v2062
    %v2064 = vlaneseq
    %v2065 = vshrl.u32 %v2064, 7
    %v2066 = vsub.s32 6, %v2065
    %v2067 = vrot.slane %v1859, %v2066
    %v2068 = vlaneseq
    %v2069 = vshrl.u32 %v2068, 7
    %v2070 = vsub.s32 2, %v2069
    %v2071 = vrot.slane %v1860, %v2070
    %v2072 = vlaneseq
    %v2073 = vshrl.u32 %v2072, 7
    %v2074 = vsub.s32 2, %v2073
    %v2075 = vrot.slane %v1861, %v2074
    %v2076 = vlaneseq
    %v2077 = vshrl.u32 %v2076, 7
    %v2078 = vsub.s32 6, %v2077
    %v2079 = vrot.slane %v1861, %v2078
    %v2080 = vlaneseq
    %v2081 = vshrl.u32 %v2080, 7
    %v2082 = vsub.s32 2, %v2081
    %v2083 = vrot.slane %v1862, %v2082
    %v2090 = vlaneseq
    %v2091 = vshrl.u32 %v2090, 7
    %v2092 = vsub.s32 2, %v2091
    %v2093 = vrot.slane %v2063, %v2092
    %v2094 = vlaneseq
    %v2095 = vshrl.u32 %v2094, 7
    %v2096 = vsub.s32 2, %v2095
    %v2097 = vrot.slane %v2067, %v2096
    %v2098 = vlaneseq
    %v2099 = vshrl.u32 %v2098, 7
    %v2100 = vsub.s32 2, %v2099
    %v2101 = vrot.slane %v2071, %v2100
    %v2102 = vlaneseq
    %v2103 = vshrl.u32 %v2102, 7
    %v2104 = vsub.s32 2, %v2103
    %v2105 = vrot.slane %v2075, %v2104
    %v2106 = vlaneseq
    %v2107 = vshrl.u32 %v2106, 7
    %v2108 = vsub.s32 2, %v2107
    %v2109 = vrot.slane %v2079, %v2108
    %v2110 = vlaneseq
    %v2111 = vshrl.u32 %v2110, 7
    %v2112 = vsub.s32 2, %v2111
    %v2113 = vrot.slane %v2083, %v2112
    %v2114 = vmul.f32 %v2058, %v2093
    %v2115 = vmul.f32 %v2058, %v2097
    %v2116 = vmul.f32 %v2058, %v2101
    %v2117 = vmul.f32 %v2058, %v2105
    %v2118 = vmul.f32 %v2058, %v2109
    %v2119 = vmul.f32 %v2058, %v2113
    %2126 = vrot.lane.b32.xlu0 %v2114, 110
    %v2127 = vpop.permute.xlu0 %2126
    %2128 = vrot.lane.b32.xlu0 %v2115, 110
    %v2129 = vpop.permute.xlu0 %2128
    %2130 = vrot.lane.b32.xlu0 %v2116, 110
    %v2131 = vpop.permute.xlu0 %2130
    %2132 = vrot.lane.b32.xlu0 %v2117, 110
    %v2133 = vpop.permute.xlu0 %2132
    %2134 = vrot.lane.b32.xlu0 %v2118, 110
    %v2135 = vpop.permute.xlu0 %2134
    %2136 = vrot.lane.b32.xlu0 %v2119, 110
    %v2137 = vpop.permute.xlu0 %2136
    %v2138 = vsel %vm1949, %v2127, %v2129
    %v2139 = vsel %vm1949, %v2129, %v2131
    %v2140 = vsel %vm1949, %v2133, %v2135
    %v2141 = vsel %vm1949, %v2135, %v2137
    %v2146 = vadd.f32 %v2052, %v2138
    %v2147 = vadd.f32 %v2053, %v2139
    %v2148 = vadd.f32 %v2054, %v2140
    %v2149 = vadd.f32 %v2055, %v2141
    %2150 = vset.pattern.permute.xlu0 32
    %2151 = vperm.xlu0 %2150, %v21
    %v2152 = vpop.permute.xlu0 %2151
    %v2154 = vlaneseq
    %v2155 = vshrl.u32 %v2154, 7
    %v2156 = vsub.s32 3, %v2155
    %v2157 = vrot.slane %v1859, %v2156
    %v2158 = vlaneseq
    %v2159 = vshrl.u32 %v2158, 7
    %v2160 = vsub.s32 7, %v2159
    %v2161 = vrot.slane %v1859, %v2160
    %v2162 = vlaneseq
    %v2163 = vshrl.u32 %v2162, 7
    %v2164 = vsub.s32 3, %v2163
    %v2165 = vrot.slane %v1860, %v2164
    %v2166 = vlaneseq
    %v2167 = vshrl.u32 %v2166, 7
    %v2168 = vsub.s32 3, %v2167
    %v2169 = vrot.slane %v1861, %v2168
    %v2170 = vlaneseq
    %v2171 = vshrl.u32 %v2170, 7
    %v2172 = vsub.s32 7, %v2171
    %v2173 = vrot.slane %v1861, %v2172
    %v2174 = vlaneseq
    %v2175 = vshrl.u32 %v2174, 7
    %v2176 = vsub.s32 3, %v2175
    %v2177 = vrot.slane %v1862, %v2176
    %v2184 = vlaneseq
    %v2185 = vshrl.u32 %v2184, 7
    %v2186 = vsub.s32 3, %v2185
    %v2187 = vrot.slane %v2157, %v2186
    %v2188 = vlaneseq
    %v2189 = vshrl.u32 %v2188, 7
    %v2190 = vsub.s32 3, %v2189
    %v2191 = vrot.slane %v2161, %v2190
    %v2192 = vlaneseq
    %v2193 = vshrl.u32 %v2192, 7
    %v2194 = vsub.s32 3, %v2193
    %v2195 = vrot.slane %v2165, %v2194
    %v2196 = vlaneseq
    %v2197 = vshrl.u32 %v2196, 7
    %v2198 = vsub.s32 3, %v2197
    %v2199 = vrot.slane %v2169, %v2198
    %v2200 = vlaneseq
    %v2201 = vshrl.u32 %v2200, 7
    %v2202 = vsub.s32 3, %v2201
    %v2203 = vrot.slane %v2173, %v2202
    %v2204 = vlaneseq
    %v2205 = vshrl.u32 %v2204, 7
    %v2206 = vsub.s32 3, %v2205
    %v2207 = vrot.slane %v2177, %v2206
    %v2208 = vmul.f32 %v2152, %v2187
    %v2209 = vmul.f32 %v2152, %v2191
    %v2210 = vmul.f32 %v2152, %v2195
    %v2211 = vmul.f32 %v2152, %v2199
    %v2212 = vmul.f32 %v2152, %v2203
    %v2213 = vmul.f32 %v2152, %v2207
    %2220 = vrot.lane.b32.xlu0 %v2208, 110
    %v2221 = vpop.permute.xlu0 %2220
    %2222 = vrot.lane.b32.xlu0 %v2209, 110
    %v2223 = vpop.permute.xlu0 %2222
    %2224 = vrot.lane.b32.xlu0 %v2210, 110
    %v2225 = vpop.permute.xlu0 %2224
    %2226 = vrot.lane.b32.xlu0 %v2211, 110
    %v2227 = vpop.permute.xlu0 %2226
    %2228 = vrot.lane.b32.xlu0 %v2212, 110
    %v2229 = vpop.permute.xlu0 %2228
    %2230 = vrot.lane.b32.xlu0 %v2213, 110
    %v2231 = vpop.permute.xlu0 %2230
    %v2232 = vsel %vm1949, %v2221, %v2223
    %v2233 = vsel %vm1949, %v2223, %v2225
    %v2234 = vsel %vm1949, %v2227, %v2229
    %v2235 = vsel %vm1949, %v2229, %v2231
    %v2240 = vadd.f32 %v2146, %v2232
    %v2241 = vadd.f32 %v2147, %v2233
    %v2242 = vadd.f32 %v2148, %v2234
    %v2243 = vadd.f32 %v2149, %v2235
    %v2244 = vld [vmem:[%s0] sm:$0xff]
    %v2245 = vld [vmem:[%s0 + $0x8] sm:$0xf]
    %v2246 = vld [vmem:[%s0 + $0xc] sm:$0xff]
    %v2247 = vld [vmem:[%s0 + $0x14] sm:$0xf]
    %2248 = vrot.lane.b32.xlu0 %v92, 32
    %v2249 = vpop.permute.xlu0 %2248
    %v2250 = vrot.slane %v2249, 4
    %vm2251 = vcmask 261120
    %v2252 = vsel %vm2251, %v2250, %v2249
    %v2255 = vmul.f32 %v2244, %v2252
    %v2256 = vmul.f32 %v2245, %v2250
    %v2257 = vmul.f32 %v2246, %v2252
    %v2258 = vmul.f32 %v2247, %v2250
    %2259 = vset.pattern.permute.xlu0 6
    %2260 = vperm.xlu0 %2259, %v21
    %v2261 = vpop.permute.xlu0 %2260
    %v2267 = vlaneseq
    %v2268 = vshrl.u32 %v2267, 7
    %v2269 = vsub.s32 0, %v2268
    %v2270 = vrot.slane %v2255, %v2269
    %v2271 = vlaneseq
    %v2272 = vshrl.u32 %v2271, 7
    %v2273 = vsub.s32 4, %v2272
    %v2274 = vrot.slane %v2255, %v2273
    %v2275 = vlaneseq
    %v2276 = vshrl.u32 %v2275, 7
    %v2277 = vsub.s32 0, %v2276
    %v2278 = vrot.slane %v2256, %v2277
    %v2279 = vlaneseq
    %v2280 = vshrl.u32 %v2279, 7
    %v2281 = vsub.s32 0, %v2280
    %v2282 = vrot.slane %v2257, %v2281
    %v2283 = vlaneseq
    %v2284 = vshrl.u32 %v2283, 7
    %v2285 = vsub.s32 4, %v2284
    %v2286 = vrot.slane %v2257, %v2285
    %v2287 = vlaneseq
    %v2288 = vshrl.u32 %v2287, 7
    %v2289 = vsub.s32 0, %v2288
    %v2290 = vrot.slane %v2258, %v2289
    %v2297 = vlaneseq
    %v2298 = vshrl.u32 %v2297, 7
    %v2299 = vsub.s32 0, %v2298
    %v2300 = vrot.slane %v2270, %v2299
    %v2301 = vlaneseq
    %v2302 = vshrl.u32 %v2301, 7
    %v2303 = vsub.s32 0, %v2302
    %v2304 = vrot.slane %v2274, %v2303
    %v2305 = vlaneseq
    %v2306 = vshrl.u32 %v2305, 7
    %v2307 = vsub.s32 0, %v2306
    %v2308 = vrot.slane %v2278, %v2307
    %v2309 = vlaneseq
    %v2310 = vshrl.u32 %v2309, 7
    %v2311 = vsub.s32 0, %v2310
    %v2312 = vrot.slane %v2282, %v2311
    %v2313 = vlaneseq
    %v2314 = vshrl.u32 %v2313, 7
    %v2315 = vsub.s32 0, %v2314
    %v2316 = vrot.slane %v2286, %v2315
    %v2317 = vlaneseq
    %v2318 = vshrl.u32 %v2317, 7
    %v2319 = vsub.s32 0, %v2318
    %v2320 = vrot.slane %v2290, %v2319
    %v2321 = vmul.f32 %v2261, %v2300
    %v2322 = vmul.f32 %v2261, %v2304
    %v2323 = vmul.f32 %v2261, %v2308
    %v2324 = vmul.f32 %v2261, %v2312
    %v2325 = vmul.f32 %v2261, %v2316
    %v2326 = vmul.f32 %v2261, %v2320
    %2333 = vrot.lane.b32.xlu0 %v2321, 96
    %v2334 = vpop.permute.xlu0 %2333
    %2335 = vrot.lane.b32.xlu0 %v2322, 96
    %v2336 = vpop.permute.xlu0 %2335
    %2337 = vrot.lane.b32.xlu0 %v2323, 96
    %v2338 = vpop.permute.xlu0 %2337
    %2339 = vrot.lane.b32.xlu0 %v2324, 96
    %v2340 = vpop.permute.xlu0 %2339
    %2341 = vrot.lane.b32.xlu0 %v2325, 96
    %v2342 = vpop.permute.xlu0 %2341
    %2343 = vrot.lane.b32.xlu0 %v2326, 96
    %v2344 = vpop.permute.xlu0 %2343
    %vm2345 = vcmask 785408
    %v2346 = vsel %vm2345, %v2334, %v2336
    %v2347 = vsel %vm2345, %v2336, %v2338
    %v2348 = vsel %vm2345, %v2340, %v2342
    %v2349 = vsel %vm2345, %v2342, %v2344
    %v2354 = vadd.f32 %v2240, %v2346
    %v2355 = vadd.f32 %v2241, %v2347
    %v2356 = vadd.f32 %v2242, %v2348
    %v2357 = vadd.f32 %v2243, %v2349
    %2358 = vset.pattern.permute.xlu0 15
    %2359 = vperm.xlu0 %2358, %v21
    %v2360 = vpop.permute.xlu0 %2359
    %v2362 = vlaneseq
    %v2363 = vshrl.u32 %v2362, 7
    %v2364 = vsub.s32 1, %v2363
    %v2365 = vrot.slane %v2255, %v2364
    %v2366 = vlaneseq
    %v2367 = vshrl.u32 %v2366, 7
    %v2368 = vsub.s32 5, %v2367
    %v2369 = vrot.slane %v2255, %v2368
    %v2370 = vlaneseq
    %v2371 = vshrl.u32 %v2370, 7
    %v2372 = vsub.s32 1, %v2371
    %v2373 = vrot.slane %v2256, %v2372
    %v2374 = vlaneseq
    %v2375 = vshrl.u32 %v2374, 7
    %v2376 = vsub.s32 1, %v2375
    %v2377 = vrot.slane %v2257, %v2376
    %v2378 = vlaneseq
    %v2379 = vshrl.u32 %v2378, 7
    %v2380 = vsub.s32 5, %v2379
    %v2381 = vrot.slane %v2257, %v2380
    %v2382 = vlaneseq
    %v2383 = vshrl.u32 %v2382, 7
    %v2384 = vsub.s32 1, %v2383
    %v2385 = vrot.slane %v2258, %v2384
    %v2392 = vlaneseq
    %v2393 = vshrl.u32 %v2392, 7
    %v2394 = vsub.s32 1, %v2393
    %v2395 = vrot.slane %v2365, %v2394
    %v2396 = vlaneseq
    %v2397 = vshrl.u32 %v2396, 7
    %v2398 = vsub.s32 1, %v2397
    %v2399 = vrot.slane %v2369, %v2398
    %v2400 = vlaneseq
    %v2401 = vshrl.u32 %v2400, 7
    %v2402 = vsub.s32 1, %v2401
    %v2403 = vrot.slane %v2373, %v2402
    %v2404 = vlaneseq
    %v2405 = vshrl.u32 %v2404, 7
    %v2406 = vsub.s32 1, %v2405
    %v2407 = vrot.slane %v2377, %v2406
    %v2408 = vlaneseq
    %v2409 = vshrl.u32 %v2408, 7
    %v2410 = vsub.s32 1, %v2409
    %v2411 = vrot.slane %v2381, %v2410
    %v2412 = vlaneseq
    %v2413 = vshrl.u32 %v2412, 7
    %v2414 = vsub.s32 1, %v2413
    %v2415 = vrot.slane %v2385, %v2414
    %v2416 = vmul.f32 %v2360, %v2395
    %v2417 = vmul.f32 %v2360, %v2399
    %v2418 = vmul.f32 %v2360, %v2403
    %v2419 = vmul.f32 %v2360, %v2407
    %v2420 = vmul.f32 %v2360, %v2411
    %v2421 = vmul.f32 %v2360, %v2415
    %2428 = vrot.lane.b32.xlu0 %v2416, 96
    %v2429 = vpop.permute.xlu0 %2428
    %2430 = vrot.lane.b32.xlu0 %v2417, 96
    %v2431 = vpop.permute.xlu0 %2430
    %2432 = vrot.lane.b32.xlu0 %v2418, 96
    %v2433 = vpop.permute.xlu0 %2432
    %2434 = vrot.lane.b32.xlu0 %v2419, 96
    %v2435 = vpop.permute.xlu0 %2434
    %2436 = vrot.lane.b32.xlu0 %v2420, 96
    %v2437 = vpop.permute.xlu0 %2436
    %2438 = vrot.lane.b32.xlu0 %v2421, 96
    %v2439 = vpop.permute.xlu0 %2438
    %v2440 = vsel %vm2345, %v2429, %v2431
    %v2441 = vsel %vm2345, %v2431, %v2433
    %v2442 = vsel %vm2345, %v2435, %v2437
    %v2443 = vsel %vm2345, %v2437, %v2439
    %v2448 = vadd.f32 %v2354, %v2440
    %v2449 = vadd.f32 %v2355, %v2441
    %v2450 = vadd.f32 %v2356, %v2442
    %v2451 = vadd.f32 %v2357, %v2443
    %2452 = vset.pattern.permute.xlu0 24
    %2453 = vperm.xlu0 %2452, %v21
    %v2454 = vpop.permute.xlu0 %2453
    %v2456 = vlaneseq
    %v2457 = vshrl.u32 %v2456, 7
    %v2458 = vsub.s32 2, %v2457
    %v2459 = vrot.slane %v2255, %v2458
    %v2460 = vlaneseq
    %v2461 = vshrl.u32 %v2460, 7
    %v2462 = vsub.s32 6, %v2461
    %v2463 = vrot.slane %v2255, %v2462
    %v2464 = vlaneseq
    %v2465 = vshrl.u32 %v2464, 7
    %v2466 = vsub.s32 2, %v2465
    %v2467 = vrot.slane %v2256, %v2466
    %v2468 = vlaneseq
    %v2469 = vshrl.u32 %v2468, 7
    %v2470 = vsub.s32 2, %v2469
    %v2471 = vrot.slane %v2257, %v2470
    %v2472 = vlaneseq
    %v2473 = vshrl.u32 %v2472, 7
    %v2474 = vsub.s32 6, %v2473
    %v2475 = vrot.slane %v2257, %v2474
    %v2476 = vlaneseq
    %v2477 = vshrl.u32 %v2476, 7
    %v2478 = vsub.s32 2, %v2477
    %v2479 = vrot.slane %v2258, %v2478
    %v2486 = vlaneseq
    %v2487 = vshrl.u32 %v2486, 7
    %v2488 = vsub.s32 2, %v2487
    %v2489 = vrot.slane %v2459, %v2488
    %v2490 = vlaneseq
    %v2491 = vshrl.u32 %v2490, 7
    %v2492 = vsub.s32 2, %v2491
    %v2493 = vrot.slane %v2463, %v2492
    %v2494 = vlaneseq
    %v2495 = vshrl.u32 %v2494, 7
    %v2496 = vsub.s32 2, %v2495
    %v2497 = vrot.slane %v2467, %v2496
    %v2498 = vlaneseq
    %v2499 = vshrl.u32 %v2498, 7
    %v2500 = vsub.s32 2, %v2499
    %v2501 = vrot.slane %v2471, %v2500
    %v2502 = vlaneseq
    %v2503 = vshrl.u32 %v2502, 7
    %v2504 = vsub.s32 2, %v2503
    %v2505 = vrot.slane %v2475, %v2504
    %v2506 = vlaneseq
    %v2507 = vshrl.u32 %v2506, 7
    %v2508 = vsub.s32 2, %v2507
    %v2509 = vrot.slane %v2479, %v2508
    %v2510 = vmul.f32 %v2454, %v2489
    %v2511 = vmul.f32 %v2454, %v2493
    %v2512 = vmul.f32 %v2454, %v2497
    %v2513 = vmul.f32 %v2454, %v2501
    %v2514 = vmul.f32 %v2454, %v2505
    %v2515 = vmul.f32 %v2454, %v2509
    %2522 = vrot.lane.b32.xlu0 %v2510, 96
    %v2523 = vpop.permute.xlu0 %2522
    %2524 = vrot.lane.b32.xlu0 %v2511, 96
    %v2525 = vpop.permute.xlu0 %2524
    %2526 = vrot.lane.b32.xlu0 %v2512, 96
    %v2527 = vpop.permute.xlu0 %2526
    %2528 = vrot.lane.b32.xlu0 %v2513, 96
    %v2529 = vpop.permute.xlu0 %2528
    %2530 = vrot.lane.b32.xlu0 %v2514, 96
    %v2531 = vpop.permute.xlu0 %2530
    %2532 = vrot.lane.b32.xlu0 %v2515, 96
    %v2533 = vpop.permute.xlu0 %2532
    %v2534 = vsel %vm2345, %v2523, %v2525
    %v2535 = vsel %vm2345, %v2525, %v2527
    %v2536 = vsel %vm2345, %v2529, %v2531
    %v2537 = vsel %vm2345, %v2531, %v2533
    %v2542 = vadd.f32 %v2448, %v2534
    %v2543 = vadd.f32 %v2449, %v2535
    %v2544 = vadd.f32 %v2450, %v2536
    %v2545 = vadd.f32 %v2451, %v2537
    %2546 = vset.pattern.permute.xlu0 33
    %2547 = vperm.xlu0 %2546, %v21
    %v2548 = vpop.permute.xlu0 %2547
    %v2550 = vlaneseq
    %v2551 = vshrl.u32 %v2550, 7
    %v2552 = vsub.s32 3, %v2551
    %v2553 = vrot.slane %v2255, %v2552
    %v2554 = vlaneseq
    %v2555 = vshrl.u32 %v2554, 7
    %v2556 = vsub.s32 7, %v2555
    %v2557 = vrot.slane %v2255, %v2556
    %v2558 = vlaneseq
    %v2559 = vshrl.u32 %v2558, 7
    %v2560 = vsub.s32 3, %v2559
    %v2561 = vrot.slane %v2256, %v2560
    %v2562 = vlaneseq
    %v2563 = vshrl.u32 %v2562, 7
    %v2564 = vsub.s32 3, %v2563
    %v2565 = vrot.slane %v2257, %v2564
    %v2566 = vlaneseq
    %v2567 = vshrl.u32 %v2566, 7
    %v2568 = vsub.s32 7, %v2567
    %v2569 = vrot.slane %v2257, %v2568
    %v2570 = vlaneseq
    %v2571 = vshrl.u32 %v2570, 7
    %v2572 = vsub.s32 3, %v2571
    %v2573 = vrot.slane %v2258, %v2572
    %v2580 = vlaneseq
    %v2581 = vshrl.u32 %v2580, 7
    %v2582 = vsub.s32 3, %v2581
    %v2583 = vrot.slane %v2553, %v2582
    %v2584 = vlaneseq
    %v2585 = vshrl.u32 %v2584, 7
    %v2586 = vsub.s32 3, %v2585
    %v2587 = vrot.slane %v2557, %v2586
    %v2588 = vlaneseq
    %v2589 = vshrl.u32 %v2588, 7
    %v2590 = vsub.s32 3, %v2589
    %v2591 = vrot.slane %v2561, %v2590
    %v2592 = vlaneseq
    %v2593 = vshrl.u32 %v2592, 7
    %v2594 = vsub.s32 3, %v2593
    %v2595 = vrot.slane %v2565, %v2594
    %v2596 = vlaneseq
    %v2597 = vshrl.u32 %v2596, 7
    %v2598 = vsub.s32 3, %v2597
    %v2599 = vrot.slane %v2569, %v2598
    %v2600 = vlaneseq
    %v2601 = vshrl.u32 %v2600, 7
    %v2602 = vsub.s32 3, %v2601
    %v2603 = vrot.slane %v2573, %v2602
    %v2604 = vmul.f32 %v2548, %v2583
    %v2605 = vmul.f32 %v2548, %v2587
    %v2606 = vmul.f32 %v2548, %v2591
    %v2607 = vmul.f32 %v2548, %v2595
    %v2608 = vmul.f32 %v2548, %v2599
    %v2609 = vmul.f32 %v2548, %v2603
    %2616 = vrot.lane.b32.xlu0 %v2604, 96
    %v2617 = vpop.permute.xlu0 %2616
    %2618 = vrot.lane.b32.xlu0 %v2605, 96
    %v2619 = vpop.permute.xlu0 %2618
    %2620 = vrot.lane.b32.xlu0 %v2606, 96
    %v2621 = vpop.permute.xlu0 %2620
    %2622 = vrot.lane.b32.xlu0 %v2607, 96
    %v2623 = vpop.permute.xlu0 %2622
    %2624 = vrot.lane.b32.xlu0 %v2608, 96
    %v2625 = vpop.permute.xlu0 %2624
    %2626 = vrot.lane.b32.xlu0 %v2609, 96
    %v2627 = vpop.permute.xlu0 %2626
    %v2628 = vsel %vm2345, %v2617, %v2619
    %v2629 = vsel %vm2345, %v2619, %v2621
    %v2630 = vsel %vm2345, %v2623, %v2625
    %v2631 = vsel %vm2345, %v2625, %v2627
    %v2636 = vadd.f32 %v2542, %v2628
    %v2637 = vadd.f32 %v2543, %v2629
    %v2638 = vadd.f32 %v2544, %v2630
    %v2639 = vadd.f32 %v2545, %v2631
    %v2640 = vld [vmem:[%s0] sm:$0xff]
    %v2641 = vld [vmem:[%s0 + $0x8] sm:$0xf]
    %v2642 = vld [vmem:[%s0 + $0xc] sm:$0xff]
    %v2643 = vld [vmem:[%s0 + $0x14] sm:$0xf]
    %2644 = vset.pattern.permute.xlu0 7
    %2645 = vperm.xlu0 %2644, %v21
    %v2646 = vpop.permute.xlu0 %2645
    %v2652 = vlaneseq
    %v2653 = vshrl.u32 %v2652, 7
    %v2654 = vsub.s32 0, %v2653
    %v2655 = vrot.slane %v2640, %v2654
    %v2656 = vlaneseq
    %v2657 = vshrl.u32 %v2656, 7
    %v2658 = vsub.s32 4, %v2657
    %v2659 = vrot.slane %v2640, %v2658
    %v2660 = vlaneseq
    %v2661 = vshrl.u32 %v2660, 7
    %v2662 = vsub.s32 0, %v2661
    %v2663 = vrot.slane %v2641, %v2662
    %v2664 = vlaneseq
    %v2665 = vshrl.u32 %v2664, 7
    %v2666 = vsub.s32 0, %v2665
    %v2667 = vrot.slane %v2642, %v2666
    %v2668 = vlaneseq
    %v2669 = vshrl.u32 %v2668, 7
    %v2670 = vsub.s32 4, %v2669
    %v2671 = vrot.slane %v2642, %v2670
    %v2672 = vlaneseq
    %v2673 = vshrl.u32 %v2672, 7
    %v2674 = vsub.s32 0, %v2673
    %v2675 = vrot.slane %v2643, %v2674
    %v2682 = vlaneseq
    %v2683 = vshrl.u32 %v2682, 7
    %v2684 = vsub.s32 0, %v2683
    %v2685 = vrot.slane %v2655, %v2684
    %v2686 = vlaneseq
    %v2687 = vshrl.u32 %v2686, 7
    %v2688 = vsub.s32 0, %v2687
    %v2689 = vrot.slane %v2659, %v2688
    %v2690 = vlaneseq
    %v2691 = vshrl.u32 %v2690, 7
    %v2692 = vsub.s32 0, %v2691
    %v2693 = vrot.slane %v2663, %v2692
    %v2694 = vlaneseq
    %v2695 = vshrl.u32 %v2694, 7
    %v2696 = vsub.s32 0, %v2695
    %v2697 = vrot.slane %v2667, %v2696
    %v2698 = vlaneseq
    %v2699 = vshrl.u32 %v2698, 7
    %v2700 = vsub.s32 0, %v2699
    %v2701 = vrot.slane %v2671, %v2700
    %v2702 = vlaneseq
    %v2703 = vshrl.u32 %v2702, 7
    %v2704 = vsub.s32 0, %v2703
    %v2705 = vrot.slane %v2675, %v2704
    %v2706 = vmul.f32 %v2646, %v2685
    %v2707 = vmul.f32 %v2646, %v2689
    %v2708 = vmul.f32 %v2646, %v2693
    %v2709 = vmul.f32 %v2646, %v2697
    %v2710 = vmul.f32 %v2646, %v2701
    %v2711 = vmul.f32 %v2646, %v2705
    %2718 = vrot.lane.b32.xlu0 %v2706, 95
    %v2719 = vpop.permute.xlu0 %2718
    %2720 = vrot.lane.b32.xlu0 %v2707, 95
    %v2721 = vpop.permute.xlu0 %2720
    %2722 = vrot.lane.b32.xlu0 %v2708, 95
    %v2723 = vpop.permute.xlu0 %2722
    %2724 = vrot.lane.b32.xlu0 %v2709, 95
    %v2725 = vpop.permute.xlu0 %2724
    %2726 = vrot.lane.b32.xlu0 %v2710, 95
    %v2727 = vpop.permute.xlu0 %2726
    %2728 = vrot.lane.b32.xlu0 %v2711, 95
    %v2729 = vpop.permute.xlu0 %2728
    %vm2730 = vcmask 777216
    %v2731 = vsel %vm2730, %v2719, %v2721
    %v2732 = vsel %vm2730, %v2721, %v2723
    %v2733 = vsel %vm2730, %v2725, %v2727
    %v2734 = vsel %vm2730, %v2727, %v2729
    %v2739 = vadd.f32 %v2636, %v2731
    %v2740 = vadd.f32 %v2637, %v2732
    %v2741 = vadd.f32 %v2638, %v2733
    %v2742 = vadd.f32 %v2639, %v2734
    %2743 = vset.pattern.permute.xlu0 16
    %2744 = vperm.xlu0 %2743, %v21
    %v2745 = vpop.permute.xlu0 %2744
    %v2747 = vlaneseq
    %v2748 = vshrl.u32 %v2747, 7
    %v2749 = vsub.s32 1, %v2748
    %v2750 = vrot.slane %v2640, %v2749
    %v2751 = vlaneseq
    %v2752 = vshrl.u32 %v2751, 7
    %v2753 = vsub.s32 5, %v2752
    %v2754 = vrot.slane %v2640, %v2753
    %v2755 = vlaneseq
    %v2756 = vshrl.u32 %v2755, 7
    %v2757 = vsub.s32 1, %v2756
    %v2758 = vrot.slane %v2641, %v2757
    %v2759 = vlaneseq
    %v2760 = vshrl.u32 %v2759, 7
    %v2761 = vsub.s32 1, %v2760
    %v2762 = vrot.slane %v2642, %v2761
    %v2763 = vlaneseq
    %v2764 = vshrl.u32 %v2763, 7
    %v2765 = vsub.s32 5, %v2764
    %v2766 = vrot.slane %v2642, %v2765
    %v2767 = vlaneseq
    %v2768 = vshrl.u32 %v2767, 7
    %v2769 = vsub.s32 1, %v2768
    %v2770 = vrot.slane %v2643, %v2769
    %v2777 = vlaneseq
    %v2778 = vshrl.u32 %v2777, 7
    %v2779 = vsub.s32 1, %v2778
    %v2780 = vrot.slane %v2750, %v2779
    %v2781 = vlaneseq
    %v2782 = vshrl.u32 %v2781, 7
    %v2783 = vsub.s32 1, %v2782
    %v2784 = vrot.slane %v2754, %v2783
    %v2785 = vlaneseq
    %v2786 = vshrl.u32 %v2785, 7
    %v2787 = vsub.s32 1, %v2786
    %v2788 = vrot.slane %v2758, %v2787
    %v2789 = vlaneseq
    %v2790 = vshrl.u32 %v2789, 7
    %v2791 = vsub.s32 1, %v2790
    %v2792 = vrot.slane %v2762, %v2791
    %v2793 = vlaneseq
    %v2794 = vshrl.u32 %v2793, 7
    %v2795 = vsub.s32 1, %v2794
    %v2796 = vrot.slane %v2766, %v2795
    %v2797 = vlaneseq
    %v2798 = vshrl.u32 %v2797, 7
    %v2799 = vsub.s32 1, %v2798
    %v2800 = vrot.slane %v2770, %v2799
    %v2801 = vmul.f32 %v2745, %v2780
    %v2802 = vmul.f32 %v2745, %v2784
    %v2803 = vmul.f32 %v2745, %v2788
    %v2804 = vmul.f32 %v2745, %v2792
    %v2805 = vmul.f32 %v2745, %v2796
    %v2806 = vmul.f32 %v2745, %v2800
    %2813 = vrot.lane.b32.xlu0 %v2801, 95
    %v2814 = vpop.permute.xlu0 %2813
    %2815 = vrot.lane.b32.xlu0 %v2802, 95
    %v2816 = vpop.permute.xlu0 %2815
    %2817 = vrot.lane.b32.xlu0 %v2803, 95
    %v2818 = vpop.permute.xlu0 %2817
    %2819 = vrot.lane.b32.xlu0 %v2804, 95
    %v2820 = vpop.permute.xlu0 %2819
    %2821 = vrot.lane.b32.xlu0 %v2805, 95
    %v2822 = vpop.permute.xlu0 %2821
    %2823 = vrot.lane.b32.xlu0 %v2806, 95
    %v2824 = vpop.permute.xlu0 %2823
    %v2825 = vsel %vm2730, %v2814, %v2816
    %v2826 = vsel %vm2730, %v2816, %v2818
    %v2827 = vsel %vm2730, %v2820, %v2822
    %v2828 = vsel %vm2730, %v2822, %v2824
    %v2833 = vadd.f32 %v2739, %v2825
    %v2834 = vadd.f32 %v2740, %v2826
    %v2835 = vadd.f32 %v2741, %v2827
    %v2836 = vadd.f32 %v2742, %v2828
    %2837 = vset.pattern.permute.xlu0 25
    %2838 = vperm.xlu0 %2837, %v21
    %v2839 = vpop.permute.xlu0 %2838
    %v2841 = vlaneseq
    %v2842 = vshrl.u32 %v2841, 7
    %v2843 = vsub.s32 2, %v2842
    %v2844 = vrot.slane %v2640, %v2843
    %v2845 = vlaneseq
    %v2846 = vshrl.u32 %v2845, 7
    %v2847 = vsub.s32 6, %v2846
    %v2848 = vrot.slane %v2640, %v2847
    %v2849 = vlaneseq
    %v2850 = vshrl.u32 %v2849, 7
    %v2851 = vsub.s32 2, %v2850
    %v2852 = vrot.slane %v2641, %v2851
    %v2853 = vlaneseq
    %v2854 = vshrl.u32 %v2853, 7
    %v2855 = vsub.s32 2, %v2854
    %v2856 = vrot.slane %v2642, %v2855
    %v2857 = vlaneseq
    %v2858 = vshrl.u32 %v2857, 7
    %v2859 = vsub.s32 6, %v2858
    %v2860 = vrot.slane %v2642, %v2859
    %v2861 = vlaneseq
    %v2862 = vshrl.u32 %v2861, 7
    %v2863 = vsub.s32 2, %v2862
    %v2864 = vrot.slane %v2643, %v2863
    %v2871 = vlaneseq
    %v2872 = vshrl.u32 %v2871, 7
    %v2873 = vsub.s32 2, %v2872
    %v2874 = vrot.slane %v2844, %v2873
    %v2875 = vlaneseq
    %v2876 = vshrl.u32 %v2875, 7
    %v2877 = vsub.s32 2, %v2876
    %v2878 = vrot.slane %v2848, %v2877
    %v2879 = vlaneseq
    %v2880 = vshrl.u32 %v2879, 7
    %v2881 = vsub.s32 2, %v2880
    %v2882 = vrot.slane %v2852, %v2881
    %v2883 = vlaneseq
    %v2884 = vshrl.u32 %v2883, 7
    %v2885 = vsub.s32 2, %v2884
    %v2886 = vrot.slane %v2856, %v2885
    %v2887 = vlaneseq
    %v2888 = vshrl.u32 %v2887, 7
    %v2889 = vsub.s32 2, %v2888
    %v2890 = vrot.slane %v2860, %v2889
    %v2891 = vlaneseq
    %v2892 = vshrl.u32 %v2891, 7
    %v2893 = vsub.s32 2, %v2892
    %v2894 = vrot.slane %v2864, %v2893
    %v2895 = vmul.f32 %v2839, %v2874
    %v2896 = vmul.f32 %v2839, %v2878
    %v2897 = vmul.f32 %v2839, %v2882
    %v2898 = vmul.f32 %v2839, %v2886
    %v2899 = vmul.f32 %v2839, %v2890
    %v2900 = vmul.f32 %v2839, %v2894
    %2907 = vrot.lane.b32.xlu0 %v2895, 95
    %v2908 = vpop.permute.xlu0 %2907
    %2909 = vrot.lane.b32.xlu0 %v2896, 95
    %v2910 = vpop.permute.xlu0 %2909
    %2911 = vrot.lane.b32.xlu0 %v2897, 95
    %v2912 = vpop.permute.xlu0 %2911
    %2913 = vrot.lane.b32.xlu0 %v2898, 95
    %v2914 = vpop.permute.xlu0 %2913
    %2915 = vrot.lane.b32.xlu0 %v2899, 95
    %v2916 = vpop.permute.xlu0 %2915
    %2917 = vrot.lane.b32.xlu0 %v2900, 95
    %v2918 = vpop.permute.xlu0 %2917
    %v2919 = vsel %vm2730, %v2908, %v2910
    %v2920 = vsel %vm2730, %v2910, %v2912
    %v2921 = vsel %vm2730, %v2914, %v2916
    %v2922 = vsel %vm2730, %v2916, %v2918
    %v2927 = vadd.f32 %v2833, %v2919
    %v2928 = vadd.f32 %v2834, %v2920
    %v2929 = vadd.f32 %v2835, %v2921
    %v2930 = vadd.f32 %v2836, %v2922
    %2931 = vset.pattern.permute.xlu0 34
    %2932 = vperm.xlu0 %2931, %v21
    %v2933 = vpop.permute.xlu0 %2932
    %v2935 = vlaneseq
    %v2936 = vshrl.u32 %v2935, 7
    %v2937 = vsub.s32 3, %v2936
    %v2938 = vrot.slane %v2640, %v2937
    %v2939 = vlaneseq
    %v2940 = vshrl.u32 %v2939, 7
    %v2941 = vsub.s32 7, %v2940
    %v2942 = vrot.slane %v2640, %v2941
    %v2943 = vlaneseq
    %v2944 = vshrl.u32 %v2943, 7
    %v2945 = vsub.s32 3, %v2944
    %v2946 = vrot.slane %v2641, %v2945
    %v2947 = vlaneseq
    %v2948 = vshrl.u32 %v2947, 7
    %v2949 = vsub.s32 3, %v2948
    %v2950 = vrot.slane %v2642, %v2949
    %v2951 = vlaneseq
    %v2952 = vshrl.u32 %v2951, 7
    %v2953 = vsub.s32 7, %v2952
    %v2954 = vrot.slane %v2642, %v2953
    %v2955 = vlaneseq
    %v2956 = vshrl.u32 %v2955, 7
    %v2957 = vsub.s32 3, %v2956
    %v2958 = vrot.slane %v2643, %v2957
    %v2965 = vlaneseq
    %v2966 = vshrl.u32 %v2965, 7
    %v2967 = vsub.s32 3, %v2966
    %v2968 = vrot.slane %v2938, %v2967
    %v2969 = vlaneseq
    %v2970 = vshrl.u32 %v2969, 7
    %v2971 = vsub.s32 3, %v2970
    %v2972 = vrot.slane %v2942, %v2971
    %v2973 = vlaneseq
    %v2974 = vshrl.u32 %v2973, 7
    %v2975 = vsub.s32 3, %v2974
    %v2976 = vrot.slane %v2946, %v2975
    %v2977 = vlaneseq
    %v2978 = vshrl.u32 %v2977, 7
    %v2979 = vsub.s32 3, %v2978
    %v2980 = vrot.slane %v2950, %v2979
    %v2981 = vlaneseq
    %v2982 = vshrl.u32 %v2981, 7
    %v2983 = vsub.s32 3, %v2982
    %v2984 = vrot.slane %v2954, %v2983
    %v2985 = vlaneseq
    %v2986 = vshrl.u32 %v2985, 7
    %v2987 = vsub.s32 3, %v2986
    %v2988 = vrot.slane %v2958, %v2987
    %v2989 = vmul.f32 %v2933, %v2968
    %v2990 = vmul.f32 %v2933, %v2972
    %v2991 = vmul.f32 %v2933, %v2976
    %v2992 = vmul.f32 %v2933, %v2980
    %v2993 = vmul.f32 %v2933, %v2984
    %v2994 = vmul.f32 %v2933, %v2988
    %3001 = vrot.lane.b32.xlu0 %v2989, 95
    %v3002 = vpop.permute.xlu0 %3001
    %3003 = vrot.lane.b32.xlu0 %v2990, 95
    %v3004 = vpop.permute.xlu0 %3003
    %3005 = vrot.lane.b32.xlu0 %v2991, 95
    %v3006 = vpop.permute.xlu0 %3005
    %3007 = vrot.lane.b32.xlu0 %v2992, 95
    %v3008 = vpop.permute.xlu0 %3007
    %3009 = vrot.lane.b32.xlu0 %v2993, 95
    %v3010 = vpop.permute.xlu0 %3009
    %3011 = vrot.lane.b32.xlu0 %v2994, 95
    %v3012 = vpop.permute.xlu0 %3011
    %v3013 = vsel %vm2730, %v3002, %v3004
    %v3014 = vsel %vm2730, %v3004, %v3006
    %v3015 = vsel %vm2730, %v3008, %v3010
    %v3016 = vsel %vm2730, %v3010, %v3012
    %v3021 = vadd.f32 %v2927, %v3013
    %v3022 = vadd.f32 %v2928, %v3014
    %v3023 = vadd.f32 %v2929, %v3015
    %v3024 = vadd.f32 %v2930, %v3016
    %3025 = vrot.lane.b32.xlu0 %v678, 34
    %v3026 = vpop.permute.xlu0 %3025
    %v3027 = vrot.slane %v3026, 4
    %vm3028 = vcmask 277504
    %v3029 = vsel %vm3028, %v3027, %v3026
    %v3032 = vmul.f32 %v2640, %v3029
    %v3033 = vmul.f32 %v2641, %v3027
    %v3034 = vmul.f32 %v2642, %v3029
    %v3035 = vmul.f32 %v2643, %v3027
    %3036 = vset.pattern.permute.xlu0 8
    %3037 = vperm.xlu0 %3036, %v21
    %v3038 = vpop.permute.xlu0 %3037
    %v3044 = vlaneseq
    %v3045 = vshrl.u32 %v3044, 7
    %v3046 = vsub.s32 0, %v3045
    %v3047 = vrot.slane %v3032, %v3046
    %v3048 = vlaneseq
    %v3049 = vshrl.u32 %v3048, 7
    %v3050 = vsub.s32 4, %v3049
    %v3051 = vrot.slane %v3032, %v3050
    %v3052 = vlaneseq
    %v3053 = vshrl.u32 %v3052, 7
    %v3054 = vsub.s32 0, %v3053
    %v3055 = vrot.slane %v3033, %v3054
    %v3056 = vlaneseq
    %v3057 = vshrl.u32 %v3056, 7
    %v3058 = vsub.s32 0, %v3057
    %v3059 = vrot.slane %v3034, %v3058
    %v3060 = vlaneseq
    %v3061 = vshrl.u32 %v3060, 7
    %v3062 = vsub.s32 4, %v3061
    %v3063 = vrot.slane %v3034, %v3062
    %v3064 = vlaneseq
    %v3065 = vshrl.u32 %v3064, 7
    %v3066 = vsub.s32 0, %v3065
    %v3067 = vrot.slane %v3035, %v3066
    %v3074 = vlaneseq
    %v3075 = vshrl.u32 %v3074, 7
    %v3076 = vsub.s32 0, %v3075
    %v3077 = vrot.slane %v3047, %v3076
    %v3078 = vlaneseq
    %v3079 = vshrl.u32 %v3078, 7
    %v3080 = vsub.s32 0, %v3079
    %v3081 = vrot.slane %v3051, %v3080
    %v3082 = vlaneseq
    %v3083 = vshrl.u32 %v3082, 7
    %v3084 = vsub.s32 0, %v3083
    %v3085 = vrot.slane %v3055, %v3084
    %v3086 = vlaneseq
    %v3087 = vshrl.u32 %v3086, 7
    %v3088 = vsub.s32 0, %v3087
    %v3089 = vrot.slane %v3059, %v3088
    %v3090 = vlaneseq
    %v3091 = vshrl.u32 %v3090, 7
    %v3092 = vsub.s32 0, %v3091
    %v3093 = vrot.slane %v3063, %v3092
    %v3094 = vlaneseq
    %v3095 = vshrl.u32 %v3094, 7
    %v3096 = vsub.s32 0, %v3095
    %v3097 = vrot.slane %v3067, %v3096
    %v3098 = vmul.f32 %v3038, %v3077
    %v3099 = vmul.f32 %v3038, %v3081
    %v3100 = vmul.f32 %v3038, %v3085
    %v3101 = vmul.f32 %v3038, %v3089
    %v3102 = vmul.f32 %v3038, %v3093
    %v3103 = vmul.f32 %v3038, %v3097
    %3110 = vrot.lane.b32.xlu0 %v3098, 94
    %v3111 = vpop.permute.xlu0 %3110
    %3112 = vrot.lane.b32.xlu0 %v3099, 94
    %v3113 = vpop.permute.xlu0 %3112
    %3114 = vrot.lane.b32.xlu0 %v3100, 94
    %v3115 = vpop.permute.xlu0 %3114
    %3116 = vrot.lane.b32.xlu0 %v3101, 94
    %v3117 = vpop.permute.xlu0 %3116
    %3118 = vrot.lane.b32.xlu0 %v3102, 94
    %v3119 = vpop.permute.xlu0 %3118
    %3120 = vrot.lane.b32.xlu0 %v3103, 94
    %v3121 = vpop.permute.xlu0 %3120
    %vm3122 = vcmask 769024
    %v3123 = vsel %vm3122, %v3111, %v3113
    %v3124 = vsel %vm3122, %v3113, %v3115
    %v3125 = vsel %vm3122, %v3117, %v3119
    %v3126 = vsel %vm3122, %v3119, %v3121
    %v3131 = vadd.f32 %v3021, %v3123
    %v3132 = vadd.f32 %v3022, %v3124
    %v3133 = vadd.f32 %v3023, %v3125
    %v3134 = vadd.f32 %v3024, %v3126
    %3135 = vset.pattern.permute.xlu0 17
    %3136 = vperm.xlu0 %3135, %v21
    %v3137 = vpop.permute.xlu0 %3136
    %v3139 = vlaneseq
    %v3140 = vshrl.u32 %v3139, 7
    %v3141 = vsub.s32 1, %v3140
    %v3142 = vrot.slane %v3032, %v3141
    %v3143 = vlaneseq
    %v3144 = vshrl.u32 %v3143, 7
    %v3145 = vsub.s32 5, %v3144
    %v3146 = vrot.slane %v3032, %v3145
    %v3147 = vlaneseq
    %v3148 = vshrl.u32 %v3147, 7
    %v3149 = vsub.s32 1, %v3148
    %v3150 = vrot.slane %v3033, %v3149
    %v3151 = vlaneseq
    %v3152 = vshrl.u32 %v3151, 7
    %v3153 = vsub.s32 1, %v3152
    %v3154 = vrot.slane %v3034, %v3153
    %v3155 = vlaneseq
    %v3156 = vshrl.u32 %v3155, 7
    %v3157 = vsub.s32 5, %v3156
    %v3158 = vrot.slane %v3034, %v3157
    %v3159 = vlaneseq
    %v3160 = vshrl.u32 %v3159, 7
    %v3161 = vsub.s32 1, %v3160
    %v3162 = vrot.slane %v3035, %v3161
    %v3169 = vlaneseq
    %v3170 = vshrl.u32 %v3169, 7
    %v3171 = vsub.s32 1, %v3170
    %v3172 = vrot.slane %v3142, %v3171
    %v3173 = vlaneseq
    %v3174 = vshrl.u32 %v3173, 7
    %v3175 = vsub.s32 1, %v3174
    %v3176 = vrot.slane %v3146, %v3175
    %v3177 = vlaneseq
    %v3178 = vshrl.u32 %v3177, 7
    %v3179 = vsub.s32 1, %v3178
    %v3180 = vrot.slane %v3150, %v3179
    %v3181 = vlaneseq
    %v3182 = vshrl.u32 %v3181, 7
    %v3183 = vsub.s32 1, %v3182
    %v3184 = vrot.slane %v3154, %v3183
    %v3185 = vlaneseq
    %v3186 = vshrl.u32 %v3185, 7
    %v3187 = vsub.s32 1, %v3186
    %v3188 = vrot.slane %v3158, %v3187
    %v3189 = vlaneseq
    %v3190 = vshrl.u32 %v3189, 7
    %v3191 = vsub.s32 1, %v3190
    %v3192 = vrot.slane %v3162, %v3191
    %v3193 = vmul.f32 %v3137, %v3172
    %v3194 = vmul.f32 %v3137, %v3176
    %v3195 = vmul.f32 %v3137, %v3180
    %v3196 = vmul.f32 %v3137, %v3184
    %v3197 = vmul.f32 %v3137, %v3188
    %v3198 = vmul.f32 %v3137, %v3192
    %3205 = vrot.lane.b32.xlu0 %v3193, 94
    %v3206 = vpop.permute.xlu0 %3205
    %3207 = vrot.lane.b32.xlu0 %v3194, 94
    %v3208 = vpop.permute.xlu0 %3207
    %3209 = vrot.lane.b32.xlu0 %v3195, 94
    %v3210 = vpop.permute.xlu0 %3209
    %3211 = vrot.lane.b32.xlu0 %v3196, 94
    %v3212 = vpop.permute.xlu0 %3211
    %3213 = vrot.lane.b32.xlu0 %v3197, 94
    %v3214 = vpop.permute.xlu0 %3213
    %3215 = vrot.lane.b32.xlu0 %v3198, 94
    %v3216 = vpop.permute.xlu0 %3215
    %v3217 = vsel %vm3122, %v3206, %v3208
    %v3218 = vsel %vm3122, %v3208, %v3210
    %v3219 = vsel %vm3122, %v3212, %v3214
    %v3220 = vsel %vm3122, %v3214, %v3216
    %v3225 = vadd.f32 %v3131, %v3217
    %v3226 = vadd.f32 %v3132, %v3218
    %v3227 = vadd.f32 %v3133, %v3219
    %v3228 = vadd.f32 %v3134, %v3220
    %3229 = vset.pattern.permute.xlu0 26
    %3230 = vperm.xlu0 %3229, %v21
    %v3231 = vpop.permute.xlu0 %3230
    %v3233 = vlaneseq
    %v3234 = vshrl.u32 %v3233, 7
    %v3235 = vsub.s32 2, %v3234
    %v3236 = vrot.slane %v3032, %v3235
    %v3237 = vlaneseq
    %v3238 = vshrl.u32 %v3237, 7
    %v3239 = vsub.s32 6, %v3238
    %v3240 = vrot.slane %v3032, %v3239
    %v3241 = vlaneseq
    %v3242 = vshrl.u32 %v3241, 7
    %v3243 = vsub.s32 2, %v3242
    %v3244 = vrot.slane %v3033, %v3243
    %v3245 = vlaneseq
    %v3246 = vshrl.u32 %v3245, 7
    %v3247 = vsub.s32 2, %v3246
    %v3248 = vrot.slane %v3034, %v3247
    %v3249 = vlaneseq
    %v3250 = vshrl.u32 %v3249, 7
    %v3251 = vsub.s32 6, %v3250
    %v3252 = vrot.slane %v3034, %v3251
    %v3253 = vlaneseq
    %v3254 = vshrl.u32 %v3253, 7
    %v3255 = vsub.s32 2, %v3254
    %v3256 = vrot.slane %v3035, %v3255
    %v3263 = vlaneseq
    %v3264 = vshrl.u32 %v3263, 7
    %v3265 = vsub.s32 2, %v3264
    %v3266 = vrot.slane %v3236, %v3265
    %v3267 = vlaneseq
    %v3268 = vshrl.u32 %v3267, 7
    %v3269 = vsub.s32 2, %v3268
    %v3270 = vrot.slane %v3240, %v3269
    %v3271 = vlaneseq
    %v3272 = vshrl.u32 %v3271, 7
    %v3273 = vsub.s32 2, %v3272
    %v3274 = vrot.slane %v3244, %v3273
    %v3275 = vlaneseq
    %v3276 = vshrl.u32 %v3275, 7
    %v3277 = vsub.s32 2, %v3276
    %v3278 = vrot.slane %v3248, %v3277
    %v3279 = vlaneseq
    %v3280 = vshrl.u32 %v3279, 7
    %v3281 = vsub.s32 2, %v3280
    %v3282 = vrot.slane %v3252, %v3281
    %v3283 = vlaneseq
    %v3284 = vshrl.u32 %v3283, 7
    %v3285 = vsub.s32 2, %v3284
    %v3286 = vrot.slane %v3256, %v3285
    %v3287 = vmul.f32 %v3231, %v3266
    %v3288 = vmul.f32 %v3231, %v3270
    %v3289 = vmul.f32 %v3231, %v3274
    %v3290 = vmul.f32 %v3231, %v3278
    %v3291 = vmul.f32 %v3231, %v3282
    %v3292 = vmul.f32 %v3231, %v3286
    %3299 = vrot.lane.b32.xlu0 %v3287, 94
    %v3300 = vpop.permute.xlu0 %3299
    %3301 = vrot.lane.b32.xlu0 %v3288, 94
    %v3302 = vpop.permute.xlu0 %3301
    %3303 = vrot.lane.b32.xlu0 %v3289, 94
    %v3304 = vpop.permute.xlu0 %3303
    %3305 = vrot.lane.b32.xlu0 %v3290, 94
    %v3306 = vpop.permute.xlu0 %3305
    %3307 = vrot.lane.b32.xlu0 %v3291, 94
    %v3308 = vpop.permute.xlu0 %3307
    %3309 = vrot.lane.b32.xlu0 %v3292, 94
    %v3310 = vpop.permute.xlu0 %3309
    %v3311 = vsel %vm3122, %v3300, %v3302
    %v3312 = vsel %vm3122, %v3302, %v3304
    %v3313 = vsel %vm3122, %v3306, %v3308
    %v3314 = vsel %vm3122, %v3308, %v3310
    %v3319 = vadd.f32 %v3225, %v3311
    %v3320 = vadd.f32 %v3226, %v3312
    %v3321 = vadd.f32 %v3227, %v3313
    %v3322 = vadd.f32 %v3228, %v3314
    %3323 = vset.pattern.permute.xlu0 35
    %3324 = vperm.xlu0 %3323, %v21
    %v3325 = vpop.permute.xlu0 %3324
    %v3327 = vlaneseq
    %v3328 = vshrl.u32 %v3327, 7
    %v3329 = vsub.s32 3, %v3328
    %v3330 = vrot.slane %v3032, %v3329
    %v3331 = vlaneseq
    %v3332 = vshrl.u32 %v3331, 7
    %v3333 = vsub.s32 7, %v3332
    %v3334 = vrot.slane %v3032, %v3333
    %v3335 = vlaneseq
    %v3336 = vshrl.u32 %v3335, 7
    %v3337 = vsub.s32 3, %v3336
    %v3338 = vrot.slane %v3033, %v3337
    %v3339 = vlaneseq
    %v3340 = vshrl.u32 %v3339, 7
    %v3341 = vsub.s32 3, %v3340
    %v3342 = vrot.slane %v3034, %v3341
    %v3343 = vlaneseq
    %v3344 = vshrl.u32 %v3343, 7
    %v3345 = vsub.s32 7, %v3344
    %v3346 = vrot.slane %v3034, %v3345
    %v3347 = vlaneseq
    %v3348 = vshrl.u32 %v3347, 7
    %v3349 = vsub.s32 3, %v3348
    %v3350 = vrot.slane %v3035, %v3349
    %v3357 = vlaneseq
    %v3358 = vshrl.u32 %v3357, 7
    %v3359 = vsub.s32 3, %v3358
    %v3360 = vrot.slane %v3330, %v3359
    %v3361 = vlaneseq
    %v3362 = vshrl.u32 %v3361, 7
    %v3363 = vsub.s32 3, %v3362
    %v3364 = vrot.slane %v3334, %v3363
    %v3365 = vlaneseq
    %v3366 = vshrl.u32 %v3365, 7
    %v3367 = vsub.s32 3, %v3366
    %v3368 = vrot.slane %v3338, %v3367
    %v3369 = vlaneseq
    %v3370 = vshrl.u32 %v3369, 7
    %v3371 = vsub.s32 3, %v3370
    %v3372 = vrot.slane %v3342, %v3371
    %v3373 = vlaneseq
    %v3374 = vshrl.u32 %v3373, 7
    %v3375 = vsub.s32 3, %v3374
    %v3376 = vrot.slane %v3346, %v3375
    %v3377 = vlaneseq
    %v3378 = vshrl.u32 %v3377, 7
    %v3379 = vsub.s32 3, %v3378
    %v3380 = vrot.slane %v3350, %v3379
    %v3381 = vmul.f32 %v3325, %v3360
    %v3382 = vmul.f32 %v3325, %v3364
    %v3383 = vmul.f32 %v3325, %v3368
    %v3384 = vmul.f32 %v3325, %v3372
    %v3385 = vmul.f32 %v3325, %v3376
    %v3386 = vmul.f32 %v3325, %v3380
    %3393 = vrot.lane.b32.xlu0 %v3381, 94
    %v3394 = vpop.permute.xlu0 %3393
    %3395 = vrot.lane.b32.xlu0 %v3382, 94
    %v3396 = vpop.permute.xlu0 %3395
    %3397 = vrot.lane.b32.xlu0 %v3383, 94
    %v3398 = vpop.permute.xlu0 %3397
    %3399 = vrot.lane.b32.xlu0 %v3384, 94
    %v3400 = vpop.permute.xlu0 %3399
    %3401 = vrot.lane.b32.xlu0 %v3385, 94
    %v3402 = vpop.permute.xlu0 %3401
    %3403 = vrot.lane.b32.xlu0 %v3386, 94
    %v3404 = vpop.permute.xlu0 %3403
    %v3405 = vsel %vm3122, %v3394, %v3396
    %v3406 = vsel %vm3122, %v3396, %v3398
    %v3407 = vsel %vm3122, %v3400, %v3402
    %v3408 = vsel %vm3122, %v3402, %v3404
    %v3413 = vadd.f32 %v3319, %v3405
    %v3414 = vadd.f32 %v3320, %v3406
    %v3415 = vadd.f32 %v3321, %v3407
    %v3416 = vadd.f32 %v3322, %v3408
    %v3417 = vmul.f32 %v3413, %v65
    %v3418 = vmul.f32 %v3414, %v65
    %v3419 = vmul.f32 %v3415, %v65
    %v3420 = vmul.f32 %v3416, %v65
    %3422 = vset.pattern.permute.xlu0 0
    %3423 = vperm.xlu0 %3422, %v87
    %v3424 = vpop.permute.xlu0 %3423
    %v3426 = vadd.f32 %v3417, %v3424
    %v3427 = vadd.f32 %v3418, %v3424
    %v3428 = vadd.f32 %v3419, %v3424
    %v3429 = vadd.f32 %v3420, %v3424
    %3430 = vst [vmem:[%s4] sm:$0xff] %v3426
    %3431 = vst [vmem:[%s4 + $0x8] sm:$0xff] %v3427
    %3432 = vst [vmem:[%s4 + $0x10] sm:$0xff] %v3428
    %3433 = vst [vmem:[%s4 + $0x18] sm:$0xff] %v3429
    // Predicated region
    $region18: #{spectral_norm_conv_forward.1} parent=1 // pred_check
      _
    $region19: #{spectral_norm_conv_forward.1} parent=1 // pred_check_branch
      %3435 = sbr.rel (0) target = $region21
    $region20: #{spectral_norm_conv_forward.1} parent=1 // pred_region
      _
    $region21: #{spectral_norm_conv_forward.1} parent=1 // pred_fallthru
      _
    // Predicated region
    $region22: #{spectral_norm_conv_forward.1} parent=1 // pred_check
      _
    $region23: #{spectral_norm_conv_forward.1} parent=1 // pred_check_branch
      %3437 = sbr.rel (0) target = $region25
    $region24: #{spectral_norm_conv_forward.1} parent=1 // pred_region
      _
    $region25: #{spectral_norm_conv_forward.1} parent=1 // pred_fallthru
      _
    // Predicated region
    $region26: #{spectral_norm_conv_forward.1} parent=1 // pred_check
      _
    $region27: #{spectral_norm_conv_forward.1} parent=1 // pred_check_branch
      %3439 = sbr.rel (0) target = $region29
    $region28: #{spectral_norm_conv_forward.1} parent=1 // pred_region
      %s3441 = ssub.s32 16, 16
      %3442 = vsyncadd [#allocation3], %s3441
      %s3444 = sshll.u32 [#allocation2], 4
      %s3445 = int_to_ptr.vmem [resolvable:$true] %s3444
      %3447 = dma.vmem_to_hbm [thread:$0]  %s3445, 16, %s6, [#allocation3]
    $region29: #{spectral_norm_conv_forward.1} parent=1 // pred_fallthru
      _
    // Predicated region
    $region30: #{spectral_norm_conv_forward.1} parent=1 // pred_check
      _
    $region31: #{spectral_norm_conv_forward.1} parent=1 // pred_check_branch
      %3449 = sbr.rel (0) target = $region33
    $region32: #{spectral_norm_conv_forward.1} parent=1 // pred_region
      _
    $region33: #{spectral_norm_conv_forward.1} parent=1 // pred_fallthru
      _
    // Predicated region
    $region34: #{spectral_norm_conv_forward.1} parent=1 // pred_check
      _
    $region35: #{spectral_norm_conv_forward.1} parent=1 // pred_check_branch
      %3451 = sbr.rel (0) target = $region37
    $region36: #{spectral_norm_conv_forward.1} parent=1 // pred_region
      _
    $region37: #{spectral_norm_conv_forward.1} parent=1 // pred_fallthru
      _
    // Predicated region
    $region38: #{spectral_norm_conv_forward.1} parent=1 // pred_check
      _
    $region39: #{spectral_norm_conv_forward.1} parent=1 // pred_check_branch
      %3453 = sbr.rel (0) target = $region41
    $region40: #{spectral_norm_conv_forward.1} parent=1 // pred_region
      %3454 = dma.done [#allocation3], 16
    $region41: #{spectral_norm_conv_forward.1} parent=1 // pred_fallthru
      _
    %3455 = vsyncpa [#allocation3], 1

</llo_original>
